<compile_context>
chip_gen: v7x
topology: tpu7x:2x2x1
jax: 0.10.0
libtpu: 0.0.40
codegen_flags: <defaults>
</compile_context>

<pallas_src>
import functools
import math

import jax
import jax.numpy as jnp
from jax.experimental import pallas as pl
from jax.experimental.pallas import tpu as pltpu


def _rep_cols(t3, head, head_dim, h3):
    """Columns of cat([t3]*3, -1)[:, head*dh:(head+1)*dh], taken from t3 itself.

    Pure trace-time logic (head / head_dim / h3 are Python ints), so the usual
    case (head slice inside one replica) is a single static, lane-aligned slice.
    """
    start = head * head_dim
    pieces = []
    remaining = head_dim
    while remaining > 0:
        off = start % h3
        take = min(h3 - off, remaining)
        pieces.append(t3[:, off:off + take])
        start += take
        remaining -= take
    if len(pieces) == 1:
        return pieces[0]
    return jnp.concatenate(pieces, axis=-1)


# ----------------------------------------------------------------------------
# Fused kernel: per-batch wide QKV projection (into VMEM scratch) + per-q-tile
# multi-head scaled-dot-product attention with a lane-dense output store.
# ----------------------------------------------------------------------------
def fused_self_attention_kernel(x_ref, w_ref, b_ref, mask_ref, o_ref,
                                q_scr, k_scr, v_scr, *,
                                num_heads, head_dim, h3, tq, sm_scale):
    qi = pl.program_id(1)
    hidden = num_heads * head_dim

    # ---- fused QKV projection, executed once per batch element -------------
    @pl.when(qi == 0)
    def _():
        x = x_ref[0]                                             # (S, H)
        qkv = jnp.dot(x, w_ref[...],
                      preferred_element_type=jnp.float32) + b_ref[...]
        q_scr[...] = qkv[:, :hidden].astype(q_scr.dtype)         # (S, H)
        k_scr[...] = qkv[:, hidden:hidden + h3].astype(k_scr.dtype)   # (S, H/3)
        v_scr[...] = qkv[:, hidden + h3:].astype(v_scr.dtype)         # (S, H/3)

    # ---- attention for this q-tile, all heads -------------------------------
    row0 = pl.multiple_of(qi * tq, tq)
    q = q_scr[pl.ds(row0, tq), :]                                # (TQ, H)
    k3 = k_scr[...]                                              # (S, H/3)
    v3 = v_scr[...]
    mask = mask_ref[...][0, 0]                                   # (1, S), broadcasts

    ctx = []
    for head in range(num_heads):                                # short, unrolled
        qh = q[:, head * head_dim:(head + 1) * head_dim]         # (TQ, dh)
        kh = _rep_cols(k3, head, head_dim, h3)                   # (S, dh) — aliases K3
        vh = _rep_cols(v3, head, head_dim, h3)                   # (S, dh) — aliases V3

        # scores = Q K^T * scale + mask; contract dh on both operands
        # (no in-kernel transpose — the MXU handles the transposed operand).
        s = jax.lax.dot_general(qh, kh, (((1,), (1,)), ((), ())),
                                preferred_element_type=jnp.float32)   # (TQ, S)
        s = s * sm_scale + mask

        # numerically stable softmax in f32 (attention dropout = identity)
        m = jnp.max(s, axis=-1, keepdims=True)
        p = jnp.exp(s - m)
        p = p * pl.reciprocal(jnp.sum(p, axis=-1, keepdims=True), approx=True)

        ctx.append(jnp.dot(p.astype(vh.dtype), vh,
                           preferred_element_type=jnp.float32))       # (TQ, dh)

    # One lane-dense (TQ, H) store == the torch permute(0,2,1,3) + view.
    o_ref[0] = jnp.concatenate(ctx, axis=-1).astype(o_ref.dtype)


def bert_self_attention(hidden_states, attention_mask, params, *,
                        num_attention_heads, compute_dtype=jnp.bfloat16,
                        tq=256):
    """hidden_states: (B, S, H); attention_mask: additive, (B,1,1,S)-broadcastable."""
    b, s, h = hidden_states.shape
    if h % 3 != 0:
        raise ValueError("hidden_size must be a multiple of 3")
    if h % num_attention_heads != 0:
        raise ValueError("hidden_size must be a multiple of num_attention_heads")
    h3 = h // 3
    dh = h // num_attention_heads

    cd = compute_dtype
    x = hidden_states.astype(cd)
    # Fuse [Wq | Wk | Wv] into one wide (H, H + 2*H/3) operand: a single MXU
    # stream instead of two half-width matmuls.
    w_qkv = jnp.concatenate([params["wq"], params["wk"], params["wv"]],
                            axis=1).astype(cd)
    b_qkv = jnp.concatenate([params["bq"], params["bk"], params["bv"]]
                            ).astype(jnp.float32).reshape(1, h + 2 * h3)

    # TODO(synk): only (B, 1, 1, S)-broadcastable additive masks are supported;
    # a full (B, 1, S, S) mask would need a per-q-tile mask BlockSpec.
    mask = jnp.broadcast_to(attention_mask.astype(jnp.float32), (b, 1, 1, s))

    tq = min(tq, s)
    if s % tq != 0:
        tq = s  # TODO(synk): pad S (and mask the padded keys) for ragged q-tiling.
    n_qt = s // tq
    sm_scale = 1.0 / math.sqrt(dh)

    out_dtype = hidden_states.dtype
    itemsize = jnp.dtype(cd).itemsize
    cost = pl.CostEstimate(
        flops=2 * b * s * h * (h + 2 * h3) + 4 * b * s * s * h,
        transcendentals=b * num_attention_heads * s * s,
        bytes_accessed=int(b * s * h * itemsize                    # activations in
                           + h * (h + 2 * h3) * itemsize           # fused weights
                           + (h + 2 * h3) * 4 + b * s * 4          # bias + mask
                           + b * s * h * jnp.dtype(out_dtype).itemsize))

    kernel = functools.partial(
        fused_self_attention_kernel, num_heads=num_attention_heads,
        head_dim=dh, h3=h3, tq=tq, sm_scale=sm_scale)

    # TODO(synk): for very long sequences (S >~ 2k) switch to a key-tiled
    # online-softmax (flash) formulation so the (TQ, S) f32 score tile and the
    # (S, H) scratch stay bounded (matters earliest on v7x's 64 MiB VMEM).
    return pl.pallas_call(
        kernel,
        out_shape=jax.ShapeDtypeStruct((b, s, h), out_dtype),
        grid=(b, n_qt),
        in_specs=[
            # Full-sequence activations; the block index ignores qi, so the DMA
            # only happens when the batch element changes.
            pl.BlockSpec((1, s, h), lambda bi, qi: (bi, 0, 0)),
            # Resident fused weights / bias (constant block index -> loaded once).
            pl.BlockSpec((h, h + 2 * h3), lambda bi, qi: (0, 0)),
            pl.BlockSpec((1, h + 2 * h3), lambda bi, qi: (0, 0)),
            # Additive mask, per batch element.
            pl.BlockSpec((1, 1, 1, s), lambda bi, qi: (bi, 0, 0, 0)),
        ],
        out_specs=pl.BlockSpec((1, tq, h), lambda bi, qi: (bi, qi, 0)),
        scratch_shapes=[
            pltpu.VMEM((s, h), cd),    # Q, all heads (persists across q-tiles)
            pltpu.VMEM((s, h3), cd),   # K3 (shared by all heads; never replicated)
            pltpu.VMEM((s, h3), cd),   # V3
        ],
        compiler_params=pltpu.CompilerParams(
            dimension_semantics=("parallel", "arbitrary")),
        cost_estimate=cost,
    )(x, w_qkv, b_qkv, mask)


# ----------------------------------------------------------------------------
# Pure-JAX f32 reference mirroring the PyTorch module
# ----------------------------------------------------------------------------
def bert_self_attention_ref(hidden_states, attention_mask, params, *,
                            num_attention_heads):
    x = hidden_states.astype(jnp.float32)
    b, s, h = x.shape
    dh = h // num_attention_heads
    q = x @ params["wq"] + params["bq"]
    k3 = x @ params["wk"] + params["bk"]
    v3 = x @ params["wv"] + params["bv"]
    k = jnp.concatenate([k3, k3, k3], axis=-1)
    v = jnp.concatenate([v3, v3, v3], axis=-1)

    def heads(t):
        return t.reshape(b, s, num_attention_heads, dh).transpose(0, 2, 1, 3)

    qh, kh, vh = heads(q), heads(k), heads(v)
    scores = jnp.einsum("bhqd,bhkd->bhqk", qh, kh) / math.sqrt(dh)
    scores = scores + attention_mask
    probs = jax.nn.softmax(scores, axis=-1)
    ctx = jnp.einsum("bhqk,bhkd->bhqd", probs, vh)
    return ctx.transpose(0, 2, 1, 3).reshape(b, s, h)


if __name__ == "__main__":
    # hidden_size must be divisible by 3 and by num_heads; choosing
    # head_dim = H/num_heads = H/3 = 128 keeps every block (8,128)-aligned.
    B, S, H, NUM_HEADS = 2, 128, 384, 3
    H3 = H // 3

    key = jax.random.PRNGKey(0)
    kx, kwq, kbq, kwk, kbk, kwv, kbv = jax.random.split(key, 7)

    hidden_states = jax.random.normal(kx, (B, S, H), dtype=jnp.float32)
    # standard BERT "extended" additive mask: 0 = attend, -10000 = masked;
    # batch element 1 has its last 32 key positions masked out.
    seq_lens = jnp.array([S, S - 32])
    valid = (jnp.arange(S)[None, :] < seq_lens[:, None]).astype(jnp.float32)
    attention_mask = (1.0 - valid)[:, None, None, :] * -10000.0

    params = {
        "wq": 0.02 * jax.random.normal(kwq, (H, H), dtype=jnp.float32),
        "bq": 0.02 * jax.random.normal(kbq, (H,), dtype=jnp.float32),
        "wk": 0.02 * jax.random.normal(kwk, (H, H3), dtype=jnp.float32),
        "bk": 0.02 * jax.random.normal(kbk, (H3,), dtype=jnp.float32),
        "wv": 0.02 * jax.random.normal(kwv, (H, H3), dtype=jnp.float32),
        "bv": 0.02 * jax.random.normal(kbv, (H3,), dtype=jnp.float32),
    }

    out = jax.block_until_ready(
        bert_self_attention(hidden_states, attention_mask, params,
                            num_attention_heads=NUM_HEADS))
    ref = jax.block_until_ready(
        bert_self_attention_ref(hidden_states, attention_mask, params,
                                num_attention_heads=NUM_HEADS))

    assert out.shape == (B, S, H), out.shape
    err = float(jnp.max(jnp.abs(out - ref)))
    # bf16 MXU matmuls (f32 accumulation + f32 softmax) vs pure-f32 reference.
    assert err < 2e-2, f"max abs err = {err}"
    print("KERNEL_OK")
</pallas_src>

<mosaic_0001>
module attributes {stable_mosaic.version = 11 : i64} {
  func.func @fused_self_attention_kernel(%arg0: i32, %arg1: i32, %arg2: memref<1x128x384xbf16, #tpu.memory_space<vmem>>, %arg3: memref<384x640xbf16, #tpu.memory_space<vmem>>, %arg4: memref<1x640xf32, #tpu.memory_space<vmem>>, %arg5: memref<1x1x1x128xf32, #tpu.memory_space<vmem>>, %arg6: memref<1x128x384xf32, #tpu.memory_space<vmem>>, %arg7: memref<128x384xbf16, #tpu.memory_space<vmem>>, %arg8: memref<128x128xbf16, #tpu.memory_space<vmem>>, %arg9: memref<128x128xbf16, #tpu.memory_space<vmem>>) attributes {dimension_semantics = [#tpu.dimension_semantics<parallel>, #tpu.dimension_semantics<arbitrary>], iteration_bounds = array<i64: 2, 1>, scalar_prefetch = 0 : i64, scratch_operands = 3 : i64, tpu.core_type = #tpu.core_type<tc>, window_params = [{transform_indices = @transform_0, window_bounds = array<i64: 1, 128, 384>}, {pipeline_mode = #tpu.pipeline_mode<synchronous>, transform_indices = @transform_1, window_bounds = array<i64: 384, 640>}, {pipeline_mode = #tpu.pipeline_mode<synchronous>, transform_indices = @transform_2, window_bounds = array<i64: 1, 640>}, {transform_indices = @transform_3, window_bounds = array<i64: 1, 1, 1, 128>}, {transform_indices = @transform_4, window_bounds = array<i64: 1, 128, 384>}]} {
    %c0_i32 = arith.constant 0 : i32
    %0 = arith.cmpi eq, %arg1, %c0_i32 : i32
    %1 = arith.extui %0 : i1 to i32
    %c0_i32_0 = arith.constant 0 : i32
    %2 = arith.cmpi ne, %1, %c0_i32_0 : i32
    scf.if %2 {
      %c0_26 = arith.constant 0 : index
      %c0_27 = arith.constant 0 : index
      %c0_28 = arith.constant 0 : index
      %69 = vector.load %arg2[%c0_26, %c0_27, %c0_28] : memref<1x128x384xbf16, #tpu.memory_space<vmem>>, vector<1x128x384xbf16>
      %70 = vector.shape_cast %69 : vector<1x128x384xbf16> to vector<128x384xbf16>
      %c0_29 = arith.constant 0 : index
      %c0_30 = arith.constant 0 : index
      %71 = vector.load %arg3[%c0_29, %c0_30] : memref<384x640xbf16, #tpu.memory_space<vmem>>, vector<384x640xbf16>
      %cst_31 = arith.constant dense<0.000000e+00> : vector<128x640xf32>
      %72 = tpu.matmul %70, %71, %cst_31 {dimension_numbers = #tpu.dot_dimension_numbers<[1], [0], [0], [1], [0, 0, 1, 1], [], []>} : vector<128x384xbf16>, vector<384x640xbf16>, vector<128x640xf32> -> vector<128x640xf32>
      %c0_32 = arith.constant 0 : index
      %c0_33 = arith.constant 0 : index
      %73 = vector.load %arg4[%c0_32, %c0_33] : memref<1x640xf32, #tpu.memory_space<vmem>>, vector<1x640xf32>
      %74 = vector.broadcast %73 : vector<1x640xf32> to vector<128x640xf32>
      %75 = arith.addf %72, %74 : vector<128x640xf32>
      %76 = vector.extract_strided_slice %75 {offsets = [0, 0], sizes = [128, 384], strides = [1, 1]} : vector<128x640xf32> to vector<128x384xf32>
      %77 = arith.truncf %76 : vector<128x384xf32> to vector<128x384xbf16>
      %c0_34 = arith.constant 0 : index
      %c0_35 = arith.constant 0 : index
      %78 = vector.load %arg7[%c0_34, %c0_35] : memref<128x384xbf16, #tpu.memory_space<vmem>>, vector<128x384xbf16>
      tpu.vector_store %arg7[%c0_34, %c0_35], %77 {strides = array<i32>} : memref<128x384xbf16, #tpu.memory_space<vmem>>, vector<128x384xbf16>,
      %79 = vector.extract_strided_slice %75 {offsets = [0, 384], sizes = [128, 128], strides = [1, 1]} : vector<128x640xf32> to vector<128x128xf32>
      %80 = arith.truncf %79 : vector<128x128xf32> to vector<128x128xbf16>
      %c0_36 = arith.constant 0 : index
      %c0_37 = arith.constant 0 : index
      %81 = vector.load %arg8[%c0_36, %c0_37] : memref<128x128xbf16, #tpu.memory_space<vmem>>, vector<128x128xbf16>
      tpu.vector_store %arg8[%c0_36, %c0_37], %80 {strides = array<i32>} : memref<128x128xbf16, #tpu.memory_space<vmem>>, vector<128x128xbf16>,
      %82 = vector.extract_strided_slice %75 {offsets = [0, 512], sizes = [128, 128], strides = [1, 1]} : vector<128x640xf32> to vector<128x128xf32>
      %83 = arith.truncf %82 : vector<128x128xf32> to vector<128x128xbf16>
      %c0_38 = arith.constant 0 : index
      %c0_39 = arith.constant 0 : index
      %84 = vector.load %arg9[%c0_38, %c0_39] : memref<128x128xbf16, #tpu.memory_space<vmem>>, vector<128x128xbf16>
      tpu.vector_store %arg9[%c0_38, %c0_39], %83 {strides = array<i32>} : memref<128x128xbf16, #tpu.memory_space<vmem>>, vector<128x128xbf16>,
    } else {
    }
    %c128_i32 = arith.constant 128 : i32
    %3 = arith.muli %arg1, %c128_i32 : i32
    %4 = tpu.assume_multiple %3, 128 : i32
    %5 = arith.index_cast %4 : i32 to index
    %c0 = arith.constant 0 : index
    %6 = vector.load %arg7[%5, %c0] : memref<128x384xbf16, #tpu.memory_space<vmem>>, vector<128x384xbf16>
    %c0_1 = arith.constant 0 : index
    %c0_2 = arith.constant 0 : index
    %7 = vector.load %arg8[%c0_1, %c0_2] : memref<128x128xbf16, #tpu.memory_space<vmem>>, vector<128x128xbf16>
    %c0_3 = arith.constant 0 : index
    %c0_4 = arith.constant 0 : index
    %8 = vector.load %arg9[%c0_3, %c0_4] : memref<128x128xbf16, #tpu.memory_space<vmem>>, vector<128x128xbf16>
    %c0_5 = arith.constant 0 : index
    %c0_6 = arith.constant 0 : index
    %c0_7 = arith.constant 0 : index
    %c0_8 = arith.constant 0 : index
    %9 = vector.load %arg5[%c0_5, %c0_6, %c0_7, %c0_8] : memref<1x1x1x128xf32, #tpu.memory_space<vmem>>, vector<1x1x1x128xf32>
    %10 = vector.shape_cast %9 : vector<1x1x1x128xf32> to vector<1x128xf32>
    %11 = vector.extract_strided_slice %6 {offsets = [0, 0], sizes = [128, 128], strides = [1, 1]} : vector<128x384xbf16> to vector<128x128xbf16>
    %cst = arith.constant dense<0.000000e+00> : vector<128x128xf32>
    %12 = tpu.matmul %11, %7, %cst {dimension_numbers = #tpu.dot_dimension_numbers<[1], [1], [0], [0], [0, 0, 1, 0], [], []>} : vector<128x128xbf16>, vector<128x128xbf16>, vector<128x128xf32> -> vector<128x128xf32>
    %cst_9 = arith.constant 0.0883883461 : f32
    %13 = vector.broadcast %cst_9 : f32 to vector<128x128xf32>
    %14 = arith.mulf %12, %13 : vector<128x128xf32>
    %15 = vector.broadcast %10 : vector<1x128xf32> to vector<128x128xf32>
    %16 = arith.addf %14, %15 : vector<128x128xf32>
    %cst_10 = arith.constant dense<0xFF800000> : vector<128xf32>
    %17 = vector.multi_reduction <maximumf>, %16, %cst_10 [1] : vector<128x128xf32> to vector<128xf32>
    %18 = vector.shape_cast %17 : vector<128xf32> to vector<128x1xf32>
    %19 = vector.broadcast %18 : vector<128x1xf32> to vector<128x128xf32>
    %20 = arith.subf %16, %19 : vector<128x128xf32>
    %21 = math.exp %20 : vector<128x128xf32>
    %cst_11 = arith.constant dense<0.000000e+00> : vector<128xf32>
    %22 = vector.multi_reduction <add>, %21, %cst_11 [1] : vector<128x128xf32> to vector<128xf32>
    %23 = vector.shape_cast %22 : vector<128xf32> to vector<128x1xf32>
    %24 = tpu.reciprocal %23 {approx = true} : vector<128x1xf32> -> vector<128x1xf32>
    %25 = vector.broadcast %24 : vector<128x1xf32> to vector<128x128xf32>
    %26 = arith.mulf %21, %25 : vector<128x128xf32>
    %27 = arith.truncf %26 : vector<128x128xf32> to vector<128x128xbf16>
    %cst_12 = arith.constant dense<0.000000e+00> : vector<128x128xf32>
    %28 = tpu.matmul %27, %8, %cst_12 {dimension_numbers = #tpu.dot_dimension_numbers<[1], [0], [0], [1], [0, 0, 1, 1], [], []>} : vector<128x128xbf16>, vector<128x128xbf16>, vector<128x128xf32> -> vector<128x128xf32>
    %29 = vector.extract_strided_slice %6 {offsets = [0, 128], sizes = [128, 128], strides = [1, 1]} : vector<128x384xbf16> to vector<128x128xbf16>
    %cst_13 = arith.constant dense<0.000000e+00> : vector<128x128xf32>
    %30 = tpu.matmul %29, %7, %cst_13 {dimension_numbers = #tpu.dot_dimension_numbers<[1], [1], [0], [0], [0, 0, 1, 0], [], []>} : vector<128x128xbf16>, vector<128x128xbf16>, vector<128x128xf32> -> vector<128x128xf32>
    %cst_14 = arith.constant 0.0883883461 : f32
    %31 = vector.broadcast %cst_14 : f32 to vector<128x128xf32>
    %32 = arith.mulf %30, %31 : vector<128x128xf32>
    %33 = vector.broadcast %10 : vector<1x128xf32> to vector<128x128xf32>
    %34 = arith.addf %32, %33 : vector<128x128xf32>
    %cst_15 = arith.constant dense<0xFF800000> : vector<128xf32>
    %35 = vector.multi_reduction <maximumf>, %34, %cst_15 [1] : vector<128x128xf32> to vector<128xf32>
    %36 = vector.shape_cast %35 : vector<128xf32> to vector<128x1xf32>
    %37 = vector.broadcast %36 : vector<128x1xf32> to vector<128x128xf32>
    %38 = arith.subf %34, %37 : vector<128x128xf32>
    %39 = math.exp %38 : vector<128x128xf32>
    %cst_16 = arith.constant dense<0.000000e+00> : vector<128xf32>
    %40 = vector.multi_reduction <add>, %39, %cst_16 [1] : vector<128x128xf32> to vector<128xf32>
    %41 = vector.shape_cast %40 : vector<128xf32> to vector<128x1xf32>
    %42 = tpu.reciprocal %41 {approx = true} : vector<128x1xf32> -> vector<128x1xf32>
    %43 = vector.broadcast %42 : vector<128x1xf32> to vector<128x128xf32>
    %44 = arith.mulf %39, %43 : vector<128x128xf32>
    %45 = arith.truncf %44 : vector<128x128xf32> to vector<128x128xbf16>
    %cst_17 = arith.constant dense<0.000000e+00> : vector<128x128xf32>
    %46 = tpu.matmul %45, %8, %cst_17 {dimension_numbers = #tpu.dot_dimension_numbers<[1], [0], [0], [1], [0, 0, 1, 1], [], []>} : vector<128x128xbf16>, vector<128x128xbf16>, vector<128x128xf32> -> vector<128x128xf32>
    %47 = vector.extract_strided_slice %6 {offsets = [0, 256], sizes = [128, 128], strides = [1, 1]} : vector<128x384xbf16> to vector<128x128xbf16>
    %cst_18 = arith.constant dense<0.000000e+00> : vector<128x128xf32>
    %48 = tpu.matmul %47, %7, %cst_18 {dimension_numbers = #tpu.dot_dimension_numbers<[1], [1], [0], [0], [0, 0, 1, 0], [], []>} : vector<128x128xbf16>, vector<128x128xbf16>, vector<128x128xf32> -> vector<128x128xf32>
    %cst_19 = arith.constant 0.0883883461 : f32
    %49 = vector.broadcast %cst_19 : f32 to vector<128x128xf32>
    %50 = arith.mulf %48, %49 : vector<128x128xf32>
    %51 = vector.broadcast %10 : vector<1x128xf32> to vector<128x128xf32>
    %52 = arith.addf %50, %51 : vector<128x128xf32>
    %cst_20 = arith.constant dense<0xFF800000> : vector<128xf32>
    %53 = vector.multi_reduction <maximumf>, %52, %cst_20 [1] : vector<128x128xf32> to vector<128xf32>
    %54 = vector.shape_cast %53 : vector<128xf32> to vector<128x1xf32>
    %55 = vector.broadcast %54 : vector<128x1xf32> to vector<128x128xf32>
    %56 = arith.subf %52, %55 : vector<128x128xf32>
    %57 = math.exp %56 : vector<128x128xf32>
    %cst_21 = arith.constant dense<0.000000e+00> : vector<128xf32>
    %58 = vector.multi_reduction <add>, %57, %cst_21 [1] : vector<128x128xf32> to vector<128xf32>
    %59 = vector.shape_cast %58 : vector<128xf32> to vector<128x1xf32>
    %60 = tpu.reciprocal %59 {approx = true} : vector<128x1xf32> -> vector<128x1xf32>
    %61 = vector.broadcast %60 : vector<128x1xf32> to vector<128x128xf32>
    %62 = arith.mulf %57, %61 : vector<128x128xf32>
    %63 = arith.truncf %62 : vector<128x128xf32> to vector<128x128xbf16>
    %cst_22 = arith.constant dense<0.000000e+00> : vector<128x128xf32>
    %64 = tpu.matmul %63, %8, %cst_22 {dimension_numbers = #tpu.dot_dimension_numbers<[1], [0], [0], [1], [0, 0, 1, 1], [], []>} : vector<128x128xbf16>, vector<128x128xbf16>, vector<128x128xf32> -> vector<128x128xf32>
    %65 = tpu.concatenate %28, %46, %64 in 1 : vector<128x128xf32>, vector<128x128xf32>, vector<128x128xf32> -> vector<128x384xf32>
    %c0_23 = arith.constant 0 : index
    %c0_24 = arith.constant 0 : index
    %c0_25 = arith.constant 0 : index
    %66 = vector.load %arg6[%c0_23, %c0_24, %c0_25] : memref<1x128x384xf32, #tpu.memory_space<vmem>>, vector<1x128x384xf32>
    %67 = vector.shape_cast %66 : vector<1x128x384xf32> to vector<128x384xf32>
    %68 = vector.shape_cast %65 : vector<128x384xf32> to vector<1x128x384xf32>
    tpu.vector_store %arg6[%c0_23, %c0_24, %c0_25], %68 {strides = array<i32>} : memref<1x128x384xf32, #tpu.memory_space<vmem>>, vector<1x128x384xf32>,
    return
  }
  func.func @transform_0(%arg0: i32, %arg1: i32) -> (i32, i32, i32) {
    %c0_i32 = arith.constant 0 : i32
    %c0_i32_0 = arith.constant 0 : i32
    %c0_i32_1 = arith.constant 0 : i32
    return %arg0, %c0_i32, %c0_i32_0 : i32, i32, i32
  }
  func.func @transform_1(%arg0: i32, %arg1: i32) -> (i32, i32) {
    %c0_i32 = arith.constant 0 : i32
    %c0_i32_0 = arith.constant 0 : i32
    %c0_i32_1 = arith.constant 0 : i32
    return %c0_i32, %c0_i32_0 : i32, i32
  }
  func.func @transform_2(%arg0: i32, %arg1: i32) -> (i32, i32) {
    %c0_i32 = arith.constant 0 : i32
    %c0_i32_0 = arith.constant 0 : i32
    %c0_i32_1 = arith.constant 0 : i32
    return %c0_i32, %c0_i32_0 : i32, i32
  }
  func.func @transform_3(%arg0: i32, %arg1: i32) -> (i32, i32, i32, i32) {
    %c0_i32 = arith.constant 0 : i32
    %c0_i32_0 = arith.constant 0 : i32
    %c0_i32_1 = arith.constant 0 : i32
    %c0_i32_2 = arith.constant 0 : i32
    return %arg0, %c0_i32, %c0_i32_0, %c0_i32_1 : i32, i32, i32, i32
  }
  func.func @transform_4(%arg0: i32, %arg1: i32) -> (i32, i32, i32) {
    %c0_i32 = arith.constant 0 : i32
    %c0_i32_0 = arith.constant 0 : i32
    return %arg0, %arg1, %c0_i32 : i32, i32, i32
  }
}

</mosaic_0001>

<llo_original>
// kernel: tpu_custom_call.1
$region0: #{tpu_custom_call.1}
  #allocation0 [shape = 'u32[]', space=smem, size = 0x4, offset = 0x4, fixed_abs, tag = 'smem constant byte address 0x4 - core index']
  #allocation1 [shape = 'u32[144,128]{1,0:T(1,128)}', space=vmem, size = 0x12000, scoped, tag = 'internal scratch']
  #allocation2 [shape = 'bf16[128,384]{1,0:T(16,128)(2,1)}', space=vmem, size = 0x18000, scoped, tag = 'scratch operand']
  #allocation3 [shape = 'bf16[128,128]{1,0:T(16,128)(2,1)}', space=vmem, size = 0x8000, scoped, tag = 'scratch operand']
  #allocation4 [shape = 'bf16[128,128]{1,0:T(16,128)(2,1)}', space=vmem, size = 0x8000, scoped, tag = 'scratch operand']
  %s0 = inlined_call_operand.hbm [shape: bf16[2,128,384], index: 0, kind: input, shape index: {}]
  %s1 = inlined_call_operand.hbm [shape: bf16[384,640], index: 1, kind: input, shape index: {}]
  %s2 = inlined_call_operand.vmem [shape: f32[1,640], index: 2, kind: input, shape index: {}]
  %s3 = inlined_call_operand.vmem [shape: f32[2,1,1,128], index: 3, kind: input, shape index: {}]
  %s4 = inlined_call_operand.hbm [shape: f32[2,128,384], index: 4, kind: output, shape index: {}]
  %s5 = sld [smem:[#allocation0]]
  $region61: #{tpu_custom_call.1} parent=0
    _
  %s7 = ssub.s32 1, %s5
  %s8 = scalar_select 0, %s7, %s5
  $region1: #{tpu_custom_call.1} parent=0
    #allocation5 [shape = 'u8[196608]{0}', space=vmem, size = 0x30000, scoped, tag = 'input window, operand 0']
    #allocation6 [shape = 's32[2]{0}', space=sflag, size = 0x8, scoped, tag = 'scoped memory for tpu_custom_call.1']
    #allocation7 [shape = 's32[2]{0}', space=sflag, size = 0x8, scoped, tag = 'scoped memory for tpu_custom_call.1']
    #allocation8 [shape = 'u8[491520]{0}', space=vmem, size = 0x78000, scoped, tag = 'input window, operand 1, single buffered']
    #allocation9 [shape = 's32[1]{0}', space=sflag, size = 0x4, scoped, tag = 'scoped memory for tpu_custom_call.1']
    #allocation10 [shape = 'u8[393216]{0}', space=vmem, size = 0x60000, scoped, tag = 'output window, operand 0']
    %9 = vsyncpa [#allocation6], 0
    %s10 = scalar_lea.sflag [#allocation6], 1
    %11 = vsyncpa %s10, 0
    %12 = vsyncpa [#allocation9], 0
    %13 = vsyncpa [#allocation7], 0
    %s14 = scalar_lea.sflag [#allocation7], 1
    %15 = vsyncpa %s14, 0
    loop: start=0, step=1, limit=4
    $region2: #{tpu_custom_call.1} parent=1 // loop_pre_header
      _
    $region3: #{tpu_custom_call.1} parent=1 // loop_header
      %s17 = sphi 0, %s21
      %p18 = scmp.ge.s32.totalorder %s17, 4
      %s24 = sphi 0, %s36
      %s25 = sphi 0, %s32
      %s26 = sphi 0, %s24
      %s27 = sphi 0, %s25
      %s28 = sphi 0, %s26
      %s29 = sphi 0, %s27
      %s39 = sphi 0, %s41
      %s42 = sphi 0, %s39
      %s43 = sphi 0, %s42
      %s59 = sphi 0, %s43
      %s63 = sphi 0, %s63
      %s65 = sphi 0, %s63
      %s66 = sphi 0, %s65
      %s80 = sphi 0, %s66
      %s84 = sphi 0, %s84
      %s86 = sphi 0, %s84
      %s87 = sphi 0, %s86
      %s101 = sphi 0, %s87
      %s107 = sphi 0, %s109
      %s110 = sphi 0, %s107
      %s111 = sphi 0, %s110
      %s127 = sphi 0, %s111
      %s135 = sphi 0, %s137
      %s138 = sphi 0, %s135
      %s139 = sphi 0, %s138
      %s155 = sphi 0, %s139
    $region4: #{tpu_custom_call.1} parent=1 // loop_header_branch
      %20 = sbr.rel (%p18) target = $region8
    $region5: #{tpu_custom_call.1} parent=1 // loop_body
      %s22 = ssub.s32 %s17, 1
      %s23 = ssub.s32 %s17, 2
      %s30 = sadd.s32 1, %s25
      %p31 = scmp.ge.s32.totalorder %s30, 1
      %s32 = scalar_select %p31, 0, %s30
      %s33 = sadd.s32 1, %s24
      %s34 = scalar_select %p31, %s33, %s24
      %p35 = scmp.ge.s32.totalorder %s34, 2
      %s36 = scalar_select %p35, 0, %s34
      %s37 = ssub.s32 %s24, %s36
      %p38 = scmp.eq.s32.totalorder %s37, 0
      %s40 = sadd.s32 %s39, 1
      %s41 = scalar_select %p38, %s39, %s40
      %p44 = pneg %p38
      %p45 = scmp.eq.s32.totalorder %s17, 1
      %p46 = por %p44, %p45
      %p47 = scmp.ne.s32.totalorder %s39, %s42
      %p48 = scmp.eq.s32.totalorder %s17, 0
      %p49 = por %p47, %p48
      %p50 = scmp.ne.s32.totalorder %s39, %s42
      %p51 = scmp.eq.s32.totalorder %s22, 1
      %p52 = por %p50, %p51
      %p53 = scmp.ne.s32.totalorder %s42, %s43
      %p54 = scmp.eq.s32.totalorder %s22, 0
      %p55 = por %p53, %p54
      %p56 = scmp.ne.s32.totalorder %s42, %s43
      %p57 = scmp.eq.s32.totalorder %s23, 1
      %p58 = por %p56, %p57
      %p60 = scmp.ne.s32.totalorder %s43, %s59
      %p61 = scmp.eq.s32.totalorder %s23, 0
      %p62 = por %p60, %p61
      %s64 = sadd.s32 %s63, 1
      %p67 = scmp.eq.s32.totalorder %s17, 1
      %p68 = scmp.ne.s32.totalorder %s63, %s65
      %p69 = scmp.eq.s32.totalorder %s17, 0
      %p70 = por %p68, %p69
      %p71 = scmp.ne.s32.totalorder %s63, %s65
      %p72 = scmp.eq.s32.totalorder %s22, 1
      %p73 = por %p71, %p72
      %p74 = scmp.ne.s32.totalorder %s65, %s66
      %p75 = scmp.eq.s32.totalorder %s22, 0
      %p76 = por %p74, %p75
      %p77 = scmp.ne.s32.totalorder %s65, %s66
      %p78 = scmp.eq.s32.totalorder %s23, 1
      %p79 = por %p77, %p78
      %p81 = scmp.ne.s32.totalorder %s66, %s80
      %p82 = scmp.eq.s32.totalorder %s23, 0
      %p83 = por %p81, %p82
      %s85 = sadd.s32 %s84, 1
      %p88 = scmp.eq.s32.totalorder %s17, 1
      %p89 = scmp.ne.s32.totalorder %s84, %s86
      %p90 = scmp.eq.s32.totalorder %s17, 0
      %p91 = por %p89, %p90
      %p92 = scmp.ne.s32.totalorder %s84, %s86
      %p93 = scmp.eq.s32.totalorder %s22, 1
      %p94 = por %p92, %p93
      %p95 = scmp.ne.s32.totalorder %s86, %s87
      %p96 = scmp.eq.s32.totalorder %s22, 0
      %p97 = por %p95, %p96
      %p98 = scmp.ne.s32.totalorder %s86, %s87
      %p99 = scmp.eq.s32.totalorder %s23, 1
      %p100 = por %p98, %p99
      %p102 = scmp.ne.s32.totalorder %s87, %s101
      %p103 = scmp.eq.s32.totalorder %s23, 0
      %p104 = por %p102, %p103
      %s105 = ssub.s32 %s24, %s36
      %p106 = scmp.eq.s32.totalorder %s105, 0
      %s108 = sadd.s32 %s107, 1
      %s109 = scalar_select %p106, %s107, %s108
      %p112 = pneg %p106
      %p113 = scmp.eq.s32.totalorder %s17, 1
      %p114 = por %p112, %p113
      %p115 = scmp.ne.s32.totalorder %s107, %s110
      %p116 = scmp.eq.s32.totalorder %s17, 0
      %p117 = por %p115, %p116
      %p118 = scmp.ne.s32.totalorder %s107, %s110
      %p119 = scmp.eq.s32.totalorder %s22, 1
      %p120 = por %p118, %p119
      %p121 = scmp.ne.s32.totalorder %s110, %s111
      %p122 = scmp.eq.s32.totalorder %s22, 0
      %p123 = por %p121, %p122
      %p124 = scmp.ne.s32.totalorder %s110, %s111
      %p125 = scmp.eq.s32.totalorder %s23, 1
      %p126 = por %p124, %p125
      %p128 = scmp.ne.s32.totalorder %s111, %s127
      %p129 = scmp.eq.s32.totalorder %s23, 0
      %p130 = por %p128, %p129
      %s131 = ssub.s32 %s24, %s36
      %s132 = ssub.s32 %s25, %s32
      %s133 = sor.u32 %s131, %s132
      %p134 = scmp.eq.s32.totalorder %s133, 0
      %s136 = sadd.s32 %s135, 1
      %s137 = scalar_select %p134, %s135, %s136
      %p140 = pneg %p134
      %p141 = scmp.eq.s32.totalorder %s17, 1
      %p142 = por %p140, %p141
      %p143 = scmp.ne.s32.totalorder %s135, %s138
      %p144 = scmp.eq.s32.totalorder %s17, 0
      %p145 = por %p143, %p144
      %p146 = scmp.ne.s32.totalorder %s135, %s138
      %p147 = scmp.eq.s32.totalorder %s22, 1
      %p148 = por %p146, %p147
      %p149 = scmp.ne.s32.totalorder %s138, %s139
      %p150 = scmp.eq.s32.totalorder %s22, 0
      %p151 = por %p149, %p150
      %p152 = scmp.ne.s32.totalorder %s138, %s139
      %p153 = scmp.eq.s32.totalorder %s23, 1
      %p154 = por %p152, %p153
      %p156 = scmp.ne.s32.totalorder %s139, %s155
      %p157 = scmp.eq.s32.totalorder %s23, 0
      %p158 = por %p156, %p157
      %p159 = scmp.le.s32.totalorder 1, %s17
      %p160 = scmp.lt.s32.totalorder %s17, 3
      %p161 = pnand %p159, %p160
      %p162 = pneg %p161
      // Predicated region
      $region9: #{tpu_custom_call.1} parent=5 // pred_check
        _
      $region10: #{tpu_custom_call.1} parent=5 // pred_check_branch
        %164 = sbr.rel (%p161) target = $region12
      $region11: #{tpu_custom_call.1} parent=5 // pred_region
        %s165 = ssub.s32 %s17, 1
        // Predicated region
        $region13: #{tpu_custom_call.1} parent=11 // pred_check
          %p166 = pneg %p76
        $region14: #{tpu_custom_call.1} parent=11 // pred_check_branch
          %168 = sbr.rel (%p166) target = $region16
        $region15: #{tpu_custom_call.1} parent=11 // pred_region
          %s170 = ssub.s32 15360, 15360
          %171 = vsyncadd [#allocation9], %s170
          %s172 = sshll.u32 [#allocation8], 4
          %s173 = int_to_ptr.vmem [resolvable:$true] %s172
          %178 = dma.hbm_to_vmem [thread:$0]  %s1, 15360, %s173, [#allocation9], 320, 320, 20
        $region16: #{tpu_custom_call.1} parent=11 // pred_fallthru
          _
        // Predicated region
        $region17: #{tpu_custom_call.1} parent=11 // pred_check
          %p179 = pneg %p97
        $region18: #{tpu_custom_call.1} parent=11 // pred_check_branch
          %181 = sbr.rel (%p179) target = $region20
        $region19: #{tpu_custom_call.1} parent=11 // pred_region
          _
        $region20: #{tpu_custom_call.1} parent=11 // pred_fallthru
          _
      $region12: #{tpu_custom_call.1} parent=5 // pred_fallthru
        _
      %p182 = scmp.lt.s32.totalorder %s17, 2
      // Predicated region
      $region21: #{tpu_custom_call.1} parent=5 // pred_check
        %p183 = pneg %p182
      $region22: #{tpu_custom_call.1} parent=5 // pred_check_branch
        %185 = sbr.rel (%p183) target = $region24
      $region23: #{tpu_custom_call.1} parent=5 // pred_region
        // Predicated region
        $region25: #{tpu_custom_call.1} parent=23 // pred_check
          %p186 = pneg %p49
        $region26: #{tpu_custom_call.1} parent=23 // pred_check_branch
          %188 = sbr.rel (%p186) target = $region28
        $region27: #{tpu_custom_call.1} parent=23 // pred_region
          %s189 = sand.u32 %s39, 1
          %s190 = scalar_lea.sflag [#allocation6], %s189
          %s191 = sand.u32 %s39, 1
          %s192 = smul.addr %s191, 192
          %s193 = scalar_lea.vmem [#allocation5], %s192
          %s195 = ssub.s32 3072, 3072
          %196 = vsyncadd %s190, %s195
          %s197 = smul.addr %s24, 48
          %s198 = smul.addr %s197, 64
          %s199 = scalar_lea.hbm %s0, %s198
          %s200 = sshll.u32 %s193, 4
          %s201 = int_to_ptr.vmem [resolvable:$true] %s200
          %206 = dma.hbm_to_vmem [thread:$0]  %s199, 3072, %s201, %s190, 192, 192, 12
        $region28: #{tpu_custom_call.1} parent=23 // pred_fallthru
          _
        // Predicated region
        $region29: #{tpu_custom_call.1} parent=23 // pred_check
          %p207 = pneg %p117
        $region30: #{tpu_custom_call.1} parent=23 // pred_check_branch
          %209 = sbr.rel (%p207) target = $region32
        $region31: #{tpu_custom_call.1} parent=23 // pred_region
          %p210 = scmp.lt.s32.totalorder %s24, 1
          %s211 = scalar_select %p210, %s24, 1
          %s212 = scalar_lea.vmem %s3, %s211
        $region32: #{tpu_custom_call.1} parent=23 // pred_fallthru
          _
      $region24: #{tpu_custom_call.1} parent=5 // pred_fallthru
        _
      %p213 = scmp.le.s32.totalorder 1, %s17
      %p214 = scmp.lt.s32.totalorder %s17, 3
      %p215 = pnand %p213, %p214
      %p216 = pneg %p215
      // Predicated region
      $region33: #{tpu_custom_call.1} parent=5 // pred_check
        _
      $region34: #{tpu_custom_call.1} parent=5 // pred_check_branch
        %218 = sbr.rel (%p215) target = $region36
      $region35: #{tpu_custom_call.1} parent=5 // pred_region
        %s219 = ssub.s32 %s17, 1
        %s220 = sand.u32 %s42, 1
        %s221 = scalar_lea.sflag [#allocation6], %s220
        %s222 = sand.u32 %s42, 1
        %s223 = smul.addr %s222, 192
        %s224 = scalar_lea.vmem [#allocation5], %s223
        // Predicated region
        $region37: #{tpu_custom_call.1} parent=35 // pred_check
          %p225 = pneg %p55
        $region38: #{tpu_custom_call.1} parent=35 // pred_check_branch
          %227 = sbr.rel (%p225) target = $region40
        $region39: #{tpu_custom_call.1} parent=35 // pred_region
          %228 = dma.done %s221, 3072
        $region40: #{tpu_custom_call.1} parent=35 // pred_fallthru
          _
        // Predicated region
        $region41: #{tpu_custom_call.1} parent=35 // pred_check
          %p229 = pneg %p76
        $region42: #{tpu_custom_call.1} parent=35 // pred_check_branch
          %231 = sbr.rel (%p229) target = $region44
        $region43: #{tpu_custom_call.1} parent=35 // pred_region
          %232 = dma.done [#allocation9], 15360
        $region44: #{tpu_custom_call.1} parent=35 // pred_fallthru
          _
        %s233 = sand.u32 %s42, 1
        %s234 = scalar_lea.sflag [#allocation6], %s233
        %s235 = sand.u32 %s42, 1
        %s236 = smul.addr %s235, 192
        %s237 = scalar_lea.vmem [#allocation5], %s236
        %p238 = pneg %p55
        %p239 = pneg %p52
        %p240 = pneg %p76
        %p241 = pneg %p73
        %p242 = pneg %p97
        %p243 = pneg %p94
        %p244 = scmp.lt.s32.totalorder %s26, 1
        %s245 = scalar_select %p244, %s26, 1
        %s246 = scalar_lea.vmem %s3, %s245
        %p247 = pneg %p123
        %p248 = pneg %p120
        %p249 = pneg %p151
        %p250 = pneg %p148
        %s251 = sand.u32 %s138, 1
        %s252 = scalar_lea.sflag [#allocation7], %s251
        %s253 = sand.u32 %s138, 1
        %s254 = smul.addr %s253, 384
        %s255 = scalar_lea.vmem [#allocation10], %s254
        %p256 = scmp.lt.s32.totalorder %s26, 1
        %s257 = scalar_select %p256, %s26, 1
        %s258 = scalar_lea.vmem %s3, %s257
        %s259 = smul.u32 16, %s27
        %p261 = scmp.eq.s32.totalorder %s27, 0
        // Predicated region
        $region45: #{tpu_custom_call.1} parent=35 // pred_check
          %p262 = pneg %p261
        $region46: #{tpu_custom_call.1} parent=35 // pred_check_branch
          %264 = sbr.rel (%p262) target = $region48
        $region47: #{tpu_custom_call.1} parent=35 // pred_region
          %v265 = vld [vmem:[%s224] sm:$0xff]
          %v266 = vld [vmem:[%s224 + $0x8] sm:$0xf]
          %v267 = vld [vmem:[%s224 + $0xc] sm:$0xff]
          %v268 = vld [vmem:[%s224 + $0x14] sm:$0xf]
          %v269 = vld [vmem:[%s224 + $0x18] sm:$0xff]
          %v270 = vld [vmem:[%s224 + $0x20] sm:$0xf]
          %v271 = vld [vmem:[%s224 + $0x24] sm:$0xff]
          %v272 = vld [vmem:[%s224 + $0x2c] sm:$0xf]
          %v273 = vld [vmem:[%s224 + $0x30] sm:$0xff]
          %v274 = vld [vmem:[%s224 + $0x38] sm:$0xf]
          %v275 = vld [vmem:[%s224 + $0x3c] sm:$0xff]
          %v276 = vld [vmem:[%s224 + $0x44] sm:$0xf]
          %v277 = vld [vmem:[%s224 + $0x48] sm:$0xff]
          %v278 = vld [vmem:[%s224 + $0x50] sm:$0xf]
          %v279 = vld [vmem:[%s224 + $0x54] sm:$0xff]
          %v280 = vld [vmem:[%s224 + $0x5c] sm:$0xf]
          %v281 = vld [vmem:[%s224 + $0x60] sm:$0xff]
          %v282 = vld [vmem:[%s224 + $0x68] sm:$0xf]
          %v283 = vld [vmem:[%s224 + $0x6c] sm:$0xff]
          %v284 = vld [vmem:[%s224 + $0x74] sm:$0xf]
          %v285 = vld [vmem:[%s224 + $0x78] sm:$0xff]
          %v286 = vld [vmem:[%s224 + $0x80] sm:$0xf]
          %v287 = vld [vmem:[%s224 + $0x84] sm:$0xff]
          %v288 = vld [vmem:[%s224 + $0x8c] sm:$0xf]
          %v289 = vld [vmem:[%s224 + $0x90] sm:$0xff]
          %v290 = vld [vmem:[%s224 + $0x98] sm:$0xf]
          %v291 = vld [vmem:[%s224 + $0x9c] sm:$0xff]
          %v292 = vld [vmem:[%s224 + $0xa4] sm:$0xf]
          %v293 = vld [vmem:[%s224 + $0xa8] sm:$0xff]
          %v294 = vld [vmem:[%s224 + $0xb0] sm:$0xf]
          %v295 = vld [vmem:[%s224 + $0xb4] sm:$0xff]
          %v296 = vld [vmem:[%s224 + $0xbc] sm:$0xf]
          %v297 = vld [vmem:[#allocation8] sm:$0xff]
          %v298 = vld [vmem:[#allocation8 + $0x8] sm:$0xff]
          %v299 = vld [vmem:[#allocation8 + $0x10] sm:$0xf]
          %v300 = vld [vmem:[#allocation8 + $0x14] sm:$0xff]
          %v301 = vld [vmem:[#allocation8 + $0x1c] sm:$0xff]
          %v302 = vld [vmem:[#allocation8 + $0x24] sm:$0xf]
          %v303 = vld [vmem:[#allocation8 + $0x28] sm:$0xff]
          %v304 = vld [vmem:[#allocation8 + $0x30] sm:$0xff]
          %v305 = vld [vmem:[#allocation8 + $0x38] sm:$0xf]
          %v306 = vld [vmem:[#allocation8 + $0x3c] sm:$0xff]
          %v307 = vld [vmem:[#allocation8 + $0x44] sm:$0xff]
          %v308 = vld [vmem:[#allocation8 + $0x4c] sm:$0xf]
          %v309 = vld [vmem:[#allocation8 + $0x50] sm:$0xff]
          %v310 = vld [vmem:[#allocation8 + $0x58] sm:$0xff]
          %v311 = vld [vmem:[#allocation8 + $0x60] sm:$0xf]
          %v312 = vld [vmem:[#allocation8 + $0x64] sm:$0xff]
          %v313 = vld [vmem:[#allocation8 + $0x6c] sm:$0xff]
          %v314 = vld [vmem:[#allocation8 + $0x74] sm:$0xf]
          %v315 = vld [vmem:[#allocation8 + $0x78] sm:$0xff]
          %v316 = vld [vmem:[#allocation8 + $0x80] sm:$0xff]
          %v317 = vld [vmem:[#allocation8 + $0x88] sm:$0xf]
          %v318 = vld [vmem:[#allocation8 + $0x8c] sm:$0xff]
          %v319 = vld [vmem:[#allocation8 + $0x94] sm:$0xff]
          %v320 = vld [vmem:[#allocation8 + $0x9c] sm:$0xf]
          %v321 = vld [vmem:[#allocation8 + $0xa0] sm:$0xff]
          %v322 = vld [vmem:[#allocation8 + $0xa8] sm:$0xff]
          %v323 = vld [vmem:[#allocation8 + $0xb0] sm:$0xf]
          %v324 = vld [vmem:[#allocation8 + $0xb4] sm:$0xff]
          %v325 = vld [vmem:[#allocation8 + $0xbc] sm:$0xff]
          %v326 = vld [vmem:[#allocation8 + $0xc4] sm:$0xf]
          %v327 = vld [vmem:[#allocation8 + $0xc8] sm:$0xff]
          %v328 = vld [vmem:[#allocation8 + $0xd0] sm:$0xff]
          %v329 = vld [vmem:[#allocation8 + $0xd8] sm:$0xf]
          %v330 = vld [vmem:[#allocation8 + $0xdc] sm:$0xff]
          %v331 = vld [vmem:[#allocation8 + $0xe4] sm:$0xff]
          %v332 = vld [vmem:[#allocation8 + $0xec] sm:$0xf]
          %v333 = vld [vmem:[#allocation8 + $0xf0] sm:$0xff]
          %v334 = vld [vmem:[#allocation8 + $0xf8] sm:$0xff]
          %v335 = vld [vmem:[#allocation8 + $0x100] sm:$0xf]
          %v336 = vld [vmem:[#allocation8 + $0x104] sm:$0xff]
          %v337 = vld [vmem:[#allocation8 + $0x10c] sm:$0xff]
          %v338 = vld [vmem:[#allocation8 + $0x114] sm:$0xf]
          %v339 = vld [vmem:[#allocation8 + $0x118] sm:$0xff]
          %v340 = vld [vmem:[#allocation8 + $0x120] sm:$0xff]
          %v341 = vld [vmem:[#allocation8 + $0x128] sm:$0xf]
          %v342 = vld [vmem:[#allocation8 + $0x12c] sm:$0xff]
          %v343 = vld [vmem:[#allocation8 + $0x134] sm:$0xff]
          %v344 = vld [vmem:[#allocation8 + $0x13c] sm:$0xf]
          %v345 = vld [vmem:[#allocation8 + $0x140] sm:$0xff]
          %v346 = vld [vmem:[#allocation8 + $0x148] sm:$0xff]
          %v347 = vld [vmem:[#allocation8 + $0x150] sm:$0xf]
          %v348 = vld [vmem:[#allocation8 + $0x154] sm:$0xff]
          %v349 = vld [vmem:[#allocation8 + $0x15c] sm:$0xff]
          %v350 = vld [vmem:[#allocation8 + $0x164] sm:$0xf]
          %v351 = vld [vmem:[#allocation8 + $0x168] sm:$0xff]
          %v352 = vld [vmem:[#allocation8 + $0x170] sm:$0xff]
          %v353 = vld [vmem:[#allocation8 + $0x178] sm:$0xf]
          %v354 = vld [vmem:[#allocation8 + $0x17c] sm:$0xff]
          %v355 = vld [vmem:[#allocation8 + $0x184] sm:$0xff]
          %v356 = vld [vmem:[#allocation8 + $0x18c] sm:$0xf]
          %v357 = vld [vmem:[#allocation8 + $0x190] sm:$0xff]
          %v358 = vld [vmem:[#allocation8 + $0x198] sm:$0xff]
          %v359 = vld [vmem:[#allocation8 + $0x1a0] sm:$0xf]
          %v360 = vld [vmem:[#allocation8 + $0x1a4] sm:$0xff]
          %v361 = vld [vmem:[#allocation8 + $0x1ac] sm:$0xff]
          %v362 = vld [vmem:[#allocation8 + $0x1b4] sm:$0xf]
          %v363 = vld [vmem:[#allocation8 + $0x1b8] sm:$0xff]
          %v364 = vld [vmem:[#allocation8 + $0x1c0] sm:$0xff]
          %v365 = vld [vmem:[#allocation8 + $0x1c8] sm:$0xf]
          %v366 = vld [vmem:[#allocation8 + $0x1cc] sm:$0xff]
          %v367 = vld [vmem:[#allocation8 + $0x1d4] sm:$0xff]
          %v368 = vld [vmem:[#allocation8 + $0x1dc] sm:$0xf]
          %v369 = vld [vmem:[#allocation8 + $0x1e0] sm:$0xff]
          %v370 = vld [vmem:[#allocation8 + $0x1e8] sm:$0xff]
          %v371 = vld [vmem:[#allocation8 + $0x1f0] sm:$0xf]
          %v372 = vld [vmem:[#allocation8 + $0x1f4] sm:$0xff]
          %v373 = vld [vmem:[#allocation8 + $0x1fc] sm:$0xff]
          %v374 = vld [vmem:[#allocation8 + $0x204] sm:$0xf]
          %v375 = vld [vmem:[#allocation8 + $0x208] sm:$0xff]
          %v376 = vld [vmem:[#allocation8 + $0x210] sm:$0xff]
          %v377 = vld [vmem:[#allocation8 + $0x218] sm:$0xf]
          %v378 = vld [vmem:[#allocation8 + $0x21c] sm:$0xff]
          %v379 = vld [vmem:[#allocation8 + $0x224] sm:$0xff]
          %v380 = vld [vmem:[#allocation8 + $0x22c] sm:$0xf]
          %v381 = vld [vmem:[#allocation8 + $0x230] sm:$0xff]
          %v382 = vld [vmem:[#allocation8 + $0x238] sm:$0xff]
          %v383 = vld [vmem:[#allocation8 + $0x240] sm:$0xf]
          %v384 = vld [vmem:[#allocation8 + $0x244] sm:$0xff]
          %v385 = vld [vmem:[#allocation8 + $0x24c] sm:$0xff]
          %v386 = vld [vmem:[#allocation8 + $0x254] sm:$0xf]
          %v387 = vld [vmem:[#allocation8 + $0x258] sm:$0xff]
          %v388 = vld [vmem:[#allocation8 + $0x260] sm:$0xff]
          %v389 = vld [vmem:[#allocation8 + $0x268] sm:$0xf]
          %v390 = vld [vmem:[#allocation8 + $0x26c] sm:$0xff]
          %v391 = vld [vmem:[#allocation8 + $0x274] sm:$0xff]
          %v392 = vld [vmem:[#allocation8 + $0x27c] sm:$0xf]
          %v393 = vld [vmem:[#allocation8 + $0x280] sm:$0xff]
          %v394 = vld [vmem:[#allocation8 + $0x288] sm:$0xff]
          %v395 = vld [vmem:[#allocation8 + $0x290] sm:$0xf]
          %v396 = vld [vmem:[#allocation8 + $0x294] sm:$0xff]
          %v397 = vld [vmem:[#allocation8 + $0x29c] sm:$0xff]
          %v398 = vld [vmem:[#allocation8 + $0x2a4] sm:$0xf]
          %v399 = vld [vmem:[#allocation8 + $0x2a8] sm:$0xff]
          %v400 = vld [vmem:[#allocation8 + $0x2b0] sm:$0xff]
          %v401 = vld [vmem:[#allocation8 + $0x2b8] sm:$0xf]
          %v402 = vld [vmem:[#allocation8 + $0x2bc] sm:$0xff]
          %v403 = vld [vmem:[#allocation8 + $0x2c4] sm:$0xff]
          %v404 = vld [vmem:[#allocation8 + $0x2cc] sm:$0xf]
          %v405 = vld [vmem:[#allocation8 + $0x2d0] sm:$0xff]
          %v406 = vld [vmem:[#allocation8 + $0x2d8] sm:$0xff]
          %v407 = vld [vmem:[#allocation8 + $0x2e0] sm:$0xf]
          %v408 = vld [vmem:[#allocation8 + $0x2e4] sm:$0xff]
          %v409 = vld [vmem:[#allocation8 + $0x2ec] sm:$0xff]
          %v410 = vld [vmem:[#allocation8 + $0x2f4] sm:$0xf]
          %v411 = vld [vmem:[#allocation8 + $0x2f8] sm:$0xff]
          %v412 = vld [vmem:[#allocation8 + $0x300] sm:$0xff]
          %v413 = vld [vmem:[#allocation8 + $0x308] sm:$0xf]
          %v414 = vld [vmem:[#allocation8 + $0x30c] sm:$0xff]
          %v415 = vld [vmem:[#allocation8 + $0x314] sm:$0xff]
          %v416 = vld [vmem:[#allocation8 + $0x31c] sm:$0xf]
          %v417 = vld [vmem:[#allocation8 + $0x320] sm:$0xff]
          %v418 = vld [vmem:[#allocation8 + $0x328] sm:$0xff]
          %v419 = vld [vmem:[#allocation8 + $0x330] sm:$0xf]
          %v420 = vld [vmem:[#allocation8 + $0x334] sm:$0xff]
          %v421 = vld [vmem:[#allocation8 + $0x33c] sm:$0xff]
          %v422 = vld [vmem:[#allocation8 + $0x344] sm:$0xf]
          %v423 = vld [vmem:[#allocation8 + $0x348] sm:$0xff]
          %v424 = vld [vmem:[#allocation8 + $0x350] sm:$0xff]
          %v425 = vld [vmem:[#allocation8 + $0x358] sm:$0xf]
          %v426 = vld [vmem:[#allocation8 + $0x35c] sm:$0xff]
          %v427 = vld [vmem:[#allocation8 + $0x364] sm:$0xff]
          %v428 = vld [vmem:[#allocation8 + $0x36c] sm:$0xf]
          %v429 = vld [vmem:[#allocation8 + $0x370] sm:$0xff]
          %v430 = vld [vmem:[#allocation8 + $0x378] sm:$0xff]
          %v431 = vld [vmem:[#allocation8 + $0x380] sm:$0xf]
          %v432 = vld [vmem:[#allocation8 + $0x384] sm:$0xff]
          %v433 = vld [vmem:[#allocation8 + $0x38c] sm:$0xff]
          %v434 = vld [vmem:[#allocation8 + $0x394] sm:$0xf]
          %v435 = vld [vmem:[#allocation8 + $0x398] sm:$0xff]
          %v436 = vld [vmem:[#allocation8 + $0x3a0] sm:$0xff]
          %v437 = vld [vmem:[#allocation8 + $0x3a8] sm:$0xf]
          %v438 = vld [vmem:[#allocation8 + $0x3ac] sm:$0xff]
          %v439 = vld [vmem:[#allocation8 + $0x3b4] sm:$0xff]
          %v440 = vld [vmem:[#allocation8 + $0x3bc] sm:$0xf]
          %v441 = vld [vmem:[%s2] sm:$0x1f]
          %v443 = vlaneseq
          %v444 = vshrl.u32 %v443, 7
          %v445 = vsub.s32 0, %v444
          %v446 = vrot.slane %v441, %v445
          %v447 = vlaneseq
          %v448 = vshrl.u32 %v447, 7
          %v449 = vsub.s32 1, %v448
          %v450 = vrot.slane %v441, %v449
          %v451 = vlaneseq
          %v452 = vshrl.u32 %v451, 7
          %v453 = vsub.s32 2, %v452
          %v454 = vrot.slane %v441, %v453
          %v455 = vlaneseq
          %v456 = vshrl.u32 %v455, 7
          %v457 = vsub.s32 3, %v456
          %v458 = vrot.slane %v441, %v457
          %v459 = vlaneseq
          %v460 = vshrl.u32 %v459, 7
          %v461 = vsub.s32 4, %v460
          %v462 = vrot.slane %v441, %v461
          %v500 = vunpack.c.l.b16 %v265
          %v501 = vunpack.c.h.b16 %v265
          %v502 = vunpack.c.l.b16 %v266
          %v503 = vunpack.c.l.b16 %v267
          %v504 = vunpack.c.h.b16 %v267
          %v505 = vunpack.c.l.b16 %v268
          %v506 = vunpack.c.l.b16 %v269
          %v507 = vunpack.c.h.b16 %v269
          %v508 = vunpack.c.l.b16 %v270
          %v509 = vunpack.c.l.b16 %v271
          %v510 = vunpack.c.h.b16 %v271
          %v511 = vunpack.c.l.b16 %v272
          %v512 = vunpack.c.l.b16 %v273
          %v513 = vunpack.c.h.b16 %v273
          %v514 = vunpack.c.l.b16 %v274
          %v515 = vunpack.c.l.b16 %v275
          %v516 = vunpack.c.h.b16 %v275
          %v517 = vunpack.c.l.b16 %v276
          %v518 = vunpack.c.l.b16 %v277
          %v519 = vunpack.c.h.b16 %v277
          %v520 = vunpack.c.l.b16 %v278
          %v521 = vunpack.c.l.b16 %v279
          %v522 = vunpack.c.h.b16 %v279
          %v523 = vunpack.c.l.b16 %v280
          %v524 = vunpack.c.l.b16 %v281
          %v525 = vunpack.c.h.b16 %v281
          %v526 = vunpack.c.l.b16 %v282
          %v527 = vunpack.c.l.b16 %v283
          %v528 = vunpack.c.h.b16 %v283
          %v529 = vunpack.c.l.b16 %v284
          %v530 = vunpack.c.l.b16 %v285
          %v531 = vunpack.c.h.b16 %v285
          %v532 = vunpack.c.l.b16 %v286
          %v533 = vunpack.c.l.b16 %v287
          %v534 = vunpack.c.h.b16 %v287
          %v535 = vunpack.c.l.b16 %v288
          %v536 = vunpack.c.l.b16 %v289
          %v537 = vunpack.c.h.b16 %v289
          %v538 = vunpack.c.l.b16 %v290
          %v539 = vunpack.c.l.b16 %v291
          %v540 = vunpack.c.h.b16 %v291
          %v541 = vunpack.c.l.b16 %v292
          %v542 = vunpack.c.l.b16 %v293
          %v543 = vunpack.c.h.b16 %v293
          %v544 = vunpack.c.l.b16 %v294
          %v545 = vunpack.c.l.b16 %v295
          %v546 = vunpack.c.h.b16 %v295
          %v547 = vunpack.c.l.b16 %v296
          %v548 = vpack.c.b16 %v503, %v500
          %v549 = vpack.c.b16 %v504, %v501
          %v550 = vpack.c.b16 %v505, %v502
          %v551 = vpack.c.b16 %v509, %v506
          %v552 = vpack.c.b16 %v510, %v507
          %v553 = vpack.c.b16 %v511, %v508
          %v554 = vpack.c.b16 %v515, %v512
          %v555 = vpack.c.b16 %v516, %v513
          %v556 = vpack.c.b16 %v517, %v514
          %v557 = vpack.c.b16 %v521, %v518
          %v558 = vpack.c.b16 %v522, %v519
          %v559 = vpack.c.b16 %v523, %v520
          %v560 = vpack.c.b16 %v527, %v524
          %v561 = vpack.c.b16 %v528, %v525
          %v562 = vpack.c.b16 %v529, %v526
          %v563 = vpack.c.b16 %v533, %v530
          %v564 = vpack.c.b16 %v534, %v531
          %v565 = vpack.c.b16 %v535, %v532
          %v566 = vpack.c.b16 %v539, %v536
          %v567 = vpack.c.b16 %v540, %v537
          %v568 = vpack.c.b16 %v541, %v538
          %v569 = vpack.c.b16 %v545, %v542
          %v570 = vpack.c.b16 %v546, %v543
          %v571 = vpack.c.b16 %v547, %v544
          %v740 = vunpack.c.l.b16 %v297
          %v741 = vunpack.c.h.b16 %v297
          %v742 = vunpack.c.l.b16 %v298
          %v743 = vunpack.c.h.b16 %v298
          %v744 = vunpack.c.l.b16 %v299
          %v745 = vunpack.c.l.b16 %v300
          %v746 = vunpack.c.h.b16 %v300
          %v747 = vunpack.c.l.b16 %v301
          %v748 = vunpack.c.h.b16 %v301
          %v749 = vunpack.c.l.b16 %v302
          %v750 = vunpack.c.l.b16 %v303
          %v751 = vunpack.c.h.b16 %v303
          %v752 = vunpack.c.l.b16 %v304
          %v753 = vunpack.c.h.b16 %v304
          %v754 = vunpack.c.l.b16 %v305
          %v755 = vunpack.c.l.b16 %v306
          %v756 = vunpack.c.h.b16 %v306
          %v757 = vunpack.c.l.b16 %v307
          %v758 = vunpack.c.h.b16 %v307
          %v759 = vunpack.c.l.b16 %v308
          %v760 = vunpack.c.l.b16 %v309
          %v761 = vunpack.c.h.b16 %v309
          %v762 = vunpack.c.l.b16 %v310
          %v763 = vunpack.c.h.b16 %v310
          %v764 = vunpack.c.l.b16 %v311
          %v765 = vunpack.c.l.b16 %v312
          %v766 = vunpack.c.h.b16 %v312
          %v767 = vunpack.c.l.b16 %v313
          %v768 = vunpack.c.h.b16 %v313
          %v769 = vunpack.c.l.b16 %v314
          %v770 = vunpack.c.l.b16 %v315
          %v771 = vunpack.c.h.b16 %v315
          %v772 = vunpack.c.l.b16 %v316
          %v773 = vunpack.c.h.b16 %v316
          %v774 = vunpack.c.l.b16 %v317
          %v775 = vunpack.c.l.b16 %v318
          %v776 = vunpack.c.h.b16 %v318
          %v777 = vunpack.c.l.b16 %v319
          %v778 = vunpack.c.h.b16 %v319
          %v779 = vunpack.c.l.b16 %v320
          %v780 = vunpack.c.l.b16 %v321
          %v781 = vunpack.c.h.b16 %v321
          %v782 = vunpack.c.l.b16 %v322
          %v783 = vunpack.c.h.b16 %v322
          %v784 = vunpack.c.l.b16 %v323
          %v785 = vunpack.c.l.b16 %v324
          %v786 = vunpack.c.h.b16 %v324
          %v787 = vunpack.c.l.b16 %v325
          %v788 = vunpack.c.h.b16 %v325
          %v789 = vunpack.c.l.b16 %v326
          %v790 = vunpack.c.l.b16 %v327
          %v791 = vunpack.c.h.b16 %v327
          %v792 = vunpack.c.l.b16 %v328
          %v793 = vunpack.c.h.b16 %v328
          %v794 = vunpack.c.l.b16 %v329
          %v795 = vunpack.c.l.b16 %v330
          %v796 = vunpack.c.h.b16 %v330
          %v797 = vunpack.c.l.b16 %v331
          %v798 = vunpack.c.h.b16 %v331
          %v799 = vunpack.c.l.b16 %v332
          %v800 = vunpack.c.l.b16 %v333
          %v801 = vunpack.c.h.b16 %v333
          %v802 = vunpack.c.l.b16 %v334
          %v803 = vunpack.c.h.b16 %v334
          %v804 = vunpack.c.l.b16 %v335
          %v805 = vunpack.c.l.b16 %v336
          %v806 = vunpack.c.h.b16 %v336
          %v807 = vunpack.c.l.b16 %v337
          %v808 = vunpack.c.h.b16 %v337
          %v809 = vunpack.c.l.b16 %v338
          %v810 = vunpack.c.l.b16 %v339
          %v811 = vunpack.c.h.b16 %v339
          %v812 = vunpack.c.l.b16 %v340
          %v813 = vunpack.c.h.b16 %v340
          %v814 = vunpack.c.l.b16 %v341
          %v815 = vunpack.c.l.b16 %v342
          %v816 = vunpack.c.h.b16 %v342
          %v817 = vunpack.c.l.b16 %v343
          %v818 = vunpack.c.h.b16 %v343
          %v819 = vunpack.c.l.b16 %v344
          %v820 = vunpack.c.l.b16 %v345
          %v821 = vunpack.c.h.b16 %v345
          %v822 = vunpack.c.l.b16 %v346
          %v823 = vunpack.c.h.b16 %v346
          %v824 = vunpack.c.l.b16 %v347
          %v825 = vunpack.c.l.b16 %v348
          %v826 = vunpack.c.h.b16 %v348
          %v827 = vunpack.c.l.b16 %v349
          %v828 = vunpack.c.h.b16 %v349
          %v829 = vunpack.c.l.b16 %v350
          %v830 = vunpack.c.l.b16 %v351
          %v831 = vunpack.c.h.b16 %v351
          %v832 = vunpack.c.l.b16 %v352
          %v833 = vunpack.c.h.b16 %v352
          %v834 = vunpack.c.l.b16 %v353
          %v835 = vunpack.c.l.b16 %v354
          %v836 = vunpack.c.h.b16 %v354
          %v837 = vunpack.c.l.b16 %v355
          %v838 = vunpack.c.h.b16 %v355
          %v839 = vunpack.c.l.b16 %v356
          %v840 = vunpack.c.l.b16 %v357
          %v841 = vunpack.c.h.b16 %v357
          %v842 = vunpack.c.l.b16 %v358
          %v843 = vunpack.c.h.b16 %v358
          %v844 = vunpack.c.l.b16 %v359
          %v845 = vunpack.c.l.b16 %v360
          %v846 = vunpack.c.h.b16 %v360
          %v847 = vunpack.c.l.b16 %v361
          %v848 = vunpack.c.h.b16 %v361
          %v849 = vunpack.c.l.b16 %v362
          %v850 = vunpack.c.l.b16 %v363
          %v851 = vunpack.c.h.b16 %v363
          %v852 = vunpack.c.l.b16 %v364
          %v853 = vunpack.c.h.b16 %v364
          %v854 = vunpack.c.l.b16 %v365
          %v855 = vunpack.c.l.b16 %v366
          %v856 = vunpack.c.h.b16 %v366
          %v857 = vunpack.c.l.b16 %v367
          %v858 = vunpack.c.h.b16 %v367
          %v859 = vunpack.c.l.b16 %v368
          %v860 = vunpack.c.l.b16 %v369
          %v861 = vunpack.c.h.b16 %v369
          %v862 = vunpack.c.l.b16 %v370
          %v863 = vunpack.c.h.b16 %v370
          %v864 = vunpack.c.l.b16 %v371
          %v865 = vunpack.c.l.b16 %v372
          %v866 = vunpack.c.h.b16 %v372
          %v867 = vunpack.c.l.b16 %v373
          %v868 = vunpack.c.h.b16 %v373
          %v869 = vunpack.c.l.b16 %v374
          %v870 = vunpack.c.l.b16 %v375
          %v871 = vunpack.c.h.b16 %v375
          %v872 = vunpack.c.l.b16 %v376
          %v873 = vunpack.c.h.b16 %v376
          %v874 = vunpack.c.l.b16 %v377
          %v875 = vunpack.c.l.b16 %v378
          %v876 = vunpack.c.h.b16 %v378
          %v877 = vunpack.c.l.b16 %v379
          %v878 = vunpack.c.h.b16 %v379
          %v879 = vunpack.c.l.b16 %v380
          %v880 = vunpack.c.l.b16 %v381
          %v881 = vunpack.c.h.b16 %v381
          %v882 = vunpack.c.l.b16 %v382
          %v883 = vunpack.c.h.b16 %v382
          %v884 = vunpack.c.l.b16 %v383
          %v885 = vunpack.c.l.b16 %v384
          %v886 = vunpack.c.h.b16 %v384
          %v887 = vunpack.c.l.b16 %v385
          %v888 = vunpack.c.h.b16 %v385
          %v889 = vunpack.c.l.b16 %v386
          %v890 = vunpack.c.l.b16 %v387
          %v891 = vunpack.c.h.b16 %v387
          %v892 = vunpack.c.l.b16 %v388
          %v893 = vunpack.c.h.b16 %v388
          %v894 = vunpack.c.l.b16 %v389
          %v895 = vunpack.c.l.b16 %v390
          %v896 = vunpack.c.h.b16 %v390
          %v897 = vunpack.c.l.b16 %v391
          %v898 = vunpack.c.h.b16 %v391
          %v899 = vunpack.c.l.b16 %v392
          %v900 = vunpack.c.l.b16 %v393
          %v901 = vunpack.c.h.b16 %v393
          %v902 = vunpack.c.l.b16 %v394
          %v903 = vunpack.c.h.b16 %v394
          %v904 = vunpack.c.l.b16 %v395
          %v905 = vunpack.c.l.b16 %v396
          %v906 = vunpack.c.h.b16 %v396
          %v907 = vunpack.c.l.b16 %v397
          %v908 = vunpack.c.h.b16 %v397
          %v909 = vunpack.c.l.b16 %v398
          %v910 = vunpack.c.l.b16 %v399
          %v911 = vunpack.c.h.b16 %v399
          %v912 = vunpack.c.l.b16 %v400
          %v913 = vunpack.c.h.b16 %v400
          %v914 = vunpack.c.l.b16 %v401
          %v915 = vunpack.c.l.b16 %v402
          %v916 = vunpack.c.h.b16 %v402
          %v917 = vunpack.c.l.b16 %v403
          %v918 = vunpack.c.h.b16 %v403
          %v919 = vunpack.c.l.b16 %v404
          %v920 = vunpack.c.l.b16 %v405
          %v921 = vunpack.c.h.b16 %v405
          %v922 = vunpack.c.l.b16 %v406
          %v923 = vunpack.c.h.b16 %v406
          %v924 = vunpack.c.l.b16 %v407
          %v925 = vunpack.c.l.b16 %v408
          %v926 = vunpack.c.h.b16 %v408
          %v927 = vunpack.c.l.b16 %v409
          %v928 = vunpack.c.h.b16 %v409
          %v929 = vunpack.c.l.b16 %v410
          %v930 = vunpack.c.l.b16 %v411
          %v931 = vunpack.c.h.b16 %v411
          %v932 = vunpack.c.l.b16 %v412
          %v933 = vunpack.c.h.b16 %v412
          %v934 = vunpack.c.l.b16 %v413
          %v935 = vunpack.c.l.b16 %v414
          %v936 = vunpack.c.h.b16 %v414
          %v937 = vunpack.c.l.b16 %v415
          %v938 = vunpack.c.h.b16 %v415
          %v939 = vunpack.c.l.b16 %v416
          %v940 = vunpack.c.l.b16 %v417
          %v941 = vunpack.c.h.b16 %v417
          %v942 = vunpack.c.l.b16 %v418
          %v943 = vunpack.c.h.b16 %v418
          %v944 = vunpack.c.l.b16 %v419
          %v945 = vunpack.c.l.b16 %v420
          %v946 = vunpack.c.h.b16 %v420
          %v947 = vunpack.c.l.b16 %v421
          %v948 = vunpack.c.h.b16 %v421
          %v949 = vunpack.c.l.b16 %v422
          %v950 = vunpack.c.l.b16 %v423
          %v951 = vunpack.c.h.b16 %v423
          %v952 = vunpack.c.l.b16 %v424
          %v953 = vunpack.c.h.b16 %v424
          %v954 = vunpack.c.l.b16 %v425
          %v955 = vunpack.c.l.b16 %v426
          %v956 = vunpack.c.h.b16 %v426
          %v957 = vunpack.c.l.b16 %v427
          %v958 = vunpack.c.h.b16 %v427
          %v959 = vunpack.c.l.b16 %v428
          %v960 = vunpack.c.l.b16 %v429
          %v961 = vunpack.c.h.b16 %v429
          %v962 = vunpack.c.l.b16 %v430
          %v963 = vunpack.c.h.b16 %v430
          %v964 = vunpack.c.l.b16 %v431
          %v965 = vunpack.c.l.b16 %v432
          %v966 = vunpack.c.h.b16 %v432
          %v967 = vunpack.c.l.b16 %v433
          %v968 = vunpack.c.h.b16 %v433
          %v969 = vunpack.c.l.b16 %v434
          %v970 = vunpack.c.l.b16 %v435
          %v971 = vunpack.c.h.b16 %v435
          %v972 = vunpack.c.l.b16 %v436
          %v973 = vunpack.c.h.b16 %v436
          %v974 = vunpack.c.l.b16 %v437
          %v975 = vunpack.c.l.b16 %v438
          %v976 = vunpack.c.h.b16 %v438
          %v977 = vunpack.c.l.b16 %v439
          %v978 = vunpack.c.h.b16 %v439
          %v979 = vunpack.c.l.b16 %v440
          %v980 = vpack.c.b16 %v745, %v740
          %v981 = vpack.c.b16 %v746, %v741
          %v982 = vpack.c.b16 %v747, %v742
          %v983 = vpack.c.b16 %v748, %v743
          %v984 = vpack.c.b16 %v749, %v744
          %v985 = vpack.c.b16 %v755, %v750
          %v986 = vpack.c.b16 %v756, %v751
          %v987 = vpack.c.b16 %v757, %v752
          %v988 = vpack.c.b16 %v758, %v753
          %v989 = vpack.c.b16 %v759, %v754
          %v990 = vpack.c.b16 %v765, %v760
          %v991 = vpack.c.b16 %v766, %v761
          %v992 = vpack.c.b16 %v767, %v762
          %v993 = vpack.c.b16 %v768, %v763
          %v994 = vpack.c.b16 %v769, %v764
          %v995 = vpack.c.b16 %v775, %v770
          %v996 = vpack.c.b16 %v776, %v771
          %v997 = vpack.c.b16 %v777, %v772
          %v998 = vpack.c.b16 %v778, %v773
          %v999 = vpack.c.b16 %v779, %v774
          %v1000 = vpack.c.b16 %v785, %v780
          %v1001 = vpack.c.b16 %v786, %v781
          %v1002 = vpack.c.b16 %v787, %v782
          %v1003 = vpack.c.b16 %v788, %v783
          %v1004 = vpack.c.b16 %v789, %v784
          %v1005 = vpack.c.b16 %v795, %v790
          %v1006 = vpack.c.b16 %v796, %v791
          %v1007 = vpack.c.b16 %v797, %v792
          %v1008 = vpack.c.b16 %v798, %v793
          %v1009 = vpack.c.b16 %v799, %v794
          %v1010 = vpack.c.b16 %v805, %v800
          %v1011 = vpack.c.b16 %v806, %v801
          %v1012 = vpack.c.b16 %v807, %v802
          %v1013 = vpack.c.b16 %v808, %v803
          %v1014 = vpack.c.b16 %v809, %v804
          %v1015 = vpack.c.b16 %v815, %v810
          %v1016 = vpack.c.b16 %v816, %v811
          %v1017 = vpack.c.b16 %v817, %v812
          %v1018 = vpack.c.b16 %v818, %v813
          %v1019 = vpack.c.b16 %v819, %v814
          %v1020 = vpack.c.b16 %v825, %v820
          %v1021 = vpack.c.b16 %v826, %v821
          %v1022 = vpack.c.b16 %v827, %v822
          %v1023 = vpack.c.b16 %v828, %v823
          %v1024 = vpack.c.b16 %v829, %v824
          %v1025 = vpack.c.b16 %v835, %v830
          %v1026 = vpack.c.b16 %v836, %v831
          %v1027 = vpack.c.b16 %v837, %v832
          %v1028 = vpack.c.b16 %v838, %v833
          %v1029 = vpack.c.b16 %v839, %v834
          %v1030 = vpack.c.b16 %v845, %v840
          %v1031 = vpack.c.b16 %v846, %v841
          %v1032 = vpack.c.b16 %v847, %v842
          %v1033 = vpack.c.b16 %v848, %v843
          %v1034 = vpack.c.b16 %v849, %v844
          %v1035 = vpack.c.b16 %v855, %v850
          %v1036 = vpack.c.b16 %v856, %v851
          %v1037 = vpack.c.b16 %v857, %v852
          %v1038 = vpack.c.b16 %v858, %v853
          %v1039 = vpack.c.b16 %v859, %v854
          %v1040 = vpack.c.b16 %v865, %v860
          %v1041 = vpack.c.b16 %v866, %v861
          %v1042 = vpack.c.b16 %v867, %v862
          %v1043 = vpack.c.b16 %v868, %v863
          %v1044 = vpack.c.b16 %v869, %v864
          %v1045 = vpack.c.b16 %v875, %v870
          %v1046 = vpack.c.b16 %v876, %v871
          %v1047 = vpack.c.b16 %v877, %v872
          %v1048 = vpack.c.b16 %v878, %v873
          %v1049 = vpack.c.b16 %v879, %v874
          %v1050 = vpack.c.b16 %v885, %v880
          %v1051 = vpack.c.b16 %v886, %v881
          %v1052 = vpack.c.b16 %v887, %v882
          %v1053 = vpack.c.b16 %v888, %v883
          %v1054 = vpack.c.b16 %v889, %v884
          %v1055 = vpack.c.b16 %v895, %v890
          %v1056 = vpack.c.b16 %v896, %v891
          %v1057 = vpack.c.b16 %v897, %v892
          %v1058 = vpack.c.b16 %v898, %v893
          %v1059 = vpack.c.b16 %v899, %v894
          %v1060 = vpack.c.b16 %v905, %v900
          %v1061 = vpack.c.b16 %v906, %v901
          %v1062 = vpack.c.b16 %v907, %v902
          %v1063 = vpack.c.b16 %v908, %v903
          %v1064 = vpack.c.b16 %v909, %v904
          %v1065 = vpack.c.b16 %v915, %v910
          %v1066 = vpack.c.b16 %v916, %v911
          %v1067 = vpack.c.b16 %v917, %v912
          %v1068 = vpack.c.b16 %v918, %v913
          %v1069 = vpack.c.b16 %v919, %v914
          %v1070 = vpack.c.b16 %v925, %v920
          %v1071 = vpack.c.b16 %v926, %v921
          %v1072 = vpack.c.b16 %v927, %v922
          %v1073 = vpack.c.b16 %v928, %v923
          %v1074 = vpack.c.b16 %v929, %v924
          %v1075 = vpack.c.b16 %v935, %v930
          %v1076 = vpack.c.b16 %v936, %v931
          %v1077 = vpack.c.b16 %v937, %v932
          %v1078 = vpack.c.b16 %v938, %v933
          %v1079 = vpack.c.b16 %v939, %v934
          %v1080 = vpack.c.b16 %v945, %v940
          %v1081 = vpack.c.b16 %v946, %v941
          %v1082 = vpack.c.b16 %v947, %v942
          %v1083 = vpack.c.b16 %v948, %v943
          %v1084 = vpack.c.b16 %v949, %v944
          %v1085 = vpack.c.b16 %v955, %v950
          %v1086 = vpack.c.b16 %v956, %v951
          %v1087 = vpack.c.b16 %v957, %v952
          %v1088 = vpack.c.b16 %v958, %v953
          %v1089 = vpack.c.b16 %v959, %v954
          %v1090 = vpack.c.b16 %v965, %v960
          %v1091 = vpack.c.b16 %v966, %v961
          %v1092 = vpack.c.b16 %v967, %v962
          %v1093 = vpack.c.b16 %v968, %v963
          %v1094 = vpack.c.b16 %v969, %v964
          %v1095 = vpack.c.b16 %v975, %v970
          %v1096 = vpack.c.b16 %v976, %v971
          %v1097 = vpack.c.b16 %v977, %v972
          %v1098 = vpack.c.b16 %v978, %v973
          %v1099 = vpack.c.b16 %v979, %v974
          %1220 = vmatprep.subr.bf16.mxu0 %v981
          %1221 = vmatpush1.bf16.msra.mxu0 %v980
          %1222 = vmatprep.subr.bf16.mxu0 %v986
          %1223 = vmatpush1.bf16.msra.mxu0 %v985
          %1224 = vmatprep.subr.bf16.mxu0 %v991
          %1225 = vmatpush1.bf16.msra.mxu0 %v990
          %1226 = vmatprep.subr.bf16.mxu0 %v996
          %1227 = vmatpush1.bf16.msra.mxu0 %v995
          %1228 = vmatprep.subr.bf16.mxu0 %v1001
          %1229 = vmatpush1.bf16.msra.mxu0 %v1000
          %1230 = vmatprep.subr.bf16.mxu0 %v1006
          %1231 = vmatpush1.bf16.msra.mxu0 %v1005
          %1232 = vmatprep.subr.bf16.mxu0 %v1011
          %1233 = vmatpush1.bf16.msra.mxu0 %v1010
          %1234 = vmatprep.subr.bf16.mxu0 %v1016
          %1235 = vmatpush1.bf16.msra.mxu0 %v1015
          %1236 = vmatprep.subr.bf16.mxu0 %v1021
          %1237 = vmatpush1.bf16.msra.mxu0 %v1020
          %1238 = vmatprep.subr.bf16.mxu0 %v1026
          %1239 = vmatpush1.bf16.msra.mxu0 %v1025
          %1240 = vmatprep.subr.bf16.mxu0 %v1031
          %1241 = vmatpush1.bf16.msra.mxu0 %v1030
          %1242 = vmatprep.subr.bf16.mxu0 %v1036
          %1243 = vmatpush1.bf16.msra.mxu0 %v1035
          %1244 = vmatprep.subr.bf16.mxu0 %v1041
          %1245 = vmatpush1.bf16.msra.mxu0 %v1040
          %1246 = vmatprep.subr.bf16.mxu0 %v1046
          %1247 = vmatpush1.bf16.msra.mxu0 %v1045
          %1248 = vmatprep.subr.bf16.mxu0 %v1051
          %1249 = vmatpush1.bf16.msra.mxu0 %v1050
          %1250 = vmatprep.subr.bf16.mxu0 %v1056
          %1251 = vmatpush1.bf16.msra.mxu0 %v1055
          %1252 = vmatprep.mubr.bf16.mxu0 %v549
          %1253 = vmatmul.mubr.bf16.gmra.mrb[0].mxu0 %v548
          %v1254 = vpop.f32.mrb[0].mxu0
          %v1255 = vadd.f32 %v446, %v1254
          %v1256 = vpop.f32.mrb[0].mxu0
          %v1257 = vadd.f32 %v450, %v1256
          %v1258 = vpop.f32.mrb[0].mxu0
          %v1259 = vadd.f32 %v446, %v1258
          %v1260 = vpop.f32.mrb[0].mxu0
          %v1261 = vadd.f32 %v450, %v1260
          %1262 = vmatprep.mubr.bf16.mxu0 %v552
          %1263 = vmatmul.mubr.bf16.gmra.mrb[0].mxu0 %v551
          %v1264 = vpop.f32.mrb[0].mxu0
          %v1265 = vadd.f32 %v446, %v1264
          %v1266 = vpop.f32.mrb[0].mxu0
          %v1267 = vadd.f32 %v450, %v1266
          %v1268 = vpop.f32.mrb[0].mxu0
          %v1269 = vadd.f32 %v446, %v1268
          %v1270 = vpop.f32.mrb[0].mxu0
          %v1271 = vadd.f32 %v450, %v1270
          %1272 = vmatprep.mubr.bf16.mxu0 %v555
          %1273 = vmatmul.mubr.bf16.gmra.mrb[0].mxu0 %v554
          %v1274 = vpop.f32.mrb[0].mxu0
          %v1275 = vadd.f32 %v446, %v1274
          %v1276 = vpop.f32.mrb[0].mxu0
          %v1277 = vadd.f32 %v450, %v1276
          %v1278 = vpop.f32.mrb[0].mxu0
          %v1279 = vadd.f32 %v446, %v1278
          %v1280 = vpop.f32.mrb[0].mxu0
          %v1281 = vadd.f32 %v450, %v1280
          %1282 = vmatprep.mubr.bf16.mxu0 %v558
          %1283 = vmatmul.mubr.bf16.gmra.mrb[0].mxu0 %v557
          %v1284 = vpop.f32.mrb[0].mxu0
          %v1285 = vadd.f32 %v446, %v1284
          %v1286 = vpop.f32.mrb[0].mxu0
          %v1287 = vadd.f32 %v450, %v1286
          %v1288 = vpop.f32.mrb[0].mxu0
          %v1289 = vadd.f32 %v446, %v1288
          %v1290 = vpop.f32.mrb[0].mxu0
          %v1291 = vadd.f32 %v450, %v1290
          %1292 = vmatprep.mubr.bf16.mxu0 %v561
          %1293 = vmatmul.mubr.bf16.gmra.mrb[0].mxu0 %v560
          %v1294 = vpop.f32.mrb[0].mxu0
          %v1295 = vadd.f32 %v446, %v1294
          %v1296 = vpop.f32.mrb[0].mxu0
          %v1297 = vadd.f32 %v450, %v1296
          %v1298 = vpop.f32.mrb[0].mxu0
          %v1299 = vadd.f32 %v446, %v1298
          %v1300 = vpop.f32.mrb[0].mxu0
          %v1301 = vadd.f32 %v450, %v1300
          %1302 = vmatprep.mubr.bf16.mxu0 %v564
          %1303 = vmatmul.mubr.bf16.gmra.mrb[0].mxu0 %v563
          %v1304 = vpop.f32.mrb[0].mxu0
          %v1305 = vadd.f32 %v446, %v1304
          %v1306 = vpop.f32.mrb[0].mxu0
          %v1307 = vadd.f32 %v450, %v1306
          %v1308 = vpop.f32.mrb[0].mxu0
          %v1309 = vadd.f32 %v446, %v1308
          %v1310 = vpop.f32.mrb[0].mxu0
          %v1311 = vadd.f32 %v450, %v1310
          %1312 = vmatprep.mubr.bf16.mxu0 %v567
          %1313 = vmatmul.mubr.bf16.gmra.mrb[0].mxu0 %v566
          %v1314 = vpop.f32.mrb[0].mxu0
          %v1315 = vadd.f32 %v446, %v1314
          %v1316 = vpop.f32.mrb[0].mxu0
          %v1317 = vadd.f32 %v450, %v1316
          %v1318 = vpop.f32.mrb[0].mxu0
          %v1319 = vadd.f32 %v446, %v1318
          %v1320 = vpop.f32.mrb[0].mxu0
          %v1321 = vadd.f32 %v450, %v1320
          %1322 = vmatprep.mubr.bf16.mxu0 %v570
          %1323 = vmatmul.mubr.bf16.gmra.mrb[0].mxu0 %v569
          %v1324 = vpop.f32.mrb[0].mxu0
          %v1325 = vadd.f32 %v446, %v1324
          %v1326 = vpop.f32.mrb[0].mxu0
          %v1327 = vadd.f32 %v450, %v1326
          %v1328 = vpop.f32.mrb[0].mxu0
          %v1329 = vadd.f32 %v446, %v1328
          %v1330 = vpop.f32.mrb[0].mxu0
          %v1331 = vadd.f32 %v450, %v1330
          %1332 = vdwg.mxu0
          %1333 = vmatprep.subr.bf16.mxu0 %v1061
          %1334 = vmatpush1.bf16.msra.mxu0 %v1060
          %1335 = vmatprep.subr.bf16.mxu0 %v1066
          %1336 = vmatpush1.bf16.msra.mxu0 %v1065
          %1337 = vmatprep.subr.bf16.mxu0 %v1071
          %1338 = vmatpush1.bf16.msra.mxu0 %v1070
          %1339 = vmatprep.subr.bf16.mxu0 %v1076
          %1340 = vmatpush1.bf16.msra.mxu0 %v1075
          %1341 = vmatprep.subr.bf16.mxu0 %v1081
          %1342 = vmatpush1.bf16.msra.mxu0 %v1080
          %1343 = vmatprep.subr.bf16.mxu0 %v1086
          %1344 = vmatpush1.bf16.msra.mxu0 %v1085
          %1345 = vmatprep.subr.bf16.mxu0 %v1091
          %1346 = vmatpush1.bf16.msra.mxu0 %v1090
          %1347 = vmatprep.subr.bf16.mxu0 %v1096
          %1348 = vmatpush1.bf16.msra.mxu0 %v1095
          %1349 = vmatprep.subr.bf16.mxu0 0
          %1350 = vmatpush1.bf16.msra.mxu0 0
          %1351 = vmatprep.subr.bf16.mxu0 0
          %1352 = vmatpush1.bf16.msra.mxu0 0
          %1353 = vmatprep.subr.bf16.mxu0 0
          %1354 = vmatpush1.bf16.msra.mxu0 0
          %1355 = vmatprep.subr.bf16.mxu0 0
          %1356 = vmatpush1.bf16.msra.mxu0 0
          %1357 = vmatprep.subr.bf16.mxu0 0
          %1358 = vmatpush1.bf16.msra.mxu0 0
          %1359 = vmatprep.subr.bf16.mxu0 0
          %1360 = vmatpush1.bf16.msra.mxu0 0
          %1361 = vmatprep.subr.bf16.mxu0 0
          %1362 = vmatpush1.bf16.msra.mxu0 0
          %1363 = vmatprep.subr.bf16.mxu0 0
          %1364 = vmatpush1.bf16.msra.mxu0 0
          %1365 = vmatprep.mubr.bf16.mxu0 0
          %1366 = vmatmul.mubr.bf16.gmra.mrb[0].mxu0 %v550
          %v1367 = vpop.f32.mrb[0].mxu0
          %v1368 = vadd.f32 %v1255, %v1367
          %v1369 = vpop.f32.mrb[0].mxu0
          %v1370 = vadd.f32 %v1257, %v1369
          %v1371 = vpop.f32.mrb[0].mxu0
          %v1372 = vadd.f32 %v1259, %v1371
          %v1373 = vpop.f32.mrb[0].mxu0
          %v1374 = vadd.f32 %v1261, %v1373
          %1375 = vmatprep.mubr.bf16.mxu0 0
          %1376 = vmatmul.mubr.bf16.gmra.mrb[0].mxu0 %v553
          %v1377 = vpop.f32.mrb[0].mxu0
          %v1378 = vadd.f32 %v1265, %v1377
          %v1379 = vpop.f32.mrb[0].mxu0
          %v1380 = vadd.f32 %v1267, %v1379
          %v1381 = vpop.f32.mrb[0].mxu0
          %v1382 = vadd.f32 %v1269, %v1381
          %v1383 = vpop.f32.mrb[0].mxu0
          %v1384 = vadd.f32 %v1271, %v1383
          %1385 = vmatprep.mubr.bf16.mxu0 0
          %1386 = vmatmul.mubr.bf16.gmra.mrb[0].mxu0 %v556
          %v1387 = vpop.f32.mrb[0].mxu0
          %v1388 = vadd.f32 %v1275, %v1387
          %v1389 = vpop.f32.mrb[0].mxu0
          %v1390 = vadd.f32 %v1277, %v1389
          %v1391 = vpop.f32.mrb[0].mxu0
          %v1392 = vadd.f32 %v1279, %v1391
          %v1393 = vpop.f32.mrb[0].mxu0
          %v1394 = vadd.f32 %v1281, %v1393
          %1395 = vmatprep.mubr.bf16.mxu0 0
          %1396 = vmatmul.mubr.bf16.gmra.mrb[0].mxu0 %v559
          %v1397 = vpop.f32.mrb[0].mxu0
          %v1398 = vadd.f32 %v1285, %v1397
          %v1399 = vpop.f32.mrb[0].mxu0
          %v1400 = vadd.f32 %v1287, %v1399
          %v1401 = vpop.f32.mrb[0].mxu0
          %v1402 = vadd.f32 %v1289, %v1401
          %v1403 = vpop.f32.mrb[0].mxu0
          %v1404 = vadd.f32 %v1291, %v1403
          %1405 = vmatprep.mubr.bf16.mxu0 0
          %1406 = vmatmul.mubr.bf16.gmra.mrb[0].mxu0 %v562
          %v1407 = vpop.f32.mrb[0].mxu0
          %v1408 = vadd.f32 %v1295, %v1407
          %v1409 = vpop.f32.mrb[0].mxu0
          %v1410 = vadd.f32 %v1297, %v1409
          %v1411 = vpop.f32.mrb[0].mxu0
          %v1412 = vadd.f32 %v1299, %v1411
          %v1413 = vpop.f32.mrb[0].mxu0
          %v1414 = vadd.f32 %v1301, %v1413
          %1415 = vmatprep.mubr.bf16.mxu0 0
          %1416 = vmatmul.mubr.bf16.gmra.mrb[0].mxu0 %v565
          %v1417 = vpop.f32.mrb[0].mxu0
          %v1418 = vadd.f32 %v1305, %v1417
          %v1419 = vpop.f32.mrb[0].mxu0
          %v1420 = vadd.f32 %v1307, %v1419
          %v1421 = vpop.f32.mrb[0].mxu0
          %v1422 = vadd.f32 %v1309, %v1421
          %v1423 = vpop.f32.mrb[0].mxu0
          %v1424 = vadd.f32 %v1311, %v1423
          %1425 = vmatprep.mubr.bf16.mxu0 0
          %1426 = vmatmul.mubr.bf16.gmra.mrb[0].mxu0 %v568
          %v1427 = vpop.f32.mrb[0].mxu0
          %v1428 = vadd.f32 %v1315, %v1427
          %v1429 = vpop.f32.mrb[0].mxu0
          %v1430 = vadd.f32 %v1317, %v1429
          %v1431 = vpop.f32.mrb[0].mxu0
          %v1432 = vadd.f32 %v1319, %v1431
          %v1433 = vpop.f32.mrb[0].mxu0
          %v1434 = vadd.f32 %v1321, %v1433
          %1435 = vmatprep.mubr.bf16.mxu0 0
          %1436 = vmatmul.mubr.bf16.gmra.mrb[0].mxu0 %v571
          %v1437 = vpop.f32.mrb[0].mxu0
          %v1438 = vadd.f32 %v1325, %v1437
          %v1439 = vpop.f32.mrb[0].mxu0
          %v1440 = vadd.f32 %v1327, %v1439
          %v1441 = vpop.f32.mrb[0].mxu0
          %v1442 = vadd.f32 %v1329, %v1441
          %v1443 = vpop.f32.mrb[0].mxu0
          %v1444 = vadd.f32 %v1331, %v1443
          %1445 = vdwg.mxu0
          %1446 = vmatprep.subr.bf16.mxu0 %v983
          %1447 = vmatpush1.bf16.msra.mxu0 %v982
          %1448 = vmatprep.subr.bf16.mxu0 %v988
          %1449 = vmatpush1.bf16.msra.mxu0 %v987
          %1450 = vmatprep.subr.bf16.mxu0 %v993
          %1451 = vmatpush1.bf16.msra.mxu0 %v992
          %1452 = vmatprep.subr.bf16.mxu0 %v998
          %1453 = vmatpush1.bf16.msra.mxu0 %v997
          %1454 = vmatprep.subr.bf16.mxu0 %v1003
          %1455 = vmatpush1.bf16.msra.mxu0 %v1002
          %1456 = vmatprep.subr.bf16.mxu0 %v1008
          %1457 = vmatpush1.bf16.msra.mxu0 %v1007
          %1458 = vmatprep.subr.bf16.mxu0 %v1013
          %1459 = vmatpush1.bf16.msra.mxu0 %v1012
          %1460 = vmatprep.subr.bf16.mxu0 %v1018
          %1461 = vmatpush1.bf16.msra.mxu0 %v1017
          %1462 = vmatprep.subr.bf16.mxu0 %v1023
          %1463 = vmatpush1.bf16.msra.mxu0 %v1022
          %1464 = vmatprep.subr.bf16.mxu0 %v1028
          %1465 = vmatpush1.bf16.msra.mxu0 %v1027
          %1466 = vmatprep.subr.bf16.mxu0 %v1033
          %1467 = vmatpush1.bf16.msra.mxu0 %v1032
          %1468 = vmatprep.subr.bf16.mxu0 %v1038
          %1469 = vmatpush1.bf16.msra.mxu0 %v1037
          %1470 = vmatprep.subr.bf16.mxu0 %v1043
          %1471 = vmatpush1.bf16.msra.mxu0 %v1042
          %1472 = vmatprep.subr.bf16.mxu0 %v1048
          %1473 = vmatpush1.bf16.msra.mxu0 %v1047
          %1474 = vmatprep.subr.bf16.mxu0 %v1053
          %1475 = vmatpush1.bf16.msra.mxu0 %v1052
          %1476 = vmatprep.subr.bf16.mxu0 %v1058
          %1477 = vmatpush1.bf16.msra.mxu0 %v1057
          %1478 = vmatprep.mubr.bf16.mxu0 %v549
          %1479 = vmatmul.mubr.bf16.gmra.mrb[0].mxu0 %v548
          %v1480 = vpop.f32.mrb[0].mxu0
          %v1481 = vadd.f32 %v454, %v1480
          %v1482 = vpop.f32.mrb[0].mxu0
          %v1483 = vadd.f32 %v458, %v1482
          %v1484 = vpop.f32.mrb[0].mxu0
          %v1485 = vadd.f32 %v454, %v1484
          %v1486 = vpop.f32.mrb[0].mxu0
          %v1487 = vadd.f32 %v458, %v1486
          %1488 = vmatprep.mubr.bf16.mxu0 %v552
          %1489 = vmatmul.mubr.bf16.gmra.mrb[0].mxu0 %v551
          %v1490 = vpop.f32.mrb[0].mxu0
          %v1491 = vadd.f32 %v454, %v1490
          %v1492 = vpop.f32.mrb[0].mxu0
          %v1493 = vadd.f32 %v458, %v1492
          %v1494 = vpop.f32.mrb[0].mxu0
          %v1495 = vadd.f32 %v454, %v1494
          %v1496 = vpop.f32.mrb[0].mxu0
          %v1497 = vadd.f32 %v458, %v1496
          %1498 = vmatprep.mubr.bf16.mxu0 %v555
          %1499 = vmatmul.mubr.bf16.gmra.mrb[0].mxu0 %v554
          %v1500 = vpop.f32.mrb[0].mxu0
          %v1501 = vadd.f32 %v454, %v1500
          %v1502 = vpop.f32.mrb[0].mxu0
          %v1503 = vadd.f32 %v458, %v1502
          %v1504 = vpop.f32.mrb[0].mxu0
          %v1505 = vadd.f32 %v454, %v1504
          %v1506 = vpop.f32.mrb[0].mxu0
          %v1507 = vadd.f32 %v458, %v1506
          %1508 = vmatprep.mubr.bf16.mxu0 %v558
          %1509 = vmatmul.mubr.bf16.gmra.mrb[0].mxu0 %v557
          %v1510 = vpop.f32.mrb[0].mxu0
          %v1511 = vadd.f32 %v454, %v1510
          %v1512 = vpop.f32.mrb[0].mxu0
          %v1513 = vadd.f32 %v458, %v1512
          %v1514 = vpop.f32.mrb[0].mxu0
          %v1515 = vadd.f32 %v454, %v1514
          %v1516 = vpop.f32.mrb[0].mxu0
          %v1517 = vadd.f32 %v458, %v1516
          %1518 = vmatprep.mubr.bf16.mxu0 %v561
          %1519 = vmatmul.mubr.bf16.gmra.mrb[0].mxu0 %v560
          %v1520 = vpop.f32.mrb[0].mxu0
          %v1521 = vadd.f32 %v454, %v1520
          %v1522 = vpop.f32.mrb[0].mxu0
          %v1523 = vadd.f32 %v458, %v1522
          %v1524 = vpop.f32.mrb[0].mxu0
          %v1525 = vadd.f32 %v454, %v1524
          %v1526 = vpop.f32.mrb[0].mxu0
          %v1527 = vadd.f32 %v458, %v1526
          %1528 = vmatprep.mubr.bf16.mxu0 %v564
          %1529 = vmatmul.mubr.bf16.gmra.mrb[0].mxu0 %v563
          %v1530 = vpop.f32.mrb[0].mxu0
          %v1531 = vadd.f32 %v454, %v1530
          %v1532 = vpop.f32.mrb[0].mxu0
          %v1533 = vadd.f32 %v458, %v1532
          %v1534 = vpop.f32.mrb[0].mxu0
          %v1535 = vadd.f32 %v454, %v1534
          %v1536 = vpop.f32.mrb[0].mxu0
          %v1537 = vadd.f32 %v458, %v1536
          %1538 = vmatprep.mubr.bf16.mxu0 %v567
          %1539 = vmatmul.mubr.bf16.gmra.mrb[0].mxu0 %v566
          %v1540 = vpop.f32.mrb[0].mxu0
          %v1541 = vadd.f32 %v454, %v1540
          %v1542 = vpop.f32.mrb[0].mxu0
          %v1543 = vadd.f32 %v458, %v1542
          %v1544 = vpop.f32.mrb[0].mxu0
          %v1545 = vadd.f32 %v454, %v1544
          %v1546 = vpop.f32.mrb[0].mxu0
          %v1547 = vadd.f32 %v458, %v1546
          %1548 = vmatprep.mubr.bf16.mxu0 %v570
          %1549 = vmatmul.mubr.bf16.gmra.mrb[0].mxu0 %v569
          %v1550 = vpop.f32.mrb[0].mxu0
          %v1551 = vadd.f32 %v454, %v1550
          %v1552 = vpop.f32.mrb[0].mxu0
          %v1553 = vadd.f32 %v458, %v1552
          %v1554 = vpop.f32.mrb[0].mxu0
          %v1555 = vadd.f32 %v454, %v1554
          %v1556 = vpop.f32.mrb[0].mxu0
          %v1557 = vadd.f32 %v458, %v1556
          %1558 = vdwg.mxu0
          %1559 = vmatprep.subr.bf16.mxu0 %v1063
          %1560 = vmatpush1.bf16.msra.mxu0 %v1062
          %1561 = vmatprep.subr.bf16.mxu0 %v1068
          %1562 = vmatpush1.bf16.msra.mxu0 %v1067
          %1563 = vmatprep.subr.bf16.mxu0 %v1073
          %1564 = vmatpush1.bf16.msra.mxu0 %v1072
          %1565 = vmatprep.subr.bf16.mxu0 %v1078
          %1566 = vmatpush1.bf16.msra.mxu0 %v1077
          %1567 = vmatprep.subr.bf16.mxu0 %v1083
          %1568 = vmatpush1.bf16.msra.mxu0 %v1082
          %1569 = vmatprep.subr.bf16.mxu0 %v1088
          %1570 = vmatpush1.bf16.msra.mxu0 %v1087
          %1571 = vmatprep.subr.bf16.mxu0 %v1093
          %1572 = vmatpush1.bf16.msra.mxu0 %v1092
          %1573 = vmatprep.subr.bf16.mxu0 %v1098
          %1574 = vmatpush1.bf16.msra.mxu0 %v1097
          %1575 = vmatprep.subr.bf16.mxu0 0
          %1576 = vmatpush1.bf16.msra.mxu0 0
          %1577 = vmatprep.subr.bf16.mxu0 0
          %1578 = vmatpush1.bf16.msra.mxu0 0
          %1579 = vmatprep.subr.bf16.mxu0 0
          %1580 = vmatpush1.bf16.msra.mxu0 0
          %1581 = vmatprep.subr.bf16.mxu0 0
          %1582 = vmatpush1.bf16.msra.mxu0 0
          %1583 = vmatprep.subr.bf16.mxu0 0
          %1584 = vmatpush1.bf16.msra.mxu0 0
          %1585 = vmatprep.subr.bf16.mxu0 0
          %1586 = vmatpush1.bf16.msra.mxu0 0
          %1587 = vmatprep.subr.bf16.mxu0 0
          %1588 = vmatpush1.bf16.msra.mxu0 0
          %1589 = vmatprep.subr.bf16.mxu0 0
          %1590 = vmatpush1.bf16.msra.mxu0 0
          %1591 = vmatprep.mubr.bf16.mxu0 0
          %1592 = vmatmul.mubr.bf16.gmra.mrb[0].mxu0 %v550
          %v1593 = vpop.f32.mrb[0].mxu0
          %v1594 = vadd.f32 %v1481, %v1593
          %v1595 = vpop.f32.mrb[0].mxu0
          %v1596 = vadd.f32 %v1483, %v1595
          %v1597 = vpop.f32.mrb[0].mxu0
          %v1598 = vadd.f32 %v1485, %v1597
          %v1599 = vpop.f32.mrb[0].mxu0
          %v1600 = vadd.f32 %v1487, %v1599
          %1601 = vmatprep.mubr.bf16.mxu0 0
          %1602 = vmatmul.mubr.bf16.gmra.mrb[0].mxu0 %v553
          %v1603 = vpop.f32.mrb[0].mxu0
          %v1604 = vadd.f32 %v1491, %v1603
          %v1605 = vpop.f32.mrb[0].mxu0
          %v1606 = vadd.f32 %v1493, %v1605
          %v1607 = vpop.f32.mrb[0].mxu0
          %v1608 = vadd.f32 %v1495, %v1607
          %v1609 = vpop.f32.mrb[0].mxu0
          %v1610 = vadd.f32 %v1497, %v1609
          %1611 = vmatprep.mubr.bf16.mxu0 0
          %1612 = vmatmul.mubr.bf16.gmra.mrb[0].mxu0 %v556
          %v1613 = vpop.f32.mrb[0].mxu0
          %v1614 = vadd.f32 %v1501, %v1613
          %v1615 = vpop.f32.mrb[0].mxu0
          %v1616 = vadd.f32 %v1503, %v1615
          %v1617 = vpop.f32.mrb[0].mxu0
          %v1618 = vadd.f32 %v1505, %v1617
          %v1619 = vpop.f32.mrb[0].mxu0
          %v1620 = vadd.f32 %v1507, %v1619
          %1621 = vmatprep.mubr.bf16.mxu0 0
          %1622 = vmatmul.mubr.bf16.gmra.mrb[0].mxu0 %v559
          %v1623 = vpop.f32.mrb[0].mxu0
          %v1624 = vadd.f32 %v1511, %v1623
          %v1625 = vpop.f32.mrb[0].mxu0
          %v1626 = vadd.f32 %v1513, %v1625
          %v1627 = vpop.f32.mrb[0].mxu0
          %v1628 = vadd.f32 %v1515, %v1627
          %v1629 = vpop.f32.mrb[0].mxu0
          %v1630 = vadd.f32 %v1517, %v1629
          %1631 = vmatprep.mubr.bf16.mxu0 0
          %1632 = vmatmul.mubr.bf16.gmra.mrb[0].mxu0 %v562
          %v1633 = vpop.f32.mrb[0].mxu0
          %v1634 = vadd.f32 %v1521, %v1633
          %v1635 = vpop.f32.mrb[0].mxu0
          %v1636 = vadd.f32 %v1523, %v1635
          %v1637 = vpop.f32.mrb[0].mxu0
          %v1638 = vadd.f32 %v1525, %v1637
          %v1639 = vpop.f32.mrb[0].mxu0
          %v1640 = vadd.f32 %v1527, %v1639
          %1641 = vmatprep.mubr.bf16.mxu0 0
          %1642 = vmatmul.mubr.bf16.gmra.mrb[0].mxu0 %v565
          %v1643 = vpop.f32.mrb[0].mxu0
          %v1644 = vadd.f32 %v1531, %v1643
          %v1645 = vpop.f32.mrb[0].mxu0
          %v1646 = vadd.f32 %v1533, %v1645
          %v1647 = vpop.f32.mrb[0].mxu0
          %v1648 = vadd.f32 %v1535, %v1647
          %v1649 = vpop.f32.mrb[0].mxu0
          %v1650 = vadd.f32 %v1537, %v1649
          %1651 = vmatprep.mubr.bf16.mxu0 0
          %1652 = vmatmul.mubr.bf16.gmra.mrb[0].mxu0 %v568
          %v1653 = vpop.f32.mrb[0].mxu0
          %v1654 = vadd.f32 %v1541, %v1653
          %v1655 = vpop.f32.mrb[0].mxu0
          %v1656 = vadd.f32 %v1543, %v1655
          %v1657 = vpop.f32.mrb[0].mxu0
          %v1658 = vadd.f32 %v1545, %v1657
          %v1659 = vpop.f32.mrb[0].mxu0
          %v1660 = vadd.f32 %v1547, %v1659
          %1661 = vmatprep.mubr.bf16.mxu0 0
          %1662 = vmatmul.mubr.bf16.gmra.mrb[0].mxu0 %v571
          %v1663 = vpop.f32.mrb[0].mxu0
          %v1664 = vadd.f32 %v1551, %v1663
          %v1665 = vpop.f32.mrb[0].mxu0
          %v1666 = vadd.f32 %v1553, %v1665
          %v1667 = vpop.f32.mrb[0].mxu0
          %v1668 = vadd.f32 %v1555, %v1667
          %v1669 = vpop.f32.mrb[0].mxu0
          %v1670 = vadd.f32 %v1557, %v1669
          %1671 = vdwg.mxu0
          %1672 = vmatprep.subr.bf16.mxu0 0
          %1673 = vmatpush1.bf16.msra.mxu0 %v984
          %1674 = vmatprep.subr.bf16.mxu0 0
          %1675 = vmatpush1.bf16.msra.mxu0 %v989
          %1676 = vmatprep.subr.bf16.mxu0 0
          %1677 = vmatpush1.bf16.msra.mxu0 %v994
          %1678 = vmatprep.subr.bf16.mxu0 0
          %1679 = vmatpush1.bf16.msra.mxu0 %v999
          %1680 = vmatprep.subr.bf16.mxu0 0
          %1681 = vmatpush1.bf16.msra.mxu0 %v1004
          %1682 = vmatprep.subr.bf16.mxu0 0
          %1683 = vmatpush1.bf16.msra.mxu0 %v1009
          %1684 = vmatprep.subr.bf16.mxu0 0
          %1685 = vmatpush1.bf16.msra.mxu0 %v1014
          %1686 = vmatprep.subr.bf16.mxu0 0
          %1687 = vmatpush1.bf16.msra.mxu0 %v1019
          %1688 = vmatprep.subr.bf16.mxu0 0
          %1689 = vmatpush1.bf16.msra.mxu0 %v1024
          %1690 = vmatprep.subr.bf16.mxu0 0
          %1691 = vmatpush1.bf16.msra.mxu0 %v1029
          %1692 = vmatprep.subr.bf16.mxu0 0
          %1693 = vmatpush1.bf16.msra.mxu0 %v1034
          %1694 = vmatprep.subr.bf16.mxu0 0
          %1695 = vmatpush1.bf16.msra.mxu0 %v1039
          %1696 = vmatprep.subr.bf16.mxu0 0
          %1697 = vmatpush1.bf16.msra.mxu0 %v1044
          %1698 = vmatprep.subr.bf16.mxu0 0
          %1699 = vmatpush1.bf16.msra.mxu0 %v1049
          %1700 = vmatprep.subr.bf16.mxu0 0
          %1701 = vmatpush1.bf16.msra.mxu0 %v1054
          %1702 = vmatprep.subr.bf16.mxu0 0
          %1703 = vmatpush1.bf16.msra.mxu0 %v1059
          %1704 = vmatprep.mubr.bf16.mxu0 %v549
          %1705 = vmatmul.mubr.bf16.gmra.mrb[0].mxu0 %v548
          %v1706 = vpop.f32.mrb[0].mxu0
          %v1707 = vadd.f32 %v462, %v1706
          %v1708 = vpop.f32.mrb[0].mxu0
          %v1709 = vpop.f32.mrb[0].mxu0
          %v1710 = vadd.f32 %v462, %v1709
          %v1711 = vpop.f32.mrb[0].mxu0
          %1712 = vmatprep.mubr.bf16.mxu0 %v552
          %1713 = vmatmul.mubr.bf16.gmra.mrb[0].mxu0 %v551
          %v1714 = vpop.f32.mrb[0].mxu0
          %v1715 = vadd.f32 %v462, %v1714
          %v1716 = vpop.f32.mrb[0].mxu0
          %v1717 = vpop.f32.mrb[0].mxu0
          %v1718 = vadd.f32 %v462, %v1717
          %v1719 = vpop.f32.mrb[0].mxu0
          %1720 = vmatprep.mubr.bf16.mxu0 %v555
          %1721 = vmatmul.mubr.bf16.gmra.mrb[0].mxu0 %v554
          %v1722 = vpop.f32.mrb[0].mxu0
          %v1723 = vadd.f32 %v462, %v1722
          %v1724 = vpop.f32.mrb[0].mxu0
          %v1725 = vpop.f32.mrb[0].mxu0
          %v1726 = vadd.f32 %v462, %v1725
          %v1727 = vpop.f32.mrb[0].mxu0
          %1728 = vmatprep.mubr.bf16.mxu0 %v558
          %1729 = vmatmul.mubr.bf16.gmra.mrb[0].mxu0 %v557
          %v1730 = vpop.f32.mrb[0].mxu0
          %v1731 = vadd.f32 %v462, %v1730
          %v1732 = vpop.f32.mrb[0].mxu0
          %v1733 = vpop.f32.mrb[0].mxu0
          %v1734 = vadd.f32 %v462, %v1733
          %v1735 = vpop.f32.mrb[0].mxu0
          %1736 = vmatprep.mubr.bf16.mxu0 %v561
          %1737 = vmatmul.mubr.bf16.gmra.mrb[0].mxu0 %v560
          %v1738 = vpop.f32.mrb[0].mxu0
          %v1739 = vadd.f32 %v462, %v1738
          %v1740 = vpop.f32.mrb[0].mxu0
          %v1741 = vpop.f32.mrb[0].mxu0
          %v1742 = vadd.f32 %v462, %v1741
          %v1743 = vpop.f32.mrb[0].mxu0
          %1744 = vmatprep.mubr.bf16.mxu0 %v564
          %1745 = vmatmul.mubr.bf16.gmra.mrb[0].mxu0 %v563
          %v1746 = vpop.f32.mrb[0].mxu0
          %v1747 = vadd.f32 %v462, %v1746
          %v1748 = vpop.f32.mrb[0].mxu0
          %v1749 = vpop.f32.mrb[0].mxu0
          %v1750 = vadd.f32 %v462, %v1749
          %v1751 = vpop.f32.mrb[0].mxu0
          %1752 = vmatprep.mubr.bf16.mxu0 %v567
          %1753 = vmatmul.mubr.bf16.gmra.mrb[0].mxu0 %v566
          %v1754 = vpop.f32.mrb[0].mxu0
          %v1755 = vadd.f32 %v462, %v1754
          %v1756 = vpop.f32.mrb[0].mxu0
          %v1757 = vpop.f32.mrb[0].mxu0
          %v1758 = vadd.f32 %v462, %v1757
          %v1759 = vpop.f32.mrb[0].mxu0
          %1760 = vmatprep.mubr.bf16.mxu0 %v570
          %1761 = vmatmul.mubr.bf16.gmra.mrb[0].mxu0 %v569
          %v1762 = vpop.f32.mrb[0].mxu0
          %v1763 = vadd.f32 %v462, %v1762
          %v1764 = vpop.f32.mrb[0].mxu0
          %v1765 = vpop.f32.mrb[0].mxu0
          %v1766 = vadd.f32 %v462, %v1765
          %v1767 = vpop.f32.mrb[0].mxu0
          %1768 = vdwg.mxu0
          %1769 = vmatprep.subr.bf16.mxu0 0
          %1770 = vmatpush1.bf16.msra.mxu0 %v1064
          %1771 = vmatprep.subr.bf16.mxu0 0
          %1772 = vmatpush1.bf16.msra.mxu0 %v1069
          %1773 = vmatprep.subr.bf16.mxu0 0
          %1774 = vmatpush1.bf16.msra.mxu0 %v1074
          %1775 = vmatprep.subr.bf16.mxu0 0
          %1776 = vmatpush1.bf16.msra.mxu0 %v1079
          %1777 = vmatprep.subr.bf16.mxu0 0
          %1778 = vmatpush1.bf16.msra.mxu0 %v1084
          %1779 = vmatprep.subr.bf16.mxu0 0
          %1780 = vmatpush1.bf16.msra.mxu0 %v1089
          %1781 = vmatprep.subr.bf16.mxu0 0
          %1782 = vmatpush1.bf16.msra.mxu0 %v1094
          %1783 = vmatprep.subr.bf16.mxu0 0
          %1784 = vmatpush1.bf16.msra.mxu0 %v1099
          %1785 = vmatprep.subr.bf16.mxu0 0
          %1786 = vmatpush1.bf16.msra.mxu0 0
          %1787 = vmatprep.subr.bf16.mxu0 0
          %1788 = vmatpush1.bf16.msra.mxu0 0
          %1789 = vmatprep.subr.bf16.mxu0 0
          %1790 = vmatpush1.bf16.msra.mxu0 0
          %1791 = vmatprep.subr.bf16.mxu0 0
          %1792 = vmatpush1.bf16.msra.mxu0 0
          %1793 = vmatprep.subr.bf16.mxu0 0
          %1794 = vmatpush1.bf16.msra.mxu0 0
          %1795 = vmatprep.subr.bf16.mxu0 0
          %1796 = vmatpush1.bf16.msra.mxu0 0
          %1797 = vmatprep.subr.bf16.mxu0 0
          %1798 = vmatpush1.bf16.msra.mxu0 0
          %1799 = vmatprep.subr.bf16.mxu0 0
          %1800 = vmatpush1.bf16.msra.mxu0 0
          %1801 = vmatprep.mubr.bf16.mxu0 0
          %1802 = vmatmul.mubr.bf16.gmra.mrb[0].mxu0 %v550
          %v1803 = vpop.f32.mrb[0].mxu0
          %v1804 = vadd.f32 %v1707, %v1803
          %v1805 = vpop.f32.mrb[0].mxu0
          %v1806 = vpop.f32.mrb[0].mxu0
          %v1807 = vadd.f32 %v1710, %v1806
          %v1808 = vpop.f32.mrb[0].mxu0
          %1809 = vmatprep.mubr.bf16.mxu0 0
          %1810 = vmatmul.mubr.bf16.gmra.mrb[0].mxu0 %v553
          %v1811 = vpop.f32.mrb[0].mxu0
          %v1812 = vadd.f32 %v1715, %v1811
          %v1813 = vpop.f32.mrb[0].mxu0
          %v1814 = vpop.f32.mrb[0].mxu0
          %v1815 = vadd.f32 %v1718, %v1814
          %v1816 = vpop.f32.mrb[0].mxu0
          %1817 = vmatprep.mubr.bf16.mxu0 0
          %1818 = vmatmul.mubr.bf16.gmra.mrb[0].mxu0 %v556
          %v1819 = vpop.f32.mrb[0].mxu0
          %v1820 = vadd.f32 %v1723, %v1819
          %v1821 = vpop.f32.mrb[0].mxu0
          %v1822 = vpop.f32.mrb[0].mxu0
          %v1823 = vadd.f32 %v1726, %v1822
          %v1824 = vpop.f32.mrb[0].mxu0
          %1825 = vmatprep.mubr.bf16.mxu0 0
          %1826 = vmatmul.mubr.bf16.gmra.mrb[0].mxu0 %v559
          %v1827 = vpop.f32.mrb[0].mxu0
          %v1828 = vadd.f32 %v1731, %v1827
          %v1829 = vpop.f32.mrb[0].mxu0
          %v1830 = vpop.f32.mrb[0].mxu0
          %v1831 = vadd.f32 %v1734, %v1830
          %v1832 = vpop.f32.mrb[0].mxu0
          %1833 = vmatprep.mubr.bf16.mxu0 0
          %1834 = vmatmul.mubr.bf16.gmra.mrb[0].mxu0 %v562
          %v1835 = vpop.f32.mrb[0].mxu0
          %v1836 = vadd.f32 %v1739, %v1835
          %v1837 = vpop.f32.mrb[0].mxu0
          %v1838 = vpop.f32.mrb[0].mxu0
          %v1839 = vadd.f32 %v1742, %v1838
          %v1840 = vpop.f32.mrb[0].mxu0
          %1841 = vmatprep.mubr.bf16.mxu0 0
          %1842 = vmatmul.mubr.bf16.gmra.mrb[0].mxu0 %v565
          %v1843 = vpop.f32.mrb[0].mxu0
          %v1844 = vadd.f32 %v1747, %v1843
          %v1845 = vpop.f32.mrb[0].mxu0
          %v1846 = vpop.f32.mrb[0].mxu0
          %v1847 = vadd.f32 %v1750, %v1846
          %v1848 = vpop.f32.mrb[0].mxu0
          %1849 = vmatprep.mubr.bf16.mxu0 0
          %1850 = vmatmul.mubr.bf16.gmra.mrb[0].mxu0 %v568
          %v1851 = vpop.f32.mrb[0].mxu0
          %v1852 = vadd.f32 %v1755, %v1851
          %v1853 = vpop.f32.mrb[0].mxu0
          %v1854 = vpop.f32.mrb[0].mxu0
          %v1855 = vadd.f32 %v1758, %v1854
          %v1856 = vpop.f32.mrb[0].mxu0
          %1857 = vmatprep.mubr.bf16.mxu0 0
          %1858 = vmatmul.mubr.bf16.gmra.mrb[0].mxu0 %v571
          %v1859 = vpop.f32.mrb[0].mxu0
          %v1860 = vadd.f32 %v1763, %v1859
          %v1861 = vpop.f32.mrb[0].mxu0
          %v1862 = vpop.f32.mrb[0].mxu0
          %v1863 = vadd.f32 %v1766, %v1862
          %v1864 = vpop.f32.mrb[0].mxu0
          %1865 = vdwg.mxu0
          %v1866 = vpack.c.bf16 %v1372, %v1368
          %v1867 = vpack.c.bf16 %v1374, %v1370
          %v1868 = vpack.c.bf16 %v1598, %v1594
          %v1869 = vpack.c.bf16 %v1382, %v1378
          %v1870 = vpack.c.bf16 %v1384, %v1380
          %v1871 = vpack.c.bf16 %v1608, %v1604
          %v1872 = vpack.c.bf16 %v1392, %v1388
          %v1873 = vpack.c.bf16 %v1394, %v1390
          %v1874 = vpack.c.bf16 %v1618, %v1614
          %v1875 = vpack.c.bf16 %v1402, %v1398
          %v1876 = vpack.c.bf16 %v1404, %v1400
          %v1877 = vpack.c.bf16 %v1628, %v1624
          %v1878 = vpack.c.bf16 %v1412, %v1408
          %v1879 = vpack.c.bf16 %v1414, %v1410
          %v1880 = vpack.c.bf16 %v1638, %v1634
          %v1881 = vpack.c.bf16 %v1422, %v1418
          %v1882 = vpack.c.bf16 %v1424, %v1420
          %v1883 = vpack.c.bf16 %v1648, %v1644
          %v1884 = vpack.c.bf16 %v1432, %v1428
          %v1885 = vpack.c.bf16 %v1434, %v1430
          %v1886 = vpack.c.bf16 %v1658, %v1654
          %v1887 = vpack.c.bf16 %v1442, %v1438
          %v1888 = vpack.c.bf16 %v1444, %v1440
          %v1889 = vpack.c.bf16 %v1668, %v1664
          %1890 = vst [vmem:[#allocation2] sm:$0xff] %v1866
          %1891 = vst [vmem:[#allocation2 + $0x8] sm:$0xff] %v1867
          %1892 = vst [vmem:[#allocation2 + $0x10] sm:$0xff] %v1868
          %1893 = vst [vmem:[#allocation2 + $0x18] sm:$0xff] %v1869
          %1894 = vst [vmem:[#allocation2 + $0x20] sm:$0xff] %v1870
          %1895 = vst [vmem:[#allocation2 + $0x28] sm:$0xff] %v1871
          %1896 = vst [vmem:[#allocation2 + $0x30] sm:$0xff] %v1872
          %1897 = vst [vmem:[#allocation2 + $0x38] sm:$0xff] %v1873
          %1898 = vst [vmem:[#allocation2 + $0x40] sm:$0xff] %v1874
          %1899 = vst [vmem:[#allocation2 + $0x48] sm:$0xff] %v1875
          %1900 = vst [vmem:[#allocation2 + $0x50] sm:$0xff] %v1876
          %1901 = vst [vmem:[#allocation2 + $0x58] sm:$0xff] %v1877
          %1902 = vst [vmem:[#allocation2 + $0x60] sm:$0xff] %v1878
          %1903 = vst [vmem:[#allocation2 + $0x68] sm:$0xff] %v1879
          %1904 = vst [vmem:[#allocation2 + $0x70] sm:$0xff] %v1880
          %1905 = vst [vmem:[#allocation2 + $0x78] sm:$0xff] %v1881
          %1906 = vst [vmem:[#allocation2 + $0x80] sm:$0xff] %v1882
          %1907 = vst [vmem:[#allocation2 + $0x88] sm:$0xff] %v1883
          %1908 = vst [vmem:[#allocation2 + $0x90] sm:$0xff] %v1884
          %1909 = vst [vmem:[#allocation2 + $0x98] sm:$0xff] %v1885
          %1910 = vst [vmem:[#allocation2 + $0xa0] sm:$0xff] %v1886
          %1911 = vst [vmem:[#allocation2 + $0xa8] sm:$0xff] %v1887
          %1912 = vst [vmem:[#allocation2 + $0xb0] sm:$0xff] %v1888
          %1913 = vst [vmem:[#allocation2 + $0xb8] sm:$0xff] %v1889
          %v1914 = vpack.c.bf16 %v1600, %v1596
          %v1915 = vpack.c.bf16 %v1610, %v1606
          %v1916 = vpack.c.bf16 %v1620, %v1616
          %v1917 = vpack.c.bf16 %v1630, %v1626
          %v1918 = vpack.c.bf16 %v1640, %v1636
          %v1919 = vpack.c.bf16 %v1650, %v1646
          %v1920 = vpack.c.bf16 %v1660, %v1656
          %v1921 = vpack.c.bf16 %v1670, %v1666
          %1922 = vst [vmem:[#allocation3] sm:$0xff] %v1914
          %1923 = vst [vmem:[#allocation3 + $0x8] sm:$0xff] %v1915
          %1924 = vst [vmem:[#allocation3 + $0x10] sm:$0xff] %v1916
          %1925 = vst [vmem:[#allocation3 + $0x18] sm:$0xff] %v1917
          %1926 = vst [vmem:[#allocation3 + $0x20] sm:$0xff] %v1918
          %1927 = vst [vmem:[#allocation3 + $0x28] sm:$0xff] %v1919
          %1928 = vst [vmem:[#allocation3 + $0x30] sm:$0xff] %v1920
          %1929 = vst [vmem:[#allocation3 + $0x38] sm:$0xff] %v1921
          %v1930 = vpack.c.bf16 %v1807, %v1804
          %v1931 = vpack.c.bf16 %v1815, %v1812
          %v1932 = vpack.c.bf16 %v1823, %v1820
          %v1933 = vpack.c.bf16 %v1831, %v1828
          %v1934 = vpack.c.bf16 %v1839, %v1836
          %v1935 = vpack.c.bf16 %v1847, %v1844
          %v1936 = vpack.c.bf16 %v1855, %v1852
          %v1937 = vpack.c.bf16 %v1863, %v1860
          %1938 = vst [vmem:[#allocation4] sm:$0xff] %v1930
          %1939 = vst [vmem:[#allocation4 + $0x8] sm:$0xff] %v1931
          %1940 = vst [vmem:[#allocation4 + $0x10] sm:$0xff] %v1932
          %1941 = vst [vmem:[#allocation4 + $0x18] sm:$0xff] %v1933
          %1942 = vst [vmem:[#allocation4 + $0x20] sm:$0xff] %v1934
          %1943 = vst [vmem:[#allocation4 + $0x28] sm:$0xff] %v1935
          %1944 = vst [vmem:[#allocation4 + $0x30] sm:$0xff] %v1936
          %1945 = vst [vmem:[#allocation4 + $0x38] sm:$0xff] %v1937
        $region48: #{tpu_custom_call.1} parent=35 // pred_fallthru
          _
        %s1946 = smul.u32 %s27, 128
        %s1947 = sshra.s32 %s1946, 4
        %s1948 = sand.u32 %s1946, 15
        %s1949 = smul.u32 %s1947, 3
        %s1950 = smul.addr %s1949, 8
        %s1951 = scalar_lea.vmem [#allocation2], %s1950
        %v1952 = vld [vmem:[%s1951] sm:$0xff]
        %v1953 = vld [vmem:[%s1951 + $0x8] sm:$0xff]
        %v1954 = vld [vmem:[%s1951 + $0x10] sm:$0xff]
        %v1955 = vld [vmem:[%s1951 + $0x18] sm:$0xff]
        %v1956 = vld [vmem:[%s1951 + $0x20] sm:$0xff]
        %v1957 = vld [vmem:[%s1951 + $0x28] sm:$0xff]
        %v1958 = vld [vmem:[%s1951 + $0x30] sm:$0xff]
        %v1959 = vld [vmem:[%s1951 + $0x38] sm:$0xff]
        %v1960 = vld [vmem:[%s1951 + $0x40] sm:$0xff]
        %v1961 = vld [vmem:[%s1951 + $0x48] sm:$0xff]
        %v1962 = vld [vmem:[%s1951 + $0x50] sm:$0xff]
        %v1963 = vld [vmem:[%s1951 + $0x58] sm:$0xff]
        %v1964 = vld [vmem:[%s1951 + $0x60] sm:$0xff]
        %v1965 = vld [vmem:[%s1951 + $0x68] sm:$0xff]
        %v1966 = vld [vmem:[%s1951 + $0x70] sm:$0xff]
        %v1967 = vld [vmem:[%s1951 + $0x78] sm:$0xff]
        %v1968 = vld [vmem:[%s1951 + $0x80] sm:$0xff]
        %v1969 = vld [vmem:[%s1951 + $0x88] sm:$0xff]
        %v1970 = vld [vmem:[%s1951 + $0x90] sm:$0xff]
        %v1971 = vld [vmem:[%s1951 + $0x98] sm:$0xff]
        %v1972 = vld [vmem:[%s1951 + $0xa0] sm:$0xff]
        %v1973 = vld [vmem:[%s1951 + $0xa8] sm:$0xff]
        %v1974 = vld [vmem:[%s1951 + $0xb0] sm:$0xff]
        %v1975 = vld [vmem:[%s1951 + $0xb8] sm:$0xff]
        %v1976 = vld [vmem:[#allocation3] sm:$0xff]
        %v1977 = vld [vmem:[#allocation3 + $0x8] sm:$0xff]
        %v1978 = vld [vmem:[#allocation3 + $0x10] sm:$0xff]
        %v1979 = vld [vmem:[#allocation3 + $0x18] sm:$0xff]
        %v1980 = vld [vmem:[#allocation3 + $0x20] sm:$0xff]
        %v1981 = vld [vmem:[#allocation3 + $0x28] sm:$0xff]
        %v1982 = vld [vmem:[#allocation3 + $0x30] sm:$0xff]
        %v1983 = vld [vmem:[#allocation3 + $0x38] sm:$0xff]
        %v1984 = vld [vmem:[#allocation4] sm:$0xff]
        %v1985 = vld [vmem:[#allocation4 + $0x8] sm:$0xff]
        %v1986 = vld [vmem:[#allocation4 + $0x10] sm:$0xff]
        %v1987 = vld [vmem:[#allocation4 + $0x18] sm:$0xff]
        %v1988 = vld [vmem:[#allocation4 + $0x20] sm:$0xff]
        %v1989 = vld [vmem:[#allocation4 + $0x28] sm:$0xff]
        %v1990 = vld [vmem:[#allocation4 + $0x30] sm:$0xff]
        %v1991 = vld [vmem:[#allocation4 + $0x38] sm:$0xff]
        %v1992 = vld [vmem:[%s258] sm:$0x1]
        %1993 = vmatprep.subr.bf16.mxu0 0
        %1994 = vmatpush1.bf16.xpose.msra.mxu0 %v1976
        %1995 = vmatprep.subr.bf16.mxu0 0
        %1996 = vmatpush1.bf16.xpose.msra.mxu0 %v1977
        %1997 = vmatprep.subr.bf16.mxu0 0
        %1998 = vmatpush1.bf16.xpose.msra.mxu0 %v1978
        %1999 = vmatprep.subr.bf16.mxu0 0
        %2000 = vmatpush1.bf16.xpose.msra.mxu0 %v1979
        %2001 = vmatprep.subr.bf16.mxu0 0
        %2002 = vmatpush1.bf16.xpose.msra.mxu0 %v1980
        %2003 = vmatprep.subr.bf16.mxu0 0
        %2004 = vmatpush1.bf16.xpose.msra.mxu0 %v1981
        %2005 = vmatprep.subr.bf16.mxu0 0
        %2006 = vmatpush1.bf16.xpose.msra.mxu0 %v1982
        %2007 = vmatprep.subr.bf16.mxu0 0
        %2008 = vmatpush1.bf16.xpose.msra.mxu0 %v1983
        %2009 = vmatprep.subr.bf16.mxu0 0
        %2010 = vmatpush1.bf16.xpose.msra.mxu0 0
        %2011 = vmatprep.subr.bf16.mxu0 0
        %2012 = vmatpush1.bf16.xpose.msra.mxu0 0
        %2013 = vmatprep.subr.bf16.mxu0 0
        %2014 = vmatpush1.bf16.xpose.msra.mxu0 0
        %2015 = vmatprep.subr.bf16.mxu0 0
        %2016 = vmatpush1.bf16.xpose.msra.mxu0 0
        %2017 = vmatprep.subr.bf16.mxu0 0
        %2018 = vmatpush1.bf16.xpose.msra.mxu0 0
        %2019 = vmatprep.subr.bf16.mxu0 0
        %2020 = vmatpush1.bf16.xpose.msra.mxu0 0
        %2021 = vmatprep.subr.bf16.mxu0 0
        %2022 = vmatpush1.bf16.xpose.msra.mxu0 0
        %2023 = vmatprep.subr.bf16.mxu0 0
        %2024 = vmatpush1.bf16.xpose.msra.mxu0 0
        %2025 = vmatprep.mubr.bf16.mxu0 0
        %2026 = vmatmul.mubr.bf16.gmra.mrb[0].mxu0 %v1952
        %v2027 = vpop.f32.mrb[0].mxu0
        %v2028 = vadd.f32 0.0, %v2027
        %v2029 = vpop.f32.mrb[0].mxu0
        %v2030 = vpop.f32.mrb[0].mxu0
        %v2031 = vadd.f32 0.0, %v2030
        %v2032 = vpop.f32.mrb[0].mxu0
        %2033 = vmatprep.mubr.bf16.mxu0 0
        %2034 = vmatmul.mubr.bf16.gmra.mrb[0].mxu0 %v1955
        %v2035 = vpop.f32.mrb[0].mxu0
        %v2036 = vadd.f32 0.0, %v2035
        %v2037 = vpop.f32.mrb[0].mxu0
        %v2038 = vpop.f32.mrb[0].mxu0
        %v2039 = vadd.f32 0.0, %v2038
        %v2040 = vpop.f32.mrb[0].mxu0
        %2041 = vmatprep.mubr.bf16.mxu0 0
        %2042 = vmatmul.mubr.bf16.gmra.mrb[0].mxu0 %v1958
        %v2043 = vpop.f32.mrb[0].mxu0
        %v2044 = vadd.f32 0.0, %v2043
        %v2045 = vpop.f32.mrb[0].mxu0
        %v2046 = vpop.f32.mrb[0].mxu0
        %v2047 = vadd.f32 0.0, %v2046
        %v2048 = vpop.f32.mrb[0].mxu0
        %2049 = vmatprep.mubr.bf16.mxu0 0
        %2050 = vmatmul.mubr.bf16.gmra.mrb[0].mxu0 %v1961
        %v2051 = vpop.f32.mrb[0].mxu0
        %v2052 = vadd.f32 0.0, %v2051
        %v2053 = vpop.f32.mrb[0].mxu0
        %v2054 = vpop.f32.mrb[0].mxu0
        %v2055 = vadd.f32 0.0, %v2054
        %v2056 = vpop.f32.mrb[0].mxu0
        %2057 = vmatprep.mubr.bf16.mxu0 0
        %2058 = vmatmul.mubr.bf16.gmra.mrb[0].mxu0 %v1964
        %v2059 = vpop.f32.mrb[0].mxu0
        %v2060 = vadd.f32 0.0, %v2059
        %v2061 = vpop.f32.mrb[0].mxu0
        %v2062 = vpop.f32.mrb[0].mxu0
        %v2063 = vadd.f32 0.0, %v2062
        %v2064 = vpop.f32.mrb[0].mxu0
        %2065 = vmatprep.mubr.bf16.mxu0 0
        %2066 = vmatmul.mubr.bf16.gmra.mrb[0].mxu0 %v1967
        %v2067 = vpop.f32.mrb[0].mxu0
        %v2068 = vadd.f32 0.0, %v2067
        %v2069 = vpop.f32.mrb[0].mxu0
        %v2070 = vpop.f32.mrb[0].mxu0
        %v2071 = vadd.f32 0.0, %v2070
        %v2072 = vpop.f32.mrb[0].mxu0
        %2073 = vmatprep.mubr.bf16.mxu0 0
        %2074 = vmatmul.mubr.bf16.gmra.mrb[0].mxu0 %v1970
        %v2075 = vpop.f32.mrb[0].mxu0
        %v2076 = vadd.f32 0.0, %v2075
        %v2077 = vpop.f32.mrb[0].mxu0
        %v2078 = vpop.f32.mrb[0].mxu0
        %v2079 = vadd.f32 0.0, %v2078
        %v2080 = vpop.f32.mrb[0].mxu0
        %2081 = vmatprep.mubr.bf16.mxu0 0
        %2082 = vmatmul.mubr.bf16.gmra.mrb[0].mxu0 %v1973
        %v2083 = vpop.f32.mrb[0].mxu0
        %v2084 = vadd.f32 0.0, %v2083
        %v2085 = vpop.f32.mrb[0].mxu0
        %v2086 = vpop.f32.mrb[0].mxu0
        %v2087 = vadd.f32 0.0, %v2086
        %v2088 = vpop.f32.mrb[0].mxu0
        %2089 = vdwg.mxu0
        %v2090 = vmul.f32 %v2028, 0.088388346
        %v2091 = vmul.f32 %v2031, 0.088388346
        %v2092 = vmul.f32 %v2036, 0.088388346
        %v2093 = vmul.f32 %v2039, 0.088388346
        %v2094 = vmul.f32 %v2044, 0.088388346
        %v2095 = vmul.f32 %v2047, 0.088388346
        %v2096 = vmul.f32 %v2052, 0.088388346
        %v2097 = vmul.f32 %v2055, 0.088388346
        %v2098 = vmul.f32 %v2060, 0.088388346
        %v2099 = vmul.f32 %v2063, 0.088388346
        %v2100 = vmul.f32 %v2068, 0.088388346
        %v2101 = vmul.f32 %v2071, 0.088388346
        %v2102 = vmul.f32 %v2076, 0.088388346
        %v2103 = vmul.f32 %v2079, 0.088388346
        %v2104 = vmul.f32 %v2084, 0.088388346
        %v2105 = vmul.f32 %v2087, 0.088388346
        %v2107 = vlaneseq
        %v2108 = vshrl.u32 %v2107, 7
        %v2109 = vsub.s32 0, %v2108
        %v2110 = vrot.slane %v1992, %v2109
        %v2112 = vadd.f32 %v2090, %v2110
        %v2113 = vadd.f32 %v2091, %v2110
        %v2114 = vadd.f32 %v2092, %v2110
        %v2115 = vadd.f32 %v2093, %v2110
        %v2116 = vadd.f32 %v2094, %v2110
        %v2117 = vadd.f32 %v2095, %v2110
        %v2118 = vadd.f32 %v2096, %v2110
        %v2119 = vadd.f32 %v2097, %v2110
        %v2120 = vadd.f32 %v2098, %v2110
        %v2121 = vadd.f32 %v2099, %v2110
        %v2122 = vadd.f32 %v2100, %v2110
        %v2123 = vadd.f32 %v2101, %v2110
        %v2124 = vadd.f32 %v2102, %v2110
        %v2125 = vadd.f32 %v2103, %v2110
        %v2126 = vadd.f32 %v2104, %v2110
        %v2127 = vadd.f32 %v2105, %v2110
        %2128 = vmax.xlane.f32.xlu0 %v2112
        %v2129 = vpop.xlane.xlu0 %2128
        %2130 = vmax.xlane.f32.xlu0 %v2113
        %v2131 = vpop.xlane.xlu0 %2130
        %2132 = vmax.xlane.f32.xlu0 %v2114
        %v2133 = vpop.xlane.xlu0 %2132
        %2134 = vmax.xlane.f32.xlu0 %v2115
        %v2135 = vpop.xlane.xlu0 %2134
        %2136 = vmax.xlane.f32.xlu0 %v2116
        %v2137 = vpop.xlane.xlu0 %2136
        %2138 = vmax.xlane.f32.xlu0 %v2117
        %v2139 = vpop.xlane.xlu0 %2138
        %2140 = vmax.xlane.f32.xlu0 %v2118
        %v2141 = vpop.xlane.xlu0 %2140
        %2142 = vmax.xlane.f32.xlu0 %v2119
        %v2143 = vpop.xlane.xlu0 %2142
        %2144 = vmax.xlane.f32.xlu0 %v2120
        %v2145 = vpop.xlane.xlu0 %2144
        %2146 = vmax.xlane.f32.xlu0 %v2121
        %v2147 = vpop.xlane.xlu0 %2146
        %2148 = vmax.xlane.f32.xlu0 %v2122
        %v2149 = vpop.xlane.xlu0 %2148
        %2150 = vmax.xlane.f32.xlu0 %v2123
        %v2151 = vpop.xlane.xlu0 %2150
        %2152 = vmax.xlane.f32.xlu0 %v2124
        %v2153 = vpop.xlane.xlu0 %2152
        %2154 = vmax.xlane.f32.xlu0 %v2125
        %v2155 = vpop.xlane.xlu0 %2154
        %2156 = vmax.xlane.f32.xlu0 %v2126
        %v2157 = vpop.xlane.xlu0 %2156
        %2158 = vmax.xlane.f32.xlu0 %v2127
        %v2159 = vpop.xlane.xlu0 %2158
        %v2160 = vsub.f32 %v2112, %v2129
        %v2161 = vsub.f32 %v2113, %v2131
        %v2162 = vsub.f32 %v2114, %v2133
        %v2163 = vsub.f32 %v2115, %v2135
        %v2164 = vsub.f32 %v2116, %v2137
        %v2165 = vsub.f32 %v2117, %v2139
        %v2166 = vsub.f32 %v2118, %v2141
        %v2167 = vsub.f32 %v2119, %v2143
        %v2168 = vsub.f32 %v2120, %v2145
        %v2169 = vsub.f32 %v2121, %v2147
        %v2170 = vsub.f32 %v2122, %v2149
        %v2171 = vsub.f32 %v2123, %v2151
        %v2172 = vsub.f32 %v2124, %v2153
        %v2173 = vsub.f32 %v2125, %v2155
        %v2174 = vsub.f32 %v2126, %v2157
        %v2175 = vsub.f32 %v2127, %v2159
        %v2176 = vmul.f32 %v2160, 1.442695
        %v2177 = vpow.pop %v2176
        %v2178 = vmul.f32 %v2161, 1.442695
        %v2179 = vpow.pop %v2178
        %v2180 = vmul.f32 %v2162, 1.442695
        %v2181 = vpow.pop %v2180
        %v2182 = vmul.f32 %v2163, 1.442695
        %v2183 = vpow.pop %v2182
        %v2184 = vmul.f32 %v2164, 1.442695
        %v2185 = vpow.pop %v2184
        %v2186 = vmul.f32 %v2165, 1.442695
        %v2187 = vpow.pop %v2186
        %v2188 = vmul.f32 %v2166, 1.442695
        %v2189 = vpow.pop %v2188
        %v2190 = vmul.f32 %v2167, 1.442695
        %v2191 = vpow.pop %v2190
        %v2192 = vmul.f32 %v2168, 1.442695
        %v2193 = vpow.pop %v2192
        %v2194 = vmul.f32 %v2169, 1.442695
        %v2195 = vpow.pop %v2194
        %v2196 = vmul.f32 %v2170, 1.442695
        %v2197 = vpow.pop %v2196
        %v2198 = vmul.f32 %v2171, 1.442695
        %v2199 = vpow.pop %v2198
        %v2200 = vmul.f32 %v2172, 1.442695
        %v2201 = vpow.pop %v2200
        %v2202 = vmul.f32 %v2173, 1.442695
        %v2203 = vpow.pop %v2202
        %v2204 = vmul.f32 %v2174, 1.442695
        %v2205 = vpow.pop %v2204
        %v2206 = vmul.f32 %v2175, 1.442695
        %v2207 = vpow.pop %v2206
        %2208 = vadd.xlane.f32.xlu0 %v2177
        %v2209 = vpop.xlane.xlu0 %2208
        %2210 = vadd.xlane.f32.xlu0 %v2179
        %v2211 = vpop.xlane.xlu0 %2210
        %2212 = vadd.xlane.f32.xlu0 %v2181
        %v2213 = vpop.xlane.xlu0 %2212
        %2214 = vadd.xlane.f32.xlu0 %v2183
        %v2215 = vpop.xlane.xlu0 %2214
        %2216 = vadd.xlane.f32.xlu0 %v2185
        %v2217 = vpop.xlane.xlu0 %2216
        %2218 = vadd.xlane.f32.xlu0 %v2187
        %v2219 = vpop.xlane.xlu0 %2218
        %2220 = vadd.xlane.f32.xlu0 %v2189
        %v2221 = vpop.xlane.xlu0 %2220
        %2222 = vadd.xlane.f32.xlu0 %v2191
        %v2223 = vpop.xlane.xlu0 %2222
        %2224 = vadd.xlane.f32.xlu0 %v2193
        %v2225 = vpop.xlane.xlu0 %2224
        %2226 = vadd.xlane.f32.xlu0 %v2195
        %v2227 = vpop.xlane.xlu0 %2226
        %2228 = vadd.xlane.f32.xlu0 %v2197
        %v2229 = vpop.xlane.xlu0 %2228
        %2230 = vadd.xlane.f32.xlu0 %v2199
        %v2231 = vpop.xlane.xlu0 %2230
        %2232 = vadd.xlane.f32.xlu0 %v2201
        %v2233 = vpop.xlane.xlu0 %2232
        %2234 = vadd.xlane.f32.xlu0 %v2203
        %v2235 = vpop.xlane.xlu0 %2234
        %2236 = vadd.xlane.f32.xlu0 %v2205
        %v2237 = vpop.xlane.xlu0 %2236
        %2238 = vadd.xlane.f32.xlu0 %v2207
        %v2239 = vpop.xlane.xlu0 %2238
        %v2240 = vrcp.pop %v2209
        %v2241 = vrcp.pop %v2211
        %v2242 = vrcp.pop %v2213
        %v2243 = vrcp.pop %v2215
        %v2244 = vrcp.pop %v2217
        %v2245 = vrcp.pop %v2219
        %v2246 = vrcp.pop %v2221
        %v2247 = vrcp.pop %v2223
        %v2248 = vrcp.pop %v2225
        %v2249 = vrcp.pop %v2227
        %v2250 = vrcp.pop %v2229
        %v2251 = vrcp.pop %v2231
        %v2252 = vrcp.pop %v2233
        %v2253 = vrcp.pop %v2235
        %v2254 = vrcp.pop %v2237
        %v2255 = vrcp.pop %v2239
        %v2256 = vmul.f32 %v2177, %v2240
        %v2257 = vmul.f32 %v2179, %v2241
        %v2258 = vmul.f32 %v2181, %v2242
        %v2259 = vmul.f32 %v2183, %v2243
        %v2260 = vmul.f32 %v2185, %v2244
        %v2261 = vmul.f32 %v2187, %v2245
        %v2262 = vmul.f32 %v2189, %v2246
        %v2263 = vmul.f32 %v2191, %v2247
        %v2264 = vmul.f32 %v2193, %v2248
        %v2265 = vmul.f32 %v2195, %v2249
        %v2266 = vmul.f32 %v2197, %v2250
        %v2267 = vmul.f32 %v2199, %v2251
        %v2268 = vmul.f32 %v2201, %v2252
        %v2269 = vmul.f32 %v2203, %v2253
        %v2270 = vmul.f32 %v2205, %v2254
        %v2271 = vmul.f32 %v2207, %v2255
        %v2272 = vpack.c.bf16 %v2257, %v2256
        %v2273 = vpack.c.bf16 %v2259, %v2258
        %v2274 = vpack.c.bf16 %v2261, %v2260
        %v2275 = vpack.c.bf16 %v2263, %v2262
        %v2276 = vpack.c.bf16 %v2265, %v2264
        %v2277 = vpack.c.bf16 %v2267, %v2266
        %v2278 = vpack.c.bf16 %v2269, %v2268
        %v2279 = vpack.c.bf16 %v2271, %v2270
        %2280 = vmatprep.subr.bf16.mxu0 0
        %2281 = vmatpush1.bf16.msra.mxu0 %v1984
        %2282 = vmatprep.subr.bf16.mxu0 0
        %2283 = vmatpush1.bf16.msra.mxu0 %v1985
        %2284 = vmatprep.subr.bf16.mxu0 0
        %2285 = vmatpush1.bf16.msra.mxu0 %v1986
        %2286 = vmatprep.subr.bf16.mxu0 0
        %2287 = vmatpush1.bf16.msra.mxu0 %v1987
        %2288 = vmatprep.subr.bf16.mxu0 0
        %2289 = vmatpush1.bf16.msra.mxu0 %v1988
        %2290 = vmatprep.subr.bf16.mxu0 0
        %2291 = vmatpush1.bf16.msra.mxu0 %v1989
        %2292 = vmatprep.subr.bf16.mxu0 0
        %2293 = vmatpush1.bf16.msra.mxu0 %v1990
        %2294 = vmatprep.subr.bf16.mxu0 0
        %2295 = vmatpush1.bf16.msra.mxu0 %v1991
        %2296 = vmatprep.subr.bf16.mxu0 0
        %2297 = vmatpush1.bf16.msra.mxu0 0
        %2298 = vmatprep.subr.bf16.mxu0 0
        %2299 = vmatpush1.bf16.msra.mxu0 0
        %2300 = vmatprep.subr.bf16.mxu0 0
        %2301 = vmatpush1.bf16.msra.mxu0 0
        %2302 = vmatprep.subr.bf16.mxu0 0
        %2303 = vmatpush1.bf16.msra.mxu0 0
        %2304 = vmatprep.subr.bf16.mxu0 0
        %2305 = vmatpush1.bf16.msra.mxu0 0
        %2306 = vmatprep.subr.bf16.mxu0 0
        %2307 = vmatpush1.bf16.msra.mxu0 0
        %2308 = vmatprep.subr.bf16.mxu0 0
        %2309 = vmatpush1.bf16.msra.mxu0 0
        %2310 = vmatprep.subr.bf16.mxu0 0
        %2311 = vmatpush1.bf16.msra.mxu0 0
        %2312 = vmatprep.mubr.bf16.mxu0 0
        %2313 = vmatmul.mubr.bf16.gmra.mrb[0].mxu0 %v2272
        %v2314 = vpop.f32.mrb[0].mxu0
        %v2315 = vadd.f32 0.0, %v2314
        %v2316 = vpop.f32.mrb[0].mxu0
        %v2317 = vpop.f32.mrb[0].mxu0
        %v2318 = vadd.f32 0.0, %v2317
        %v2319 = vpop.f32.mrb[0].mxu0
        %2320 = vmatprep.mubr.bf16.mxu0 0
        %2321 = vmatmul.mubr.bf16.gmra.mrb[0].mxu0 %v2273
        %v2322 = vpop.f32.mrb[0].mxu0
        %v2323 = vadd.f32 0.0, %v2322
        %v2324 = vpop.f32.mrb[0].mxu0
        %v2325 = vpop.f32.mrb[0].mxu0
        %v2326 = vadd.f32 0.0, %v2325
        %v2327 = vpop.f32.mrb[0].mxu0
        %2328 = vmatprep.mubr.bf16.mxu0 0
        %2329 = vmatmul.mubr.bf16.gmra.mrb[0].mxu0 %v2274
        %v2330 = vpop.f32.mrb[0].mxu0
        %v2331 = vadd.f32 0.0, %v2330
        %v2332 = vpop.f32.mrb[0].mxu0
        %v2333 = vpop.f32.mrb[0].mxu0
        %v2334 = vadd.f32 0.0, %v2333
        %v2335 = vpop.f32.mrb[0].mxu0
        %2336 = vmatprep.mubr.bf16.mxu0 0
        %2337 = vmatmul.mubr.bf16.gmra.mrb[0].mxu0 %v2275
        %v2338 = vpop.f32.mrb[0].mxu0
        %v2339 = vadd.f32 0.0, %v2338
        %v2340 = vpop.f32.mrb[0].mxu0
        %v2341 = vpop.f32.mrb[0].mxu0
        %v2342 = vadd.f32 0.0, %v2341
        %v2343 = vpop.f32.mrb[0].mxu0
        %2344 = vmatprep.mubr.bf16.mxu0 0
        %2345 = vmatmul.mubr.bf16.gmra.mrb[0].mxu0 %v2276
        %v2346 = vpop.f32.mrb[0].mxu0
        %v2347 = vadd.f32 0.0, %v2346
        %v2348 = vpop.f32.mrb[0].mxu0
        %v2349 = vpop.f32.mrb[0].mxu0
        %v2350 = vadd.f32 0.0, %v2349
        %v2351 = vpop.f32.mrb[0].mxu0
        %2352 = vmatprep.mubr.bf16.mxu0 0
        %2353 = vmatmul.mubr.bf16.gmra.mrb[0].mxu0 %v2277
        %v2354 = vpop.f32.mrb[0].mxu0
        %v2355 = vadd.f32 0.0, %v2354
        %v2356 = vpop.f32.mrb[0].mxu0
        %v2357 = vpop.f32.mrb[0].mxu0
        %v2358 = vadd.f32 0.0, %v2357
        %v2359 = vpop.f32.mrb[0].mxu0
        %2360 = vmatprep.mubr.bf16.mxu0 0
        %2361 = vmatmul.mubr.bf16.gmra.mrb[0].mxu0 %v2278
        %v2362 = vpop.f32.mrb[0].mxu0
        %v2363 = vadd.f32 0.0, %v2362
        %v2364 = vpop.f32.mrb[0].mxu0
        %v2365 = vpop.f32.mrb[0].mxu0
        %v2366 = vadd.f32 0.0, %v2365
        %v2367 = vpop.f32.mrb[0].mxu0
        %2368 = vmatprep.mubr.bf16.mxu0 0
        %2369 = vmatmul.mubr.bf16.gmra.mrb[0].mxu0 %v2279
        %v2370 = vpop.f32.mrb[0].mxu0
        %v2371 = vadd.f32 0.0, %v2370
        %v2372 = vpop.f32.mrb[0].mxu0
        %v2373 = vpop.f32.mrb[0].mxu0
        %v2374 = vadd.f32 0.0, %v2373
        %v2375 = vpop.f32.mrb[0].mxu0
        %2376 = vdwg.mxu0
        %2377 = vmatprep.subr.bf16.mxu0 0
        %2378 = vmatpush1.bf16.xpose.msra.mxu0 %v1976
        %2379 = vmatprep.subr.bf16.mxu0 0
        %2380 = vmatpush1.bf16.xpose.msra.mxu0 %v1977
        %2381 = vmatprep.subr.bf16.mxu0 0
        %2382 = vmatpush1.bf16.xpose.msra.mxu0 %v1978
        %2383 = vmatprep.subr.bf16.mxu0 0
        %2384 = vmatpush1.bf16.xpose.msra.mxu0 %v1979
        %2385 = vmatprep.subr.bf16.mxu0 0
        %2386 = vmatpush1.bf16.xpose.msra.mxu0 %v1980
        %2387 = vmatprep.subr.bf16.mxu0 0
        %2388 = vmatpush1.bf16.xpose.msra.mxu0 %v1981
        %2389 = vmatprep.subr.bf16.mxu0 0
        %2390 = vmatpush1.bf16.xpose.msra.mxu0 %v1982
        %2391 = vmatprep.subr.bf16.mxu0 0
        %2392 = vmatpush1.bf16.xpose.msra.mxu0 %v1983
        %2393 = vmatprep.subr.bf16.mxu0 0
        %2394 = vmatpush1.bf16.xpose.msra.mxu0 0
        %2395 = vmatprep.subr.bf16.mxu0 0
        %2396 = vmatpush1.bf16.xpose.msra.mxu0 0
        %2397 = vmatprep.subr.bf16.mxu0 0
        %2398 = vmatpush1.bf16.xpose.msra.mxu0 0
        %2399 = vmatprep.subr.bf16.mxu0 0
        %2400 = vmatpush1.bf16.xpose.msra.mxu0 0
        %2401 = vmatprep.subr.bf16.mxu0 0
        %2402 = vmatpush1.bf16.xpose.msra.mxu0 0
        %2403 = vmatprep.subr.bf16.mxu0 0
        %2404 = vmatpush1.bf16.xpose.msra.mxu0 0
        %2405 = vmatprep.subr.bf16.mxu0 0
        %2406 = vmatpush1.bf16.xpose.msra.mxu0 0
        %2407 = vmatprep.subr.bf16.mxu0 0
        %2408 = vmatpush1.bf16.xpose.msra.mxu0 0
        %2409 = vmatprep.mubr.bf16.mxu0 0
        %2410 = vmatmul.mubr.bf16.gmra.mrb[0].mxu0 %v1953
        %v2411 = vpop.f32.mrb[0].mxu0
        %v2412 = vadd.f32 0.0, %v2411
        %v2413 = vpop.f32.mrb[0].mxu0
        %v2414 = vpop.f32.mrb[0].mxu0
        %v2415 = vadd.f32 0.0, %v2414
        %v2416 = vpop.f32.mrb[0].mxu0
        %2417 = vmatprep.mubr.bf16.mxu0 0
        %2418 = vmatmul.mubr.bf16.gmra.mrb[0].mxu0 %v1956
        %v2419 = vpop.f32.mrb[0].mxu0
        %v2420 = vadd.f32 0.0, %v2419
        %v2421 = vpop.f32.mrb[0].mxu0
        %v2422 = vpop.f32.mrb[0].mxu0
        %v2423 = vadd.f32 0.0, %v2422
        %v2424 = vpop.f32.mrb[0].mxu0
        %2425 = vmatprep.mubr.bf16.mxu0 0
        %2426 = vmatmul.mubr.bf16.gmra.mrb[0].mxu0 %v1959
        %v2427 = vpop.f32.mrb[0].mxu0
        %v2428 = vadd.f32 0.0, %v2427
        %v2429 = vpop.f32.mrb[0].mxu0
        %v2430 = vpop.f32.mrb[0].mxu0
        %v2431 = vadd.f32 0.0, %v2430
        %v2432 = vpop.f32.mrb[0].mxu0
        %2433 = vmatprep.mubr.bf16.mxu0 0
        %2434 = vmatmul.mubr.bf16.gmra.mrb[0].mxu0 %v1962
        %v2435 = vpop.f32.mrb[0].mxu0
        %v2436 = vadd.f32 0.0, %v2435
        %v2437 = vpop.f32.mrb[0].mxu0
        %v2438 = vpop.f32.mrb[0].mxu0
        %v2439 = vadd.f32 0.0, %v2438
        %v2440 = vpop.f32.mrb[0].mxu0
        %2441 = vmatprep.mubr.bf16.mxu0 0
        %2442 = vmatmul.mubr.bf16.gmra.mrb[0].mxu0 %v1965
        %v2443 = vpop.f32.mrb[0].mxu0
        %v2444 = vadd.f32 0.0, %v2443
        %v2445 = vpop.f32.mrb[0].mxu0
        %v2446 = vpop.f32.mrb[0].mxu0
        %v2447 = vadd.f32 0.0, %v2446
        %v2448 = vpop.f32.mrb[0].mxu0
        %2449 = vmatprep.mubr.bf16.mxu0 0
        %2450 = vmatmul.mubr.bf16.gmra.mrb[0].mxu0 %v1968
        %v2451 = vpop.f32.mrb[0].mxu0
        %v2452 = vadd.f32 0.0, %v2451
        %v2453 = vpop.f32.mrb[0].mxu0
        %v2454 = vpop.f32.mrb[0].mxu0
        %v2455 = vadd.f32 0.0, %v2454
        %v2456 = vpop.f32.mrb[0].mxu0
        %2457 = vmatprep.mubr.bf16.mxu0 0
        %2458 = vmatmul.mubr.bf16.gmra.mrb[0].mxu0 %v1971
        %v2459 = vpop.f32.mrb[0].mxu0
        %v2460 = vadd.f32 0.0, %v2459
        %v2461 = vpop.f32.mrb[0].mxu0
        %v2462 = vpop.f32.mrb[0].mxu0
        %v2463 = vadd.f32 0.0, %v2462
        %v2464 = vpop.f32.mrb[0].mxu0
        %2465 = vmatprep.mubr.bf16.mxu0 0
        %2466 = vmatmul.mubr.bf16.gmra.mrb[0].mxu0 %v1974
        %v2467 = vpop.f32.mrb[0].mxu0
        %v2468 = vadd.f32 0.0, %v2467
        %v2469 = vpop.f32.mrb[0].mxu0
        %v2470 = vpop.f32.mrb[0].mxu0
        %v2471 = vadd.f32 0.0, %v2470
        %v2472 = vpop.f32.mrb[0].mxu0
        %2473 = vdwg.mxu0
        %v2474 = vmul.f32 %v2412, 0.088388346
        %v2475 = vmul.f32 %v2415, 0.088388346
        %v2476 = vmul.f32 %v2420, 0.088388346
        %v2477 = vmul.f32 %v2423, 0.088388346
        %v2478 = vmul.f32 %v2428, 0.088388346
        %v2479 = vmul.f32 %v2431, 0.088388346
        %v2480 = vmul.f32 %v2436, 0.088388346
        %v2481 = vmul.f32 %v2439, 0.088388346
        %v2482 = vmul.f32 %v2444, 0.088388346
        %v2483 = vmul.f32 %v2447, 0.088388346
        %v2484 = vmul.f32 %v2452, 0.088388346
        %v2485 = vmul.f32 %v2455, 0.088388346
        %v2486 = vmul.f32 %v2460, 0.088388346
        %v2487 = vmul.f32 %v2463, 0.088388346
        %v2488 = vmul.f32 %v2468, 0.088388346
        %v2489 = vmul.f32 %v2471, 0.088388346
        %v2490 = vadd.f32 %v2474, %v2110
        %v2491 = vadd.f32 %v2475, %v2110
        %v2492 = vadd.f32 %v2476, %v2110
        %v2493 = vadd.f32 %v2477, %v2110
        %v2494 = vadd.f32 %v2478, %v2110
        %v2495 = vadd.f32 %v2479, %v2110
        %v2496 = vadd.f32 %v2480, %v2110
        %v2497 = vadd.f32 %v2481, %v2110
        %v2498 = vadd.f32 %v2482, %v2110
        %v2499 = vadd.f32 %v2483, %v2110
        %v2500 = vadd.f32 %v2484, %v2110
        %v2501 = vadd.f32 %v2485, %v2110
        %v2502 = vadd.f32 %v2486, %v2110
        %v2503 = vadd.f32 %v2487, %v2110
        %v2504 = vadd.f32 %v2488, %v2110
        %v2505 = vadd.f32 %v2489, %v2110
        %2506 = vmax.xlane.f32.xlu0 %v2490
        %v2507 = vpop.xlane.xlu0 %2506
        %2508 = vmax.xlane.f32.xlu0 %v2491
        %v2509 = vpop.xlane.xlu0 %2508
        %2510 = vmax.xlane.f32.xlu0 %v2492
        %v2511 = vpop.xlane.xlu0 %2510
        %2512 = vmax.xlane.f32.xlu0 %v2493
        %v2513 = vpop.xlane.xlu0 %2512
        %2514 = vmax.xlane.f32.xlu0 %v2494
        %v2515 = vpop.xlane.xlu0 %2514
        %2516 = vmax.xlane.f32.xlu0 %v2495
        %v2517 = vpop.xlane.xlu0 %2516
        %2518 = vmax.xlane.f32.xlu0 %v2496
        %v2519 = vpop.xlane.xlu0 %2518
        %2520 = vmax.xlane.f32.xlu0 %v2497
        %v2521 = vpop.xlane.xlu0 %2520
        %2522 = vmax.xlane.f32.xlu0 %v2498
        %v2523 = vpop.xlane.xlu0 %2522
        %2524 = vmax.xlane.f32.xlu0 %v2499
        %v2525 = vpop.xlane.xlu0 %2524
        %2526 = vmax.xlane.f32.xlu0 %v2500
        %v2527 = vpop.xlane.xlu0 %2526
        %2528 = vmax.xlane.f32.xlu0 %v2501
        %v2529 = vpop.xlane.xlu0 %2528
        %2530 = vmax.xlane.f32.xlu0 %v2502
        %v2531 = vpop.xlane.xlu0 %2530
        %2532 = vmax.xlane.f32.xlu0 %v2503
        %v2533 = vpop.xlane.xlu0 %2532
        %2534 = vmax.xlane.f32.xlu0 %v2504
        %v2535 = vpop.xlane.xlu0 %2534
        %2536 = vmax.xlane.f32.xlu0 %v2505
        %v2537 = vpop.xlane.xlu0 %2536
        %v2538 = vsub.f32 %v2490, %v2507
        %v2539 = vsub.f32 %v2491, %v2509
        %v2540 = vsub.f32 %v2492, %v2511
        %v2541 = vsub.f32 %v2493, %v2513
        %v2542 = vsub.f32 %v2494, %v2515
        %v2543 = vsub.f32 %v2495, %v2517
        %v2544 = vsub.f32 %v2496, %v2519
        %v2545 = vsub.f32 %v2497, %v2521
        %v2546 = vsub.f32 %v2498, %v2523
        %v2547 = vsub.f32 %v2499, %v2525
        %v2548 = vsub.f32 %v2500, %v2527
        %v2549 = vsub.f32 %v2501, %v2529
        %v2550 = vsub.f32 %v2502, %v2531
        %v2551 = vsub.f32 %v2503, %v2533
        %v2552 = vsub.f32 %v2504, %v2535
        %v2553 = vsub.f32 %v2505, %v2537
        %v2554 = vmul.f32 %v2538, 1.442695
        %v2555 = vpow.pop %v2554
        %v2556 = vmul.f32 %v2539, 1.442695
        %v2557 = vpow.pop %v2556
        %v2558 = vmul.f32 %v2540, 1.442695
        %v2559 = vpow.pop %v2558
        %v2560 = vmul.f32 %v2541, 1.442695
        %v2561 = vpow.pop %v2560
        %v2562 = vmul.f32 %v2542, 1.442695
        %v2563 = vpow.pop %v2562
        %v2564 = vmul.f32 %v2543, 1.442695
        %v2565 = vpow.pop %v2564
        %v2566 = vmul.f32 %v2544, 1.442695
        %v2567 = vpow.pop %v2566
        %v2568 = vmul.f32 %v2545, 1.442695
        %v2569 = vpow.pop %v2568
        %v2570 = vmul.f32 %v2546, 1.442695
        %v2571 = vpow.pop %v2570
        %v2572 = vmul.f32 %v2547, 1.442695
        %v2573 = vpow.pop %v2572
        %v2574 = vmul.f32 %v2548, 1.442695
        %v2575 = vpow.pop %v2574
        %v2576 = vmul.f32 %v2549, 1.442695
        %v2577 = vpow.pop %v2576
        %v2578 = vmul.f32 %v2550, 1.442695
        %v2579 = vpow.pop %v2578
        %v2580 = vmul.f32 %v2551, 1.442695
        %v2581 = vpow.pop %v2580
        %v2582 = vmul.f32 %v2552, 1.442695
        %v2583 = vpow.pop %v2582
        %v2584 = vmul.f32 %v2553, 1.442695
        %v2585 = vpow.pop %v2584
        %2586 = vadd.xlane.f32.xlu0 %v2555
        %v2587 = vpop.xlane.xlu0 %2586
        %2588 = vadd.xlane.f32.xlu0 %v2557
        %v2589 = vpop.xlane.xlu0 %2588
        %2590 = vadd.xlane.f32.xlu0 %v2559
        %v2591 = vpop.xlane.xlu0 %2590
        %2592 = vadd.xlane.f32.xlu0 %v2561
        %v2593 = vpop.xlane.xlu0 %2592
        %2594 = vadd.xlane.f32.xlu0 %v2563
        %v2595 = vpop.xlane.xlu0 %2594
        %2596 = vadd.xlane.f32.xlu0 %v2565
        %v2597 = vpop.xlane.xlu0 %2596
        %2598 = vadd.xlane.f32.xlu0 %v2567
        %v2599 = vpop.xlane.xlu0 %2598
        %2600 = vadd.xlane.f32.xlu0 %v2569
        %v2601 = vpop.xlane.xlu0 %2600
        %2602 = vadd.xlane.f32.xlu0 %v2571
        %v2603 = vpop.xlane.xlu0 %2602
        %2604 = vadd.xlane.f32.xlu0 %v2573
        %v2605 = vpop.xlane.xlu0 %2604
        %2606 = vadd.xlane.f32.xlu0 %v2575
        %v2607 = vpop.xlane.xlu0 %2606
        %2608 = vadd.xlane.f32.xlu0 %v2577
        %v2609 = vpop.xlane.xlu0 %2608
        %2610 = vadd.xlane.f32.xlu0 %v2579
        %v2611 = vpop.xlane.xlu0 %2610
        %2612 = vadd.xlane.f32.xlu0 %v2581
        %v2613 = vpop.xlane.xlu0 %2612
        %2614 = vadd.xlane.f32.xlu0 %v2583
        %v2615 = vpop.xlane.xlu0 %2614
        %2616 = vadd.xlane.f32.xlu0 %v2585
        %v2617 = vpop.xlane.xlu0 %2616
        %v2618 = vrcp.pop %v2587
        %v2619 = vrcp.pop %v2589
        %v2620 = vrcp.pop %v2591
        %v2621 = vrcp.pop %v2593
        %v2622 = vrcp.pop %v2595
        %v2623 = vrcp.pop %v2597
        %v2624 = vrcp.pop %v2599
        %v2625 = vrcp.pop %v2601
        %v2626 = vrcp.pop %v2603
        %v2627 = vrcp.pop %v2605
        %v2628 = vrcp.pop %v2607
        %v2629 = vrcp.pop %v2609
        %v2630 = vrcp.pop %v2611
        %v2631 = vrcp.pop %v2613
        %v2632 = vrcp.pop %v2615
        %v2633 = vrcp.pop %v2617
        %v2634 = vmul.f32 %v2555, %v2618
        %v2635 = vmul.f32 %v2557, %v2619
        %v2636 = vmul.f32 %v2559, %v2620
        %v2637 = vmul.f32 %v2561, %v2621
        %v2638 = vmul.f32 %v2563, %v2622
        %v2639 = vmul.f32 %v2565, %v2623
        %v2640 = vmul.f32 %v2567, %v2624
        %v2641 = vmul.f32 %v2569, %v2625
        %v2642 = vmul.f32 %v2571, %v2626
        %v2643 = vmul.f32 %v2573, %v2627
        %v2644 = vmul.f32 %v2575, %v2628
        %v2645 = vmul.f32 %v2577, %v2629
        %v2646 = vmul.f32 %v2579, %v2630
        %v2647 = vmul.f32 %v2581, %v2631
        %v2648 = vmul.f32 %v2583, %v2632
        %v2649 = vmul.f32 %v2585, %v2633
        %v2650 = vpack.c.bf16 %v2635, %v2634
        %v2651 = vpack.c.bf16 %v2637, %v2636
        %v2652 = vpack.c.bf16 %v2639, %v2638
        %v2653 = vpack.c.bf16 %v2641, %v2640
        %v2654 = vpack.c.bf16 %v2643, %v2642
        %v2655 = vpack.c.bf16 %v2645, %v2644
        %v2656 = vpack.c.bf16 %v2647, %v2646
        %v2657 = vpack.c.bf16 %v2649, %v2648
        %2658 = vmatprep.subr.bf16.mxu0 0
        %2659 = vmatpush1.bf16.msra.mxu0 %v1984
        %2660 = vmatprep.subr.bf16.mxu0 0
        %2661 = vmatpush1.bf16.msra.mxu0 %v1985
        %2662 = vmatprep.subr.bf16.mxu0 0
        %2663 = vmatpush1.bf16.msra.mxu0 %v1986
        %2664 = vmatprep.subr.bf16.mxu0 0
        %2665 = vmatpush1.bf16.msra.mxu0 %v1987
        %2666 = vmatprep.subr.bf16.mxu0 0
        %2667 = vmatpush1.bf16.msra.mxu0 %v1988
        %2668 = vmatprep.subr.bf16.mxu0 0
        %2669 = vmatpush1.bf16.msra.mxu0 %v1989
        %2670 = vmatprep.subr.bf16.mxu0 0
        %2671 = vmatpush1.bf16.msra.mxu0 %v1990
        %2672 = vmatprep.subr.bf16.mxu0 0
        %2673 = vmatpush1.bf16.msra.mxu0 %v1991
        %2674 = vmatprep.subr.bf16.mxu0 0
        %2675 = vmatpush1.bf16.msra.mxu0 0
        %2676 = vmatprep.subr.bf16.mxu0 0
        %2677 = vmatpush1.bf16.msra.mxu0 0
        %2678 = vmatprep.subr.bf16.mxu0 0
        %2679 = vmatpush1.bf16.msra.mxu0 0
        %2680 = vmatprep.subr.bf16.mxu0 0
        %2681 = vmatpush1.bf16.msra.mxu0 0
        %2682 = vmatprep.subr.bf16.mxu0 0
        %2683 = vmatpush1.bf16.msra.mxu0 0
        %2684 = vmatprep.subr.bf16.mxu0 0
        %2685 = vmatpush1.bf16.msra.mxu0 0
        %2686 = vmatprep.subr.bf16.mxu0 0
        %2687 = vmatpush1.bf16.msra.mxu0 0
        %2688 = vmatprep.subr.bf16.mxu0 0
        %2689 = vmatpush1.bf16.msra.mxu0 0
        %2690 = vmatprep.mubr.bf16.mxu0 0
        %2691 = vmatmul.mubr.bf16.gmra.mrb[0].mxu0 %v2650
        %v2692 = vpop.f32.mrb[0].mxu0
        %v2693 = vadd.f32 0.0, %v2692
        %v2694 = vpop.f32.mrb[0].mxu0
        %v2695 = vpop.f32.mrb[0].mxu0
        %v2696 = vadd.f32 0.0, %v2695
        %v2697 = vpop.f32.mrb[0].mxu0
        %2698 = vmatprep.mubr.bf16.mxu0 0
        %2699 = vmatmul.mubr.bf16.gmra.mrb[0].mxu0 %v2651
        %v2700 = vpop.f32.mrb[0].mxu0
        %v2701 = vadd.f32 0.0, %v2700
        %v2702 = vpop.f32.mrb[0].mxu0
        %v2703 = vpop.f32.mrb[0].mxu0
        %v2704 = vadd.f32 0.0, %v2703
        %v2705 = vpop.f32.mrb[0].mxu0
        %2706 = vmatprep.mubr.bf16.mxu0 0
        %2707 = vmatmul.mubr.bf16.gmra.mrb[0].mxu0 %v2652
        %v2708 = vpop.f32.mrb[0].mxu0
        %v2709 = vadd.f32 0.0, %v2708
        %v2710 = vpop.f32.mrb[0].mxu0
        %v2711 = vpop.f32.mrb[0].mxu0
        %v2712 = vadd.f32 0.0, %v2711
        %v2713 = vpop.f32.mrb[0].mxu0
        %2714 = vmatprep.mubr.bf16.mxu0 0
        %2715 = vmatmul.mubr.bf16.gmra.mrb[0].mxu0 %v2653
        %v2716 = vpop.f32.mrb[0].mxu0
        %v2717 = vadd.f32 0.0, %v2716
        %v2718 = vpop.f32.mrb[0].mxu0
        %v2719 = vpop.f32.mrb[0].mxu0
        %v2720 = vadd.f32 0.0, %v2719
        %v2721 = vpop.f32.mrb[0].mxu0
        %2722 = vmatprep.mubr.bf16.mxu0 0
        %2723 = vmatmul.mubr.bf16.gmra.mrb[0].mxu0 %v2654
        %v2724 = vpop.f32.mrb[0].mxu0
        %v2725 = vadd.f32 0.0, %v2724
        %v2726 = vpop.f32.mrb[0].mxu0
        %v2727 = vpop.f32.mrb[0].mxu0
        %v2728 = vadd.f32 0.0, %v2727
        %v2729 = vpop.f32.mrb[0].mxu0
        %2730 = vmatprep.mubr.bf16.mxu0 0
        %2731 = vmatmul.mubr.bf16.gmra.mrb[0].mxu0 %v2655
        %v2732 = vpop.f32.mrb[0].mxu0
        %v2733 = vadd.f32 0.0, %v2732
        %v2734 = vpop.f32.mrb[0].mxu0
        %v2735 = vpop.f32.mrb[0].mxu0
        %v2736 = vadd.f32 0.0, %v2735
        %v2737 = vpop.f32.mrb[0].mxu0
        %2738 = vmatprep.mubr.bf16.mxu0 0
        %2739 = vmatmul.mubr.bf16.gmra.mrb[0].mxu0 %v2656
        %v2740 = vpop.f32.mrb[0].mxu0
        %v2741 = vadd.f32 0.0, %v2740
        %v2742 = vpop.f32.mrb[0].mxu0
        %v2743 = vpop.f32.mrb[0].mxu0
        %v2744 = vadd.f32 0.0, %v2743
        %v2745 = vpop.f32.mrb[0].mxu0
        %2746 = vmatprep.mubr.bf16.mxu0 0
        %2747 = vmatmul.mubr.bf16.gmra.mrb[0].mxu0 %v2657
        %v2748 = vpop.f32.mrb[0].mxu0
        %v2749 = vadd.f32 0.0, %v2748
        %v2750 = vpop.f32.mrb[0].mxu0
        %v2751 = vpop.f32.mrb[0].mxu0
        %v2752 = vadd.f32 0.0, %v2751
        %v2753 = vpop.f32.mrb[0].mxu0
        %2754 = vdwg.mxu0
        %2755 = vmatprep.subr.bf16.mxu0 0
        %2756 = vmatpush1.bf16.xpose.msra.mxu0 %v1976
        %2757 = vmatprep.subr.bf16.mxu0 0
        %2758 = vmatpush1.bf16.xpose.msra.mxu0 %v1977
        %2759 = vmatprep.subr.bf16.mxu0 0
        %2760 = vmatpush1.bf16.xpose.msra.mxu0 %v1978
        %2761 = vmatprep.subr.bf16.mxu0 0
        %2762 = vmatpush1.bf16.xpose.msra.mxu0 %v1979
        %2763 = vmatprep.subr.bf16.mxu0 0
        %2764 = vmatpush1.bf16.xpose.msra.mxu0 %v1980
        %2765 = vmatprep.subr.bf16.mxu0 0
        %2766 = vmatpush1.bf16.xpose.msra.mxu0 %v1981
        %2767 = vmatprep.subr.bf16.mxu0 0
        %2768 = vmatpush1.bf16.xpose.msra.mxu0 %v1982
        %2769 = vmatprep.subr.bf16.mxu0 0
        %2770 = vmatpush1.bf16.xpose.msra.mxu0 %v1983
        %2771 = vmatprep.subr.bf16.mxu0 0
        %2772 = vmatpush1.bf16.xpose.msra.mxu0 0
        %2773 = vmatprep.subr.bf16.mxu0 0
        %2774 = vmatpush1.bf16.xpose.msra.mxu0 0
        %2775 = vmatprep.subr.bf16.mxu0 0
        %2776 = vmatpush1.bf16.xpose.msra.mxu0 0
        %2777 = vmatprep.subr.bf16.mxu0 0
        %2778 = vmatpush1.bf16.xpose.msra.mxu0 0
        %2779 = vmatprep.subr.bf16.mxu0 0
        %2780 = vmatpush1.bf16.xpose.msra.mxu0 0
        %2781 = vmatprep.subr.bf16.mxu0 0
        %2782 = vmatpush1.bf16.xpose.msra.mxu0 0
        %2783 = vmatprep.subr.bf16.mxu0 0
        %2784 = vmatpush1.bf16.xpose.msra.mxu0 0
        %2785 = vmatprep.subr.bf16.mxu0 0
        %2786 = vmatpush1.bf16.xpose.msra.mxu0 0
        %2787 = vmatprep.mubr.bf16.mxu0 0
        %2788 = vmatmul.mubr.bf16.gmra.mrb[0].mxu0 %v1954
        %v2789 = vpop.f32.mrb[0].mxu0
        %v2790 = vadd.f32 0.0, %v2789
        %v2791 = vpop.f32.mrb[0].mxu0
        %v2792 = vpop.f32.mrb[0].mxu0
        %v2793 = vadd.f32 0.0, %v2792
        %v2794 = vpop.f32.mrb[0].mxu0
        %2795 = vmatprep.mubr.bf16.mxu0 0
        %2796 = vmatmul.mubr.bf16.gmra.mrb[0].mxu0 %v1957
        %v2797 = vpop.f32.mrb[0].mxu0
        %v2798 = vadd.f32 0.0, %v2797
        %v2799 = vpop.f32.mrb[0].mxu0
        %v2800 = vpop.f32.mrb[0].mxu0
        %v2801 = vadd.f32 0.0, %v2800
        %v2802 = vpop.f32.mrb[0].mxu0
        %2803 = vmatprep.mubr.bf16.mxu0 0
        %2804 = vmatmul.mubr.bf16.gmra.mrb[0].mxu0 %v1960
        %v2805 = vpop.f32.mrb[0].mxu0
        %v2806 = vadd.f32 0.0, %v2805
        %v2807 = vpop.f32.mrb[0].mxu0
        %v2808 = vpop.f32.mrb[0].mxu0
        %v2809 = vadd.f32 0.0, %v2808
        %v2810 = vpop.f32.mrb[0].mxu0
        %2811 = vmatprep.mubr.bf16.mxu0 0
        %2812 = vmatmul.mubr.bf16.gmra.mrb[0].mxu0 %v1963
        %v2813 = vpop.f32.mrb[0].mxu0
        %v2814 = vadd.f32 0.0, %v2813
        %v2815 = vpop.f32.mrb[0].mxu0
        %v2816 = vpop.f32.mrb[0].mxu0
        %v2817 = vadd.f32 0.0, %v2816
        %v2818 = vpop.f32.mrb[0].mxu0
        %2819 = vmatprep.mubr.bf16.mxu0 0
        %2820 = vmatmul.mubr.bf16.gmra.mrb[0].mxu0 %v1966
        %v2821 = vpop.f32.mrb[0].mxu0
        %v2822 = vadd.f32 0.0, %v2821
        %v2823 = vpop.f32.mrb[0].mxu0
        %v2824 = vpop.f32.mrb[0].mxu0
        %v2825 = vadd.f32 0.0, %v2824
        %v2826 = vpop.f32.mrb[0].mxu0
        %2827 = vmatprep.mubr.bf16.mxu0 0
        %2828 = vmatmul.mubr.bf16.gmra.mrb[0].mxu0 %v1969
        %v2829 = vpop.f32.mrb[0].mxu0
        %v2830 = vadd.f32 0.0, %v2829
        %v2831 = vpop.f32.mrb[0].mxu0
        %v2832 = vpop.f32.mrb[0].mxu0
        %v2833 = vadd.f32 0.0, %v2832
        %v2834 = vpop.f32.mrb[0].mxu0
        %2835 = vmatprep.mubr.bf16.mxu0 0
        %2836 = vmatmul.mubr.bf16.gmra.mrb[0].mxu0 %v1972
        %v2837 = vpop.f32.mrb[0].mxu0
        %v2838 = vadd.f32 0.0, %v2837
        %v2839 = vpop.f32.mrb[0].mxu0
        %v2840 = vpop.f32.mrb[0].mxu0
        %v2841 = vadd.f32 0.0, %v2840
        %v2842 = vpop.f32.mrb[0].mxu0
        %2843 = vmatprep.mubr.bf16.mxu0 0
        %2844 = vmatmul.mubr.bf16.gmra.mrb[0].mxu0 %v1975
        %v2845 = vpop.f32.mrb[0].mxu0
        %v2846 = vadd.f32 0.0, %v2845
        %v2847 = vpop.f32.mrb[0].mxu0
        %v2848 = vpop.f32.mrb[0].mxu0
        %v2849 = vadd.f32 0.0, %v2848
        %v2850 = vpop.f32.mrb[0].mxu0
        %2851 = vdwg.mxu0
        %v2852 = vmul.f32 %v2790, 0.088388346
        %v2853 = vmul.f32 %v2793, 0.088388346
        %v2854 = vmul.f32 %v2798, 0.088388346
        %v2855 = vmul.f32 %v2801, 0.088388346
        %v2856 = vmul.f32 %v2806, 0.088388346
        %v2857 = vmul.f32 %v2809, 0.088388346
        %v2858 = vmul.f32 %v2814, 0.088388346
        %v2859 = vmul.f32 %v2817, 0.088388346
        %v2860 = vmul.f32 %v2822, 0.088388346
        %v2861 = vmul.f32 %v2825, 0.088388346
        %v2862 = vmul.f32 %v2830, 0.088388346
        %v2863 = vmul.f32 %v2833, 0.088388346
        %v2864 = vmul.f32 %v2838, 0.088388346
        %v2865 = vmul.f32 %v2841, 0.088388346
        %v2866 = vmul.f32 %v2846, 0.088388346
        %v2867 = vmul.f32 %v2849, 0.088388346
        %v2868 = vadd.f32 %v2852, %v2110
        %v2869 = vadd.f32 %v2853, %v2110
        %v2870 = vadd.f32 %v2854, %v2110
        %v2871 = vadd.f32 %v2855, %v2110
        %v2872 = vadd.f32 %v2856, %v2110
        %v2873 = vadd.f32 %v2857, %v2110
        %v2874 = vadd.f32 %v2858, %v2110
        %v2875 = vadd.f32 %v2859, %v2110
        %v2876 = vadd.f32 %v2860, %v2110
        %v2877 = vadd.f32 %v2861, %v2110
        %v2878 = vadd.f32 %v2862, %v2110
        %v2879 = vadd.f32 %v2863, %v2110
        %v2880 = vadd.f32 %v2864, %v2110
        %v2881 = vadd.f32 %v2865, %v2110
        %v2882 = vadd.f32 %v2866, %v2110
        %v2883 = vadd.f32 %v2867, %v2110
        %2884 = vmax.xlane.f32.xlu0 %v2868
        %v2885 = vpop.xlane.xlu0 %2884
        %2886 = vmax.xlane.f32.xlu0 %v2869
        %v2887 = vpop.xlane.xlu0 %2886
        %2888 = vmax.xlane.f32.xlu0 %v2870
        %v2889 = vpop.xlane.xlu0 %2888
        %2890 = vmax.xlane.f32.xlu0 %v2871
        %v2891 = vpop.xlane.xlu0 %2890
        %2892 = vmax.xlane.f32.xlu0 %v2872
        %v2893 = vpop.xlane.xlu0 %2892
        %2894 = vmax.xlane.f32.xlu0 %v2873
        %v2895 = vpop.xlane.xlu0 %2894
        %2896 = vmax.xlane.f32.xlu0 %v2874
        %v2897 = vpop.xlane.xlu0 %2896
        %2898 = vmax.xlane.f32.xlu0 %v2875
        %v2899 = vpop.xlane.xlu0 %2898
        %2900 = vmax.xlane.f32.xlu0 %v2876
        %v2901 = vpop.xlane.xlu0 %2900
        %2902 = vmax.xlane.f32.xlu0 %v2877
        %v2903 = vpop.xlane.xlu0 %2902
        %2904 = vmax.xlane.f32.xlu0 %v2878
        %v2905 = vpop.xlane.xlu0 %2904
        %2906 = vmax.xlane.f32.xlu0 %v2879
        %v2907 = vpop.xlane.xlu0 %2906
        %2908 = vmax.xlane.f32.xlu0 %v2880
        %v2909 = vpop.xlane.xlu0 %2908
        %2910 = vmax.xlane.f32.xlu0 %v2881
        %v2911 = vpop.xlane.xlu0 %2910
        %2912 = vmax.xlane.f32.xlu0 %v2882
        %v2913 = vpop.xlane.xlu0 %2912
        %2914 = vmax.xlane.f32.xlu0 %v2883
        %v2915 = vpop.xlane.xlu0 %2914
        %v2916 = vsub.f32 %v2868, %v2885
        %v2917 = vsub.f32 %v2869, %v2887
        %v2918 = vsub.f32 %v2870, %v2889
        %v2919 = vsub.f32 %v2871, %v2891
        %v2920 = vsub.f32 %v2872, %v2893
        %v2921 = vsub.f32 %v2873, %v2895
        %v2922 = vsub.f32 %v2874, %v2897
        %v2923 = vsub.f32 %v2875, %v2899
        %v2924 = vsub.f32 %v2876, %v2901
        %v2925 = vsub.f32 %v2877, %v2903
        %v2926 = vsub.f32 %v2878, %v2905
        %v2927 = vsub.f32 %v2879, %v2907
        %v2928 = vsub.f32 %v2880, %v2909
        %v2929 = vsub.f32 %v2881, %v2911
        %v2930 = vsub.f32 %v2882, %v2913
        %v2931 = vsub.f32 %v2883, %v2915
        %v2932 = vmul.f32 %v2916, 1.442695
        %v2933 = vpow.pop %v2932
        %v2934 = vmul.f32 %v2917, 1.442695
        %v2935 = vpow.pop %v2934
        %v2936 = vmul.f32 %v2918, 1.442695
        %v2937 = vpow.pop %v2936
        %v2938 = vmul.f32 %v2919, 1.442695
        %v2939 = vpow.pop %v2938
        %v2940 = vmul.f32 %v2920, 1.442695
        %v2941 = vpow.pop %v2940
        %v2942 = vmul.f32 %v2921, 1.442695
        %v2943 = vpow.pop %v2942
        %v2944 = vmul.f32 %v2922, 1.442695
        %v2945 = vpow.pop %v2944
        %v2946 = vmul.f32 %v2923, 1.442695
        %v2947 = vpow.pop %v2946
        %v2948 = vmul.f32 %v2924, 1.442695
        %v2949 = vpow.pop %v2948
        %v2950 = vmul.f32 %v2925, 1.442695
        %v2951 = vpow.pop %v2950
        %v2952 = vmul.f32 %v2926, 1.442695
        %v2953 = vpow.pop %v2952
        %v2954 = vmul.f32 %v2927, 1.442695
        %v2955 = vpow.pop %v2954
        %v2956 = vmul.f32 %v2928, 1.442695
        %v2957 = vpow.pop %v2956
        %v2958 = vmul.f32 %v2929, 1.442695
        %v2959 = vpow.pop %v2958
        %v2960 = vmul.f32 %v2930, 1.442695
        %v2961 = vpow.pop %v2960
        %v2962 = vmul.f32 %v2931, 1.442695
        %v2963 = vpow.pop %v2962
        %2964 = vadd.xlane.f32.xlu0 %v2933
        %v2965 = vpop.xlane.xlu0 %2964
        %2966 = vadd.xlane.f32.xlu0 %v2935
        %v2967 = vpop.xlane.xlu0 %2966
        %2968 = vadd.xlane.f32.xlu0 %v2937
        %v2969 = vpop.xlane.xlu0 %2968
        %2970 = vadd.xlane.f32.xlu0 %v2939
        %v2971 = vpop.xlane.xlu0 %2970
        %2972 = vadd.xlane.f32.xlu0 %v2941
        %v2973 = vpop.xlane.xlu0 %2972
        %2974 = vadd.xlane.f32.xlu0 %v2943
        %v2975 = vpop.xlane.xlu0 %2974
        %2976 = vadd.xlane.f32.xlu0 %v2945
        %v2977 = vpop.xlane.xlu0 %2976
        %2978 = vadd.xlane.f32.xlu0 %v2947
        %v2979 = vpop.xlane.xlu0 %2978
        %2980 = vadd.xlane.f32.xlu0 %v2949
        %v2981 = vpop.xlane.xlu0 %2980
        %2982 = vadd.xlane.f32.xlu0 %v2951
        %v2983 = vpop.xlane.xlu0 %2982
        %2984 = vadd.xlane.f32.xlu0 %v2953
        %v2985 = vpop.xlane.xlu0 %2984
        %2986 = vadd.xlane.f32.xlu0 %v2955
        %v2987 = vpop.xlane.xlu0 %2986
        %2988 = vadd.xlane.f32.xlu0 %v2957
        %v2989 = vpop.xlane.xlu0 %2988
        %2990 = vadd.xlane.f32.xlu0 %v2959
        %v2991 = vpop.xlane.xlu0 %2990
        %2992 = vadd.xlane.f32.xlu0 %v2961
        %v2993 = vpop.xlane.xlu0 %2992
        %2994 = vadd.xlane.f32.xlu0 %v2963
        %v2995 = vpop.xlane.xlu0 %2994
        %v2996 = vrcp.pop %v2965
        %v2997 = vrcp.pop %v2967
        %v2998 = vrcp.pop %v2969
        %v2999 = vrcp.pop %v2971
        %v3000 = vrcp.pop %v2973
        %v3001 = vrcp.pop %v2975
        %v3002 = vrcp.pop %v2977
        %v3003 = vrcp.pop %v2979
        %v3004 = vrcp.pop %v2981
        %v3005 = vrcp.pop %v2983
        %v3006 = vrcp.pop %v2985
        %v3007 = vrcp.pop %v2987
        %v3008 = vrcp.pop %v2989
        %v3009 = vrcp.pop %v2991
        %v3010 = vrcp.pop %v2993
        %v3011 = vrcp.pop %v2995
        %v3012 = vmul.f32 %v2933, %v2996
        %v3013 = vmul.f32 %v2935, %v2997
        %v3014 = vmul.f32 %v2937, %v2998
        %v3015 = vmul.f32 %v2939, %v2999
        %v3016 = vmul.f32 %v2941, %v3000
        %v3017 = vmul.f32 %v2943, %v3001
        %v3018 = vmul.f32 %v2945, %v3002
        %v3019 = vmul.f32 %v2947, %v3003
        %v3020 = vmul.f32 %v2949, %v3004
        %v3021 = vmul.f32 %v2951, %v3005
        %v3022 = vmul.f32 %v2953, %v3006
        %v3023 = vmul.f32 %v2955, %v3007
        %v3024 = vmul.f32 %v2957, %v3008
        %v3025 = vmul.f32 %v2959, %v3009
        %v3026 = vmul.f32 %v2961, %v3010
        %v3027 = vmul.f32 %v2963, %v3011
        %v3028 = vpack.c.bf16 %v3013, %v3012
        %v3029 = vpack.c.bf16 %v3015, %v3014
        %v3030 = vpack.c.bf16 %v3017, %v3016
        %v3031 = vpack.c.bf16 %v3019, %v3018
        %v3032 = vpack.c.bf16 %v3021, %v3020
        %v3033 = vpack.c.bf16 %v3023, %v3022
        %v3034 = vpack.c.bf16 %v3025, %v3024
        %v3035 = vpack.c.bf16 %v3027, %v3026
        %3036 = vmatprep.subr.bf16.mxu0 0
        %3037 = vmatpush1.bf16.msra.mxu0 %v1984
        %3038 = vmatprep.subr.bf16.mxu0 0
        %3039 = vmatpush1.bf16.msra.mxu0 %v1985
        %3040 = vmatprep.subr.bf16.mxu0 0
        %3041 = vmatpush1.bf16.msra.mxu0 %v1986
        %3042 = vmatprep.subr.bf16.mxu0 0
        %3043 = vmatpush1.bf16.msra.mxu0 %v1987
        %3044 = vmatprep.subr.bf16.mxu0 0
        %3045 = vmatpush1.bf16.msra.mxu0 %v1988
        %3046 = vmatprep.subr.bf16.mxu0 0
        %3047 = vmatpush1.bf16.msra.mxu0 %v1989
        %3048 = vmatprep.subr.bf16.mxu0 0
        %3049 = vmatpush1.bf16.msra.mxu0 %v1990
        %3050 = vmatprep.subr.bf16.mxu0 0
        %3051 = vmatpush1.bf16.msra.mxu0 %v1991
        %3052 = vmatprep.subr.bf16.mxu0 0
        %3053 = vmatpush1.bf16.msra.mxu0 0
        %3054 = vmatprep.subr.bf16.mxu0 0
        %3055 = vmatpush1.bf16.msra.mxu0 0
        %3056 = vmatprep.subr.bf16.mxu0 0
        %3057 = vmatpush1.bf16.msra.mxu0 0
        %3058 = vmatprep.subr.bf16.mxu0 0
        %3059 = vmatpush1.bf16.msra.mxu0 0
        %3060 = vmatprep.subr.bf16.mxu0 0
        %3061 = vmatpush1.bf16.msra.mxu0 0
        %3062 = vmatprep.subr.bf16.mxu0 0
        %3063 = vmatpush1.bf16.msra.mxu0 0
        %3064 = vmatprep.subr.bf16.mxu0 0
        %3065 = vmatpush1.bf16.msra.mxu0 0
        %3066 = vmatprep.subr.bf16.mxu0 0
        %3067 = vmatpush1.bf16.msra.mxu0 0
        %3068 = vmatprep.mubr.bf16.mxu0 0
        %3069 = vmatmul.mubr.bf16.gmra.mrb[0].mxu0 %v3028
        %v3070 = vpop.f32.mrb[0].mxu0
        %v3071 = vadd.f32 0.0, %v3070
        %v3072 = vpop.f32.mrb[0].mxu0
        %v3073 = vpop.f32.mrb[0].mxu0
        %v3074 = vadd.f32 0.0, %v3073
        %v3075 = vpop.f32.mrb[0].mxu0
        %3076 = vmatprep.mubr.bf16.mxu0 0
        %3077 = vmatmul.mubr.bf16.gmra.mrb[0].mxu0 %v3029
        %v3078 = vpop.f32.mrb[0].mxu0
        %v3079 = vadd.f32 0.0, %v3078
        %v3080 = vpop.f32.mrb[0].mxu0
        %v3081 = vpop.f32.mrb[0].mxu0
        %v3082 = vadd.f32 0.0, %v3081
        %v3083 = vpop.f32.mrb[0].mxu0
        %3084 = vmatprep.mubr.bf16.mxu0 0
        %3085 = vmatmul.mubr.bf16.gmra.mrb[0].mxu0 %v3030
        %v3086 = vpop.f32.mrb[0].mxu0
        %v3087 = vadd.f32 0.0, %v3086
        %v3088 = vpop.f32.mrb[0].mxu0
        %v3089 = vpop.f32.mrb[0].mxu0
        %v3090 = vadd.f32 0.0, %v3089
        %v3091 = vpop.f32.mrb[0].mxu0
        %3092 = vmatprep.mubr.bf16.mxu0 0
        %3093 = vmatmul.mubr.bf16.gmra.mrb[0].mxu0 %v3031
        %v3094 = vpop.f32.mrb[0].mxu0
        %v3095 = vadd.f32 0.0, %v3094
        %v3096 = vpop.f32.mrb[0].mxu0
        %v3097 = vpop.f32.mrb[0].mxu0
        %v3098 = vadd.f32 0.0, %v3097
        %v3099 = vpop.f32.mrb[0].mxu0
        %3100 = vmatprep.mubr.bf16.mxu0 0
        %3101 = vmatmul.mubr.bf16.gmra.mrb[0].mxu0 %v3032
        %v3102 = vpop.f32.mrb[0].mxu0
        %v3103 = vadd.f32 0.0, %v3102
        %v3104 = vpop.f32.mrb[0].mxu0
        %v3105 = vpop.f32.mrb[0].mxu0
        %v3106 = vadd.f32 0.0, %v3105
        %v3107 = vpop.f32.mrb[0].mxu0
        %3108 = vmatprep.mubr.bf16.mxu0 0
        %3109 = vmatmul.mubr.bf16.gmra.mrb[0].mxu0 %v3033
        %v3110 = vpop.f32.mrb[0].mxu0
        %v3111 = vadd.f32 0.0, %v3110
        %v3112 = vpop.f32.mrb[0].mxu0
        %v3113 = vpop.f32.mrb[0].mxu0
        %v3114 = vadd.f32 0.0, %v3113
        %v3115 = vpop.f32.mrb[0].mxu0
        %3116 = vmatprep.mubr.bf16.mxu0 0
        %3117 = vmatmul.mubr.bf16.gmra.mrb[0].mxu0 %v3034
        %v3118 = vpop.f32.mrb[0].mxu0
        %v3119 = vadd.f32 0.0, %v3118
        %v3120 = vpop.f32.mrb[0].mxu0
        %v3121 = vpop.f32.mrb[0].mxu0
        %v3122 = vadd.f32 0.0, %v3121
        %v3123 = vpop.f32.mrb[0].mxu0
        %3124 = vmatprep.mubr.bf16.mxu0 0
        %3125 = vmatmul.mubr.bf16.gmra.mrb[0].mxu0 %v3035
        %v3126 = vpop.f32.mrb[0].mxu0
        %v3127 = vadd.f32 0.0, %v3126
        %v3128 = vpop.f32.mrb[0].mxu0
        %v3129 = vpop.f32.mrb[0].mxu0
        %v3130 = vadd.f32 0.0, %v3129
        %v3131 = vpop.f32.mrb[0].mxu0
        %3132 = vdwg.mxu0
        %3133 = vst [vmem:[%s255] sm:$0xff] %v2315
        %3134 = vst [vmem:[%s255 + $0x8] sm:$0xff] %v2693
        %3135 = vst [vmem:[%s255 + $0x10] sm:$0xff] %v3071
        %3136 = vst [vmem:[%s255 + $0x18] sm:$0xff] %v2318
        %3137 = vst [vmem:[%s255 + $0x20] sm:$0xff] %v2696
        %3138 = vst [vmem:[%s255 + $0x28] sm:$0xff] %v3074
        %3139 = vst [vmem:[%s255 + $0x30] sm:$0xff] %v2323
        %3140 = vst [vmem:[%s255 + $0x38] sm:$0xff] %v2701
        %3141 = vst [vmem:[%s255 + $0x40] sm:$0xff] %v3079
        %3142 = vst [vmem:[%s255 + $0x48] sm:$0xff] %v2326
        %3143 = vst [vmem:[%s255 + $0x50] sm:$0xff] %v2704
        %3144 = vst [vmem:[%s255 + $0x58] sm:$0xff] %v3082
        %3145 = vst [vmem:[%s255 + $0x60] sm:$0xff] %v2331
        %3146 = vst [vmem:[%s255 + $0x68] sm:$0xff] %v2709
        %3147 = vst [vmem:[%s255 + $0x70] sm:$0xff] %v3087
        %3148 = vst [vmem:[%s255 + $0x78] sm:$0xff] %v2334
        %3149 = vst [vmem:[%s255 + $0x80] sm:$0xff] %v2712
        %3150 = vst [vmem:[%s255 + $0x88] sm:$0xff] %v3090
        %3151 = vst [vmem:[%s255 + $0x90] sm:$0xff] %v2339
        %3152 = vst [vmem:[%s255 + $0x98] sm:$0xff] %v2717
        %3153 = vst [vmem:[%s255 + $0xa0] sm:$0xff] %v3095
        %3154 = vst [vmem:[%s255 + $0xa8] sm:$0xff] %v2342
        %3155 = vst [vmem:[%s255 + $0xb0] sm:$0xff] %v2720
        %3156 = vst [vmem:[%s255 + $0xb8] sm:$0xff] %v3098
        %3157 = vst [vmem:[%s255 + $0xc0] sm:$0xff] %v2347
        %3158 = vst [vmem:[%s255 + $0xc8] sm:$0xff] %v2725
        %3159 = vst [vmem:[%s255 + $0xd0] sm:$0xff] %v3103
        %3160 = vst [vmem:[%s255 + $0xd8] sm:$0xff] %v2350
        %3161 = vst [vmem:[%s255 + $0xe0] sm:$0xff] %v2728
        %3162 = vst [vmem:[%s255 + $0xe8] sm:$0xff] %v3106
        %3163 = vst [vmem:[%s255 + $0xf0] sm:$0xff] %v2355
        %3164 = vst [vmem:[%s255 + $0xf8] sm:$0xff] %v2733
        %3165 = vst [vmem:[%s255 + $0x100] sm:$0xff] %v3111
        %3166 = vst [vmem:[%s255 + $0x108] sm:$0xff] %v2358
        %3167 = vst [vmem:[%s255 + $0x110] sm:$0xff] %v2736
        %3168 = vst [vmem:[%s255 + $0x118] sm:$0xff] %v3114
        %3169 = vst [vmem:[%s255 + $0x120] sm:$0xff] %v2363
        %3170 = vst [vmem:[%s255 + $0x128] sm:$0xff] %v2741
        %3171 = vst [vmem:[%s255 + $0x130] sm:$0xff] %v3119
        %3172 = vst [vmem:[%s255 + $0x138] sm:$0xff] %v2366
        %3173 = vst [vmem:[%s255 + $0x140] sm:$0xff] %v2744
        %3174 = vst [vmem:[%s255 + $0x148] sm:$0xff] %v3122
        %3175 = vst [vmem:[%s255 + $0x150] sm:$0xff] %v2371
        %3176 = vst [vmem:[%s255 + $0x158] sm:$0xff] %v2749
        %3177 = vst [vmem:[%s255 + $0x160] sm:$0xff] %v3127
        %3178 = vst [vmem:[%s255 + $0x168] sm:$0xff] %v2374
        %3179 = vst [vmem:[%s255 + $0x170] sm:$0xff] %v2752
        %3180 = vst [vmem:[%s255 + $0x178] sm:$0xff] %v3130
        %s3181 = sand.u32 %s138, 1
        %s3182 = scalar_lea.sflag [#allocation7], %s3181
        %s3183 = sand.u32 %s138, 1
        %s3184 = smul.addr %s3183, 384
        %s3185 = scalar_lea.vmem [#allocation10], %s3184
        // Predicated region
        $region49: #{tpu_custom_call.1} parent=35 // pred_check
          %p3186 = pneg %p148
        $region50: #{tpu_custom_call.1} parent=35 // pred_check_branch
          %3188 = sbr.rel (%p3186) target = $region52
        $region51: #{tpu_custom_call.1} parent=35 // pred_region
          %s3189 = smul.u32 16, %s27
          %s3191 = ssub.s32 6144, 6144
          %3192 = vsyncadd %s3182, %s3191
          %s3193 = smul.addr %s3189, 3
          %s3194 = smul.addr %s26, 48
          %s3195 = sadd.s32 %s3193, %s3194
          %s3196 = smul.addr %s3195, 128
          %s3197 = scalar_lea.hbm %s4, %s3196
          %s3198 = sshll.u32 %s3185, 4
          %s3199 = int_to_ptr.vmem [resolvable:$true] %s3198
          %3204 = dma.vmem_to_hbm [thread:$0]  %s3199, 6144, %s3197, %s3182, 384, 384, 24
        $region52: #{tpu_custom_call.1} parent=35 // pred_fallthru
          _
      $region36: #{tpu_custom_call.1} parent=5 // pred_fallthru
        _
      %p3205 = scmp.le.s32.totalorder 2, %s17
      // Predicated region
      $region53: #{tpu_custom_call.1} parent=5 // pred_check
        %p3206 = pneg %p3205
      $region54: #{tpu_custom_call.1} parent=5 // pred_check_branch
        %3208 = sbr.rel (%p3206) target = $region56
      $region55: #{tpu_custom_call.1} parent=5 // pred_region
        %s3209 = ssub.s32 %s17, 2
        // Predicated region
        $region57: #{tpu_custom_call.1} parent=55 // pred_check
          %p3210 = pneg %p154
        $region58: #{tpu_custom_call.1} parent=55 // pred_check_branch
          %3212 = sbr.rel (%p3210) target = $region60
        $region59: #{tpu_custom_call.1} parent=55 // pred_region
          %s3213 = sand.u32 %s139, 1
          %s3214 = scalar_lea.sflag [#allocation7], %s3213
          %s3215 = sand.u32 %s139, 1
          %s3216 = smul.addr %s3215, 384
          %s3217 = scalar_lea.vmem [#allocation10], %s3216
          %3218 = dma.done %s3214, 6144
        $region60: #{tpu_custom_call.1} parent=55 // pred_fallthru
          _
      $region56: #{tpu_custom_call.1} parent=5 // pred_fallthru
        _
    $region6: #{tpu_custom_call.1} parent=1 // loop_footer
      %s21 = sadd.s32 1, %s17
    $region7: #{tpu_custom_call.1} parent=1 // loop_footer_branch
      %16 = sbr.rel target = $region3
    $region8: #{tpu_custom_call.1} parent=1 // loop_exit
      _
    %3219 = vsyncpa [#allocation6], 1
    %s3220 = scalar_lea.sflag [#allocation6], 1
    %3221 = vsyncpa %s3220, 1
    %3222 = vsyncpa [#allocation9], 1
    %3223 = vsyncpa [#allocation7], 1
    %s3224 = scalar_lea.sflag [#allocation7], 1
    %3225 = vsyncpa %s3224, 1

</llo_original>
